<compile_context>
chip_gen: v5e
topology: v5e:2x2
jax: 0.10.0
libtpu: 0.0.40
codegen_flags: <defaults>
</compile_context>

<pallas_src>
import functools

import jax
import jax.numpy as jnp
from jax import lax
from jax.experimental import pallas as pl
from jax.experimental.pallas import tpu as pltpu


def _crnn_cell_kernel(xp_ref, w_ref, b_ref, o_ref, *, W, K, TH, Chp):
    """Fused CRNN cell for one (batch, row-tile) grid step.

    xp_ref : (1, H+2p, W+2p, Cp)  bf16   fused+padded [x | hidden_i | hidden_t*]
    w_ref  : (K*K*Cp, Chp)        bf16   stacked conv weights (tap-major rows)
    b_ref  : (1, Chp)             f32    summed conv biases (zero-padded)
    o_ref  : (1, TH, W, Chp)      f32/bf16  output rows [row0, row0 + TH)
    """
    Cp = xp_ref.shape[-1]
    row0 = pl.multiple_of(pl.program_id(1) * TH, TH)

    # Per-tap MXU matmuls accumulated in f32 values. No patches buffer and no
    # concatenate: the kernel is vld/vst bound at small Ch, so removing the
    # second copy of the patch data matters more than one deep matmul.
    acc = None
    for kh in range(K):
        for kw in range(K):
            t = kh * K + kw
            tap = xp_ref[0, pl.ds(row0 + kh, TH), pl.ds(kw, W), :]   # (TH, W, Cp)
            tap = tap.reshape(TH * W, Cp)                # last dim unchanged -> trivial
            part = jnp.dot(tap, w_ref[pl.ds(t * Cp, Cp), :],
                           preferred_element_type=jnp.float32)
            acc = part if acc is None else acc + part

    acc = jnp.maximum(acc + b_ref[...], 0.0)             # bias + ReLU in f32 (VPU)
    # (TH*W, Chp) -> (1, TH, W, Chp): last (lane-dense) dim unchanged -> trivial.
    o_ref[...] = acc.reshape(1, TH, W, Chp).astype(o_ref.dtype)


def pack_crnn_cell_params(params):
    """One-time packing of the PyTorch-layout (OIHW) conv parameters.

    Returns (w_mat, b_vec, kernel_size, hidden_size):
      w_mat : (K*K*Cp, Chp) bf16, rows ordered tap-major with input channels
              [i2h | ih2ih | h2h_0..h2h_{T-1} | zero-pad] and output channels
              zero-padded to Chp (multiple of 128) for lane-dense stores.
      b_vec : (1, Chp) f32 = b_i2h + b_ih2ih + sum_t b_h2h_t, zero-padded.
    """
    K = params["w_i2h"].shape[-1]
    assert K % 2 == 1, "even kernel sizes need asymmetric padding (unsupported)"
    Ch = params["w_i2h"].shape[0]

    def hwio(w):  # OIHW -> HWIO
        return jnp.transpose(w, (2, 3, 1, 0))

    w_cat = jnp.concatenate(
        [hwio(params["w_i2h"]), hwio(params["w_ih2ih"])]
        + [hwio(w) for w in params["w_h2h"]], axis=2)        # (K, K, Ctot, Ch)
    Ctot = w_cat.shape[2]
    Cp = ((Ctot + 127) // 128) * 128                          # lane-pad contraction
    Chp = ((Ch + 127) // 128) * 128                           # lane-dense output
    w_cat = jnp.pad(w_cat, ((0, 0), (0, 0), (0, Cp - Ctot), (0, Chp - Ch)))
    w_mat = w_cat.reshape(K * K * Cp, Chp).astype(jnp.bfloat16)
    b = params["b_i2h"] + params["b_ih2ih"] + sum(params["b_h2h"])
    b_vec = jnp.pad(b, (0, Chp - Ch)).reshape(1, Chp).astype(jnp.float32)
    return w_mat, b_vec, K, Ch


def _choose_row_tile(H, B, row_tile):
    """Largest 8-aligned divisor of H <= row_tile; prefer >= 2 grid work units
    so both TensorCores (v7x megacore) get something to do for small batch."""
    cands = [d for d in range(min(row_tile, H), 0, -1) if H % d == 0]
    pref = [d for d in cands if d % 8 == 0] or cands
    for d in pref:
        if B * (H // d) >= 2:
            return d
    return pref[0]


def crnn_cell_pallas_nhwc(x, hidden_i, hidden_t_list, w_mat, b_vec, *,
                          kernel_size, hidden_size, row_tile=32,
                          out_dtype=jnp.bfloat16):
    """Fused CRNN cell on NHWC activations (preferred: no per-step transposes).

    out_dtype defaults to bf16 (the consumer is usually the recurrent state and
    re-casts to bf16 anyway); pass jnp.float32 for exact module semantics.
    """
    B, H, W, _ = x.shape
    K = kernel_size
    Ch = hidden_size
    Chp = b_vec.shape[-1]
    p = K // 2
    Cp = w_mat.shape[0] // (K * K)

    ht_list = [jnp.zeros_like(hidden_i) if h is None else h for h in hidden_t_list]
    fused = jnp.concatenate([x, hidden_i] + ht_list, axis=-1)   # (B, H, W, Ctot)
    Ctot = fused.shape[-1]
    # One pad op: spatial "same" halo + channel zero-pad to Cp, then bf16 cast.
    xp = jnp.pad(fused, ((0, 0), (p, p), (p, p), (0, Cp - Ctot))).astype(jnp.bfloat16)

    TH = _choose_row_tile(H, B, row_tile)
    NH = H // TH
    Hp, Wp = H + 2 * p, W + 2 * p

    # VMEM budget from the actual buffers (double-buffered pipeline copies of
    # each block + accumulator/tap headroom), 25% slack, never below the 32 MiB
    # default, capped at 128 MiB.
    out_isz = jnp.dtype(out_dtype).itemsize
    blk_bytes = (Hp * Wp * Cp * 2            # fused padded image block (bf16)
                 + K * K * Cp * Chp * 2      # stacked weights (bf16)
                 + Chp * 4                   # bias (f32)
                 + TH * W * Chp * out_isz)   # output tile
    acc_bytes = TH * W * Chp * 4 + TH * W * Cp * 2
    vmem_limit = min(max(int(1.25 * (2 * blk_bytes + acc_bytes)),
                         32 * 1024 * 1024), 128 * 1024 * 1024)

    kernel = functools.partial(_crnn_cell_kernel, W=W, K=K, TH=TH, Chp=Chp)
    out = pl.pallas_call(
        kernel,
        out_shape=jax.ShapeDtypeStruct((B, H, W, Chp), out_dtype),
        grid_spec=pltpu.PrefetchScalarGridSpec(
            num_scalar_prefetch=0,
            grid=(B, NH),
            in_specs=[
                # fused image: index ignores the row axis -> DMA'd once per b,
                # revisited across row tiles.
                pl.BlockSpec((1, Hp, Wp, Cp), lambda b, h: (b, 0, 0, 0)),
                pl.BlockSpec((K * K * Cp, Chp), lambda b, h: (0, 0)),
                pl.BlockSpec((1, Chp), lambda b, h: (0, 0)),
            ],
            out_specs=pl.BlockSpec((1, TH, W, Chp), lambda b, h: (b, h, 0, 0)),
        ),
        compiler_params=pltpu.CompilerParams(
            dimension_semantics=("parallel", "parallel"),
            vmem_limit_bytes=vmem_limit),
    )(xp, w_mat, b_vec)
    return out[..., :Ch] if Chp != Ch else out


def crnn_cell_pallas(x_nchw, hidden_i_nchw, hidden_t, params, row_tile=32,
                     out_dtype=jnp.float32):
    """PyTorch-style NCHW drop-in (f32 output). For unrolled sequences, call
    pack_crnn_cell_params() once and use crnn_cell_pallas_nhwc directly to
    avoid the per-step NCHW<->NHWC transposes and the Chp->Ch slice pass."""
    w_mat, b_vec, K, Ch = pack_crnn_cell_params(params)
    if hidden_t is None or not isinstance(hidden_t, (list, tuple)):
        hidden_t = [hidden_t]
    nhwc = lambda a: jnp.transpose(a, (0, 2, 3, 1))
    ht = [None if h is None else nhwc(h) for h in hidden_t]
    out = crnn_cell_pallas_nhwc(nhwc(x_nchw), nhwc(hidden_i_nchw), ht,
                                w_mat, b_vec, kernel_size=K, hidden_size=Ch,
                                row_tile=row_tile, out_dtype=out_dtype)
    return jnp.transpose(out, (0, 3, 1, 2))


def crnn_cell_reference(x, hi, ht_list, params, quantize=False):
    """Pure-JAX NCHW reference mirroring the PyTorch forward.  quantize=True
    rounds activations/weights to bf16 first (matches the kernel's bf16-input /
    f32-accumulate arithmetic); biases stay f32 in both."""
    q = (lambda a: a.astype(jnp.bfloat16).astype(jnp.float32)) if quantize \
        else (lambda a: a)
    p = params["w_i2h"].shape[-1] // 2
    dn = ("NCHW", "OIHW", "NCHW")

    def conv(a, w, b):
        y = lax.conv_general_dilated(q(a), q(w), window_strides=(1, 1),
                                     padding=[(p, p), (p, p)],
                                     dimension_numbers=dn,
                                     precision=lax.Precision.HIGHEST)
        return y + b.reshape(1, -1, 1, 1)

    out = conv(x, params["w_i2h"], params["b_i2h"])
    out = out + conv(hi, params["w_ih2ih"], params["b_ih2ih"])
    for t, h in enumerate(ht_list):
        h = jnp.zeros_like(hi) if h is None else h
        out = out + conv(h, params["w_h2h"][t], params["b_h2h"][t])
    return jnp.maximum(out, 0.0)


if __name__ == "__main__":
    B, Cin, Ch, H, W = 2, 4, 32, 16, 16
    K = 3
    T = 1  # multi_hidden_t

    keys = jax.random.split(jax.random.PRNGKey(0), 16)
    x = jax.random.normal(keys[0], (B, Cin, H, W), jnp.float32)
    hidden_i = jax.random.normal(keys[1], (B, Ch, H, W), jnp.float32)
    hidden_t = [jax.random.normal(keys[2 + t], (B, Ch, H, W), jnp.float32)
                for t in range(T)]

    params = {
        "w_i2h": 0.1 * jax.random.normal(keys[6], (Ch, Cin, K, K), jnp.float32),
        "b_i2h": 0.1 * jax.random.normal(keys[7], (Ch,), jnp.float32),
        "w_ih2ih": 0.1 * jax.random.normal(keys[8], (Ch, Ch, K, K), jnp.float32),
        "b_ih2ih": 0.1 * jax.random.normal(keys[9], (Ch,), jnp.float32),
        "w_h2h": [0.1 * jax.random.normal(keys[10 + 2 * t], (Ch, Ch, K, K),
                                          jnp.float32) for t in range(T)],
        "b_h2h": [0.1 * jax.random.normal(keys[11 + 2 * t], (Ch,), jnp.float32)
                  for t in range(T)],
    }

    # NCHW drop-in, f32 output (module semantics).
    out = jax.block_until_ready(crnn_cell_pallas(x, hidden_i, hidden_t, params))
    assert out.shape == (B, Ch, H, W), out.shape

    ref_bf16 = jax.block_until_ready(
        crnn_cell_reference(x, hidden_i, hidden_t, params, quantize=True))
    ref_f32 = jax.block_until_ready(
        crnn_cell_reference(x, hidden_i, hidden_t, params, quantize=False))

    err_q = float(jnp.max(jnp.abs(out - ref_bf16)))   # vs matched-precision ref
    err_f = float(jnp.max(jnp.abs(out - ref_f32)))    # bf16 input-rounding effect
    if err_q > 2e-2 or err_f > 3e-1:
        raise AssertionError(
            f"mismatch vs reference: err_q={err_q}, err_f={err_f}")

    # NHWC fast path with bf16 output (recurrent-state consumer): same math,
    # only the final cast differs.
    nhwc = lambda a: jnp.transpose(a, (0, 2, 3, 1))
    w_mat, b_vec, K_, Ch_ = pack_crnn_cell_params(params)
    out_bf16 = jax.block_until_ready(crnn_cell_pallas_nhwc(
        nhwc(x), nhwc(hidden_i), [nhwc(h) for h in hidden_t], w_mat, b_vec,
        kernel_size=K_, hidden_size=Ch_, out_dtype=jnp.bfloat16))
    assert out_bf16.shape == (B, H, W, Ch), out_bf16.shape
    err_b = float(jnp.max(jnp.abs(out_bf16.astype(jnp.float32)
                                  - jnp.transpose(out, (0, 2, 3, 1)))))
    if err_b > 1e-1:
        raise AssertionError(f"bf16-output path mismatch: err_b={err_b}")

    print("KERNEL_OK")
</pallas_src>

<mosaic_0001>
module attributes {stable_mosaic.version = 11 : i64} {
  func.func @_crnn_cell_kernel(%arg0: i32, %arg1: i32, %arg2: memref<1x18x18x128xbf16, #tpu.memory_space<vmem>>, %arg3: memref<1152x128xbf16, #tpu.memory_space<vmem>>, %arg4: memref<1x128xf32, #tpu.memory_space<vmem>>, %arg5: memref<1x16x16x128xf32, #tpu.memory_space<vmem>>) attributes {dimension_semantics = [#tpu.dimension_semantics<parallel>, #tpu.dimension_semantics<parallel>], iteration_bounds = array<i64: 2, 1>, scalar_prefetch = 0 : i64, scratch_operands = 0 : i64, tpu.core_type = #tpu.core_type<tc>, window_params = [{transform_indices = @transform_0, window_bounds = array<i64: 1, 18, 18, 128>}, {pipeline_mode = #tpu.pipeline_mode<synchronous>, transform_indices = @transform_1, window_bounds = array<i64: 1152, 128>}, {pipeline_mode = #tpu.pipeline_mode<synchronous>, transform_indices = @transform_2, window_bounds = array<i64: 1, 128>}, {transform_indices = @transform_3, window_bounds = array<i64: 1, 16, 16, 128>}]} {
    %c16_i32 = arith.constant 16 : i32
    %0 = arith.muli %arg1, %c16_i32 : i32
    %1 = tpu.assume_multiple %0, 16 : i32
    %c0_i32 = arith.constant 0 : i32
    %2 = arith.addi %1, %c0_i32 : i32
    %c0 = arith.constant 0 : index
    %3 = arith.index_cast %2 : i32 to index
    %c0_0 = arith.constant 0 : index
    %c0_1 = arith.constant 0 : index
    %4 = vector.load %arg2[%c0, %3, %c0_0, %c0_1] : memref<1x18x18x128xbf16, #tpu.memory_space<vmem>>, vector<1x16x16x128xbf16>
    %5 = vector.shape_cast %4 : vector<1x16x16x128xbf16> to vector<16x16x128xbf16>
    %6 = vector.shape_cast %5 : vector<16x16x128xbf16> to vector<256x128xbf16>
    %c0_2 = arith.constant 0 : index
    %c0_3 = arith.constant 0 : index
    %7 = vector.load %arg3[%c0_2, %c0_3] : memref<1152x128xbf16, #tpu.memory_space<vmem>>, vector<128x128xbf16>
    %cst = arith.constant dense<0.000000e+00> : vector<256x128xf32>
    %8 = tpu.matmul %6, %7, %cst {dimension_numbers = #tpu.dot_dimension_numbers<[1], [0], [0], [1], [0, 0, 1, 1], [], []>} : vector<256x128xbf16>, vector<128x128xbf16>, vector<256x128xf32> -> vector<256x128xf32>
    %c0_i32_4 = arith.constant 0 : i32
    %9 = arith.addi %1, %c0_i32_4 : i32
    %c0_5 = arith.constant 0 : index
    %10 = arith.index_cast %9 : i32 to index
    %c1 = arith.constant 1 : index
    %c0_6 = arith.constant 0 : index
    %11 = vector.load %arg2[%c0_5, %10, %c1, %c0_6] : memref<1x18x18x128xbf16, #tpu.memory_space<vmem>>, vector<1x16x16x128xbf16>
    %12 = vector.shape_cast %11 : vector<1x16x16x128xbf16> to vector<16x16x128xbf16>
    %13 = vector.shape_cast %12 : vector<16x16x128xbf16> to vector<256x128xbf16>
    %c128 = arith.constant 128 : index
    %c0_7 = arith.constant 0 : index
    %14 = vector.load %arg3[%c128, %c0_7] : memref<1152x128xbf16, #tpu.memory_space<vmem>>, vector<128x128xbf16>
    %cst_8 = arith.constant dense<0.000000e+00> : vector<256x128xf32>
    %15 = tpu.matmul %13, %14, %cst_8 {dimension_numbers = #tpu.dot_dimension_numbers<[1], [0], [0], [1], [0, 0, 1, 1], [], []>} : vector<256x128xbf16>, vector<128x128xbf16>, vector<256x128xf32> -> vector<256x128xf32>
    %16 = arith.addf %8, %15 : vector<256x128xf32>
    %c0_i32_9 = arith.constant 0 : i32
    %17 = arith.addi %1, %c0_i32_9 : i32
    %c0_10 = arith.constant 0 : index
    %18 = arith.index_cast %17 : i32 to index
    %c2 = arith.constant 2 : index
    %c0_11 = arith.constant 0 : index
    %19 = vector.load %arg2[%c0_10, %18, %c2, %c0_11] : memref<1x18x18x128xbf16, #tpu.memory_space<vmem>>, vector<1x16x16x128xbf16>
    %20 = vector.shape_cast %19 : vector<1x16x16x128xbf16> to vector<16x16x128xbf16>
    %21 = vector.shape_cast %20 : vector<16x16x128xbf16> to vector<256x128xbf16>
    %c256 = arith.constant 256 : index
    %c0_12 = arith.constant 0 : index
    %22 = vector.load %arg3[%c256, %c0_12] : memref<1152x128xbf16, #tpu.memory_space<vmem>>, vector<128x128xbf16>
    %cst_13 = arith.constant dense<0.000000e+00> : vector<256x128xf32>
    %23 = tpu.matmul %21, %22, %cst_13 {dimension_numbers = #tpu.dot_dimension_numbers<[1], [0], [0], [1], [0, 0, 1, 1], [], []>} : vector<256x128xbf16>, vector<128x128xbf16>, vector<256x128xf32> -> vector<256x128xf32>
    %24 = arith.addf %16, %23 : vector<256x128xf32>
    %c1_i32 = arith.constant 1 : i32
    %25 = arith.addi %1, %c1_i32 : i32
    %c0_14 = arith.constant 0 : index
    %26 = arith.index_cast %25 : i32 to index
    %c0_15 = arith.constant 0 : index
    %c0_16 = arith.constant 0 : index
    %27 = vector.load %arg2[%c0_14, %26, %c0_15, %c0_16] : memref<1x18x18x128xbf16, #tpu.memory_space<vmem>>, vector<1x16x16x128xbf16>
    %28 = vector.shape_cast %27 : vector<1x16x16x128xbf16> to vector<16x16x128xbf16>
    %29 = vector.shape_cast %28 : vector<16x16x128xbf16> to vector<256x128xbf16>
    %c384 = arith.constant 384 : index
    %c0_17 = arith.constant 0 : index
    %30 = vector.load %arg3[%c384, %c0_17] : memref<1152x128xbf16, #tpu.memory_space<vmem>>, vector<128x128xbf16>
    %cst_18 = arith.constant dense<0.000000e+00> : vector<256x128xf32>
    %31 = tpu.matmul %29, %30, %cst_18 {dimension_numbers = #tpu.dot_dimension_numbers<[1], [0], [0], [1], [0, 0, 1, 1], [], []>} : vector<256x128xbf16>, vector<128x128xbf16>, vector<256x128xf32> -> vector<256x128xf32>
    %32 = arith.addf %24, %31 : vector<256x128xf32>
    %c1_i32_19 = arith.constant 1 : i32
    %33 = arith.addi %1, %c1_i32_19 : i32
    %c0_20 = arith.constant 0 : index
    %34 = arith.index_cast %33 : i32 to index
    %c1_21 = arith.constant 1 : index
    %c0_22 = arith.constant 0 : index
    %35 = vector.load %arg2[%c0_20, %34, %c1_21, %c0_22] : memref<1x18x18x128xbf16, #tpu.memory_space<vmem>>, vector<1x16x16x128xbf16>
    %36 = vector.shape_cast %35 : vector<1x16x16x128xbf16> to vector<16x16x128xbf16>
    %37 = vector.shape_cast %36 : vector<16x16x128xbf16> to vector<256x128xbf16>
    %c512 = arith.constant 512 : index
    %c0_23 = arith.constant 0 : index
    %38 = vector.load %arg3[%c512, %c0_23] : memref<1152x128xbf16, #tpu.memory_space<vmem>>, vector<128x128xbf16>
    %cst_24 = arith.constant dense<0.000000e+00> : vector<256x128xf32>
    %39 = tpu.matmul %37, %38, %cst_24 {dimension_numbers = #tpu.dot_dimension_numbers<[1], [0], [0], [1], [0, 0, 1, 1], [], []>} : vector<256x128xbf16>, vector<128x128xbf16>, vector<256x128xf32> -> vector<256x128xf32>
    %40 = arith.addf %32, %39 : vector<256x128xf32>
    %c1_i32_25 = arith.constant 1 : i32
    %41 = arith.addi %1, %c1_i32_25 : i32
    %c0_26 = arith.constant 0 : index
    %42 = arith.index_cast %41 : i32 to index
    %c2_27 = arith.constant 2 : index
    %c0_28 = arith.constant 0 : index
    %43 = vector.load %arg2[%c0_26, %42, %c2_27, %c0_28] : memref<1x18x18x128xbf16, #tpu.memory_space<vmem>>, vector<1x16x16x128xbf16>
    %44 = vector.shape_cast %43 : vector<1x16x16x128xbf16> to vector<16x16x128xbf16>
    %45 = vector.shape_cast %44 : vector<16x16x128xbf16> to vector<256x128xbf16>
    %c640 = arith.constant 640 : index
    %c0_29 = arith.constant 0 : index
    %46 = vector.load %arg3[%c640, %c0_29] : memref<1152x128xbf16, #tpu.memory_space<vmem>>, vector<128x128xbf16>
    %cst_30 = arith.constant dense<0.000000e+00> : vector<256x128xf32>
    %47 = tpu.matmul %45, %46, %cst_30 {dimension_numbers = #tpu.dot_dimension_numbers<[1], [0], [0], [1], [0, 0, 1, 1], [], []>} : vector<256x128xbf16>, vector<128x128xbf16>, vector<256x128xf32> -> vector<256x128xf32>
    %48 = arith.addf %40, %47 : vector<256x128xf32>
    %c2_i32 = arith.constant 2 : i32
    %49 = arith.addi %1, %c2_i32 : i32
    %c0_31 = arith.constant 0 : index
    %50 = arith.index_cast %49 : i32 to index
    %c0_32 = arith.constant 0 : index
    %c0_33 = arith.constant 0 : index
    %51 = vector.load %arg2[%c0_31, %50, %c0_32, %c0_33] : memref<1x18x18x128xbf16, #tpu.memory_space<vmem>>, vector<1x16x16x128xbf16>
    %52 = vector.shape_cast %51 : vector<1x16x16x128xbf16> to vector<16x16x128xbf16>
    %53 = vector.shape_cast %52 : vector<16x16x128xbf16> to vector<256x128xbf16>
    %c768 = arith.constant 768 : index
    %c0_34 = arith.constant 0 : index
    %54 = vector.load %arg3[%c768, %c0_34] : memref<1152x128xbf16, #tpu.memory_space<vmem>>, vector<128x128xbf16>
    %cst_35 = arith.constant dense<0.000000e+00> : vector<256x128xf32>
    %55 = tpu.matmul %53, %54, %cst_35 {dimension_numbers = #tpu.dot_dimension_numbers<[1], [0], [0], [1], [0, 0, 1, 1], [], []>} : vector<256x128xbf16>, vector<128x128xbf16>, vector<256x128xf32> -> vector<256x128xf32>
    %56 = arith.addf %48, %55 : vector<256x128xf32>
    %c2_i32_36 = arith.constant 2 : i32
    %57 = arith.addi %1, %c2_i32_36 : i32
    %c0_37 = arith.constant 0 : index
    %58 = arith.index_cast %57 : i32 to index
    %c1_38 = arith.constant 1 : index
    %c0_39 = arith.constant 0 : index
    %59 = vector.load %arg2[%c0_37, %58, %c1_38, %c0_39] : memref<1x18x18x128xbf16, #tpu.memory_space<vmem>>, vector<1x16x16x128xbf16>
    %60 = vector.shape_cast %59 : vector<1x16x16x128xbf16> to vector<16x16x128xbf16>
    %61 = vector.shape_cast %60 : vector<16x16x128xbf16> to vector<256x128xbf16>
    %c896 = arith.constant 896 : index
    %c0_40 = arith.constant 0 : index
    %62 = vector.load %arg3[%c896, %c0_40] : memref<1152x128xbf16, #tpu.memory_space<vmem>>, vector<128x128xbf16>
    %cst_41 = arith.constant dense<0.000000e+00> : vector<256x128xf32>
    %63 = tpu.matmul %61, %62, %cst_41 {dimension_numbers = #tpu.dot_dimension_numbers<[1], [0], [0], [1], [0, 0, 1, 1], [], []>} : vector<256x128xbf16>, vector<128x128xbf16>, vector<256x128xf32> -> vector<256x128xf32>
    %64 = arith.addf %56, %63 : vector<256x128xf32>
    %c2_i32_42 = arith.constant 2 : i32
    %65 = arith.addi %1, %c2_i32_42 : i32
    %c0_43 = arith.constant 0 : index
    %66 = arith.index_cast %65 : i32 to index
    %c2_44 = arith.constant 2 : index
    %c0_45 = arith.constant 0 : index
    %67 = vector.load %arg2[%c0_43, %66, %c2_44, %c0_45] : memref<1x18x18x128xbf16, #tpu.memory_space<vmem>>, vector<1x16x16x128xbf16>
    %68 = vector.shape_cast %67 : vector<1x16x16x128xbf16> to vector<16x16x128xbf16>
    %69 = vector.shape_cast %68 : vector<16x16x128xbf16> to vector<256x128xbf16>
    %c1024 = arith.constant 1024 : index
    %c0_46 = arith.constant 0 : index
    %70 = vector.load %arg3[%c1024, %c0_46] : memref<1152x128xbf16, #tpu.memory_space<vmem>>, vector<128x128xbf16>
    %cst_47 = arith.constant dense<0.000000e+00> : vector<256x128xf32>
    %71 = tpu.matmul %69, %70, %cst_47 {dimension_numbers = #tpu.dot_dimension_numbers<[1], [0], [0], [1], [0, 0, 1, 1], [], []>} : vector<256x128xbf16>, vector<128x128xbf16>, vector<256x128xf32> -> vector<256x128xf32>
    %72 = arith.addf %64, %71 : vector<256x128xf32>
    %c0_48 = arith.constant 0 : index
    %c0_49 = arith.constant 0 : index
    %73 = vector.load %arg4[%c0_48, %c0_49] : memref<1x128xf32, #tpu.memory_space<vmem>>, vector<1x128xf32>
    %74 = vector.broadcast %73 : vector<1x128xf32> to vector<256x128xf32>
    %75 = arith.addf %72, %74 : vector<256x128xf32>
    %cst_50 = arith.constant 0.000000e+00 : f32
    %76 = vector.broadcast %cst_50 : f32 to vector<256x128xf32>
    %77 = arith.maximumf %75, %76 : vector<256x128xf32>
    %78 = vector.shape_cast %77 : vector<256x128xf32> to vector<1x16x16x128xf32>
    %c0_51 = arith.constant 0 : index
    %c0_52 = arith.constant 0 : index
    %c0_53 = arith.constant 0 : index
    %c0_54 = arith.constant 0 : index
    %79 = vector.load %arg5[%c0_51, %c0_52, %c0_53, %c0_54] : memref<1x16x16x128xf32, #tpu.memory_space<vmem>>, vector<1x16x16x128xf32>
    tpu.vector_store %arg5[%c0_51, %c0_52, %c0_53, %c0_54], %78 {strides = array<i32>} : memref<1x16x16x128xf32, #tpu.memory_space<vmem>>, vector<1x16x16x128xf32>,
    return
  }
  func.func @transform_0(%arg0: i32, %arg1: i32) -> (i32, i32, i32, i32) {
    %c0_i32 = arith.constant 0 : i32
    %c0_i32_0 = arith.constant 0 : i32
    %c0_i32_1 = arith.constant 0 : i32
    %c0_i32_2 = arith.constant 0 : i32
    return %arg0, %c0_i32, %c0_i32_0, %c0_i32_1 : i32, i32, i32, i32
  }
  func.func @transform_1(%arg0: i32, %arg1: i32) -> (i32, i32) {
    %c0_i32 = arith.constant 0 : i32
    %c0_i32_0 = arith.constant 0 : i32
    %c0_i32_1 = arith.constant 0 : i32
    return %c0_i32, %c0_i32_0 : i32, i32
  }
  func.func @transform_2(%arg0: i32, %arg1: i32) -> (i32, i32) {
    %c0_i32 = arith.constant 0 : i32
    %c0_i32_0 = arith.constant 0 : i32
    %c0_i32_1 = arith.constant 0 : i32
    return %c0_i32, %c0_i32_0 : i32, i32
  }
  func.func @transform_3(%arg0: i32, %arg1: i32) -> (i32, i32, i32, i32) {
    %c0_i32 = arith.constant 0 : i32
    %c0_i32_0 = arith.constant 0 : i32
    %c0_i32_1 = arith.constant 0 : i32
    return %arg0, %arg1, %c0_i32, %c0_i32_0 : i32, i32, i32, i32
  }
}

</mosaic_0001>

<llo_original>
// kernel: tpu_custom_call.1
$region0: #{tpu_custom_call.1}
  #allocation0 [shape = 'u32[]', space=smem, size = 0x4, offset = 0x4, fixed_abs, tag = 'smem constant byte address 0x4 - core index']
  #allocation1 [shape = 'u32[72,128]{1,0:T(1,128)}', space=vmem, size = 0x9000, scoped, tag = 'internal scratch']
  %s0 = inlined_call_operand.vmem [shape: bf16[2,18,18,128], index: 0, kind: input, shape index: {}]
  %s1 = inlined_call_operand.vmem [shape: bf16[1152,128], index: 1, kind: input, shape index: {}]
  %s2 = inlined_call_operand.vmem [shape: f32[1,128], index: 2, kind: input, shape index: {}]
  %s3 = inlined_call_operand.hbm [shape: f32[2,16,16,128], index: 3, kind: output, shape index: {}]
  %s4 = sld [smem:[#allocation0]]
  $region45: #{tpu_custom_call.1} parent=0
    _
  %s6 = ssub.s32 1, %s4
  %s7 = scalar_select 0, %s6, %s4
  $region1: #{tpu_custom_call.1} parent=0
    #allocation2 [shape = 'u8[262144]{0}', space=vmem, size = 0x40000, scoped, tag = 'output window, operand 0']
    #allocation3 [shape = 's32[2]{0}', space=sflag, size = 0x8, scoped, tag = 'scoped memory for tpu_custom_call.1']
    %8 = vsyncpa [#allocation3], 0
    %s9 = scalar_lea.sflag [#allocation3], 1
    %10 = vsyncpa %s9, 0
    loop: start=0, step=1, limit=4
    $region2: #{tpu_custom_call.1} parent=1 // loop_pre_header
      _
    $region3: #{tpu_custom_call.1} parent=1 // loop_header
      %s12 = sphi 0, %s16
      %p13 = scmp.ge.s32.totalorder %s12, 4
      %s19 = sphi 0, %s31
      %s20 = sphi 0, %s27
      %s21 = sphi 0, %s19
      %s22 = sphi 0, %s20
      %s23 = sphi 0, %s21
      %s24 = sphi 0, %s22
      %s34 = sphi 0, %s36
      %s37 = sphi 0, %s34
      %s38 = sphi 0, %s37
      %s54 = sphi 0, %s38
      %s58 = sphi 0, %s58
      %s60 = sphi 0, %s58
      %s61 = sphi 0, %s60
      %s75 = sphi 0, %s61
      %s79 = sphi 0, %s79
      %s81 = sphi 0, %s79
      %s82 = sphi 0, %s81
      %s96 = sphi 0, %s82
      %s104 = sphi 0, %s106
      %s107 = sphi 0, %s104
      %s108 = sphi 0, %s107
      %s124 = sphi 0, %s108
    $region4: #{tpu_custom_call.1} parent=1 // loop_header_branch
      %15 = sbr.rel (%p13) target = $region8
    $region5: #{tpu_custom_call.1} parent=1 // loop_body
      %s17 = ssub.s32 %s12, 1
      %s18 = ssub.s32 %s12, 2
      %s25 = sadd.s32 1, %s20
      %p26 = scmp.ge.s32.totalorder %s25, 1
      %s27 = scalar_select %p26, 0, %s25
      %s28 = sadd.s32 1, %s19
      %s29 = scalar_select %p26, %s28, %s19
      %p30 = scmp.ge.s32.totalorder %s29, 2
      %s31 = scalar_select %p30, 0, %s29
      %s32 = ssub.s32 %s19, %s31
      %p33 = scmp.eq.s32.totalorder %s32, 0
      %s35 = sadd.s32 %s34, 1
      %s36 = scalar_select %p33, %s34, %s35
      %p39 = pneg %p33
      %p40 = scmp.eq.s32.totalorder %s12, 1
      %p41 = por %p39, %p40
      %p42 = scmp.ne.s32.totalorder %s34, %s37
      %p43 = scmp.eq.s32.totalorder %s12, 0
      %p44 = por %p42, %p43
      %p45 = scmp.ne.s32.totalorder %s34, %s37
      %p46 = scmp.eq.s32.totalorder %s17, 1
      %p47 = por %p45, %p46
      %p48 = scmp.ne.s32.totalorder %s37, %s38
      %p49 = scmp.eq.s32.totalorder %s17, 0
      %p50 = por %p48, %p49
      %p51 = scmp.ne.s32.totalorder %s37, %s38
      %p52 = scmp.eq.s32.totalorder %s18, 1
      %p53 = por %p51, %p52
      %p55 = scmp.ne.s32.totalorder %s38, %s54
      %p56 = scmp.eq.s32.totalorder %s18, 0
      %p57 = por %p55, %p56
      %s59 = sadd.s32 %s58, 1
      %p62 = scmp.eq.s32.totalorder %s12, 1
      %p63 = scmp.ne.s32.totalorder %s58, %s60
      %p64 = scmp.eq.s32.totalorder %s12, 0
      %p65 = por %p63, %p64
      %p66 = scmp.ne.s32.totalorder %s58, %s60
      %p67 = scmp.eq.s32.totalorder %s17, 1
      %p68 = por %p66, %p67
      %p69 = scmp.ne.s32.totalorder %s60, %s61
      %p70 = scmp.eq.s32.totalorder %s17, 0
      %p71 = por %p69, %p70
      %p72 = scmp.ne.s32.totalorder %s60, %s61
      %p73 = scmp.eq.s32.totalorder %s18, 1
      %p74 = por %p72, %p73
      %p76 = scmp.ne.s32.totalorder %s61, %s75
      %p77 = scmp.eq.s32.totalorder %s18, 0
      %p78 = por %p76, %p77
      %s80 = sadd.s32 %s79, 1
      %p83 = scmp.eq.s32.totalorder %s12, 1
      %p84 = scmp.ne.s32.totalorder %s79, %s81
      %p85 = scmp.eq.s32.totalorder %s12, 0
      %p86 = por %p84, %p85
      %p87 = scmp.ne.s32.totalorder %s79, %s81
      %p88 = scmp.eq.s32.totalorder %s17, 1
      %p89 = por %p87, %p88
      %p90 = scmp.ne.s32.totalorder %s81, %s82
      %p91 = scmp.eq.s32.totalorder %s17, 0
      %p92 = por %p90, %p91
      %p93 = scmp.ne.s32.totalorder %s81, %s82
      %p94 = scmp.eq.s32.totalorder %s18, 1
      %p95 = por %p93, %p94
      %p97 = scmp.ne.s32.totalorder %s82, %s96
      %p98 = scmp.eq.s32.totalorder %s18, 0
      %p99 = por %p97, %p98
      %s100 = ssub.s32 %s19, %s31
      %s101 = ssub.s32 %s20, %s27
      %s102 = sor.u32 %s100, %s101
      %p103 = scmp.eq.s32.totalorder %s102, 0
      %s105 = sadd.s32 %s104, 1
      %s106 = scalar_select %p103, %s104, %s105
      %p109 = pneg %p103
      %p110 = scmp.eq.s32.totalorder %s12, 1
      %p111 = por %p109, %p110
      %p112 = scmp.ne.s32.totalorder %s104, %s107
      %p113 = scmp.eq.s32.totalorder %s12, 0
      %p114 = por %p112, %p113
      %p115 = scmp.ne.s32.totalorder %s104, %s107
      %p116 = scmp.eq.s32.totalorder %s17, 1
      %p117 = por %p115, %p116
      %p118 = scmp.ne.s32.totalorder %s107, %s108
      %p119 = scmp.eq.s32.totalorder %s17, 0
      %p120 = por %p118, %p119
      %p121 = scmp.ne.s32.totalorder %s107, %s108
      %p122 = scmp.eq.s32.totalorder %s18, 1
      %p123 = por %p121, %p122
      %p125 = scmp.ne.s32.totalorder %s108, %s124
      %p126 = scmp.eq.s32.totalorder %s18, 0
      %p127 = por %p125, %p126
      %p128 = scmp.le.s32.totalorder 1, %s12
      %p129 = scmp.lt.s32.totalorder %s12, 3
      %p130 = pnand %p128, %p129
      %p131 = pneg %p130
      // Predicated region
      $region9: #{tpu_custom_call.1} parent=5 // pred_check
        _
      $region10: #{tpu_custom_call.1} parent=5 // pred_check_branch
        %133 = sbr.rel (%p130) target = $region12
      $region11: #{tpu_custom_call.1} parent=5 // pred_region
        %s134 = ssub.s32 %s12, 1
        // Predicated region
        $region13: #{tpu_custom_call.1} parent=11 // pred_check
          %p135 = pneg %p71
        $region14: #{tpu_custom_call.1} parent=11 // pred_check_branch
          %137 = sbr.rel (%p135) target = $region16
        $region15: #{tpu_custom_call.1} parent=11 // pred_region
          _
        $region16: #{tpu_custom_call.1} parent=11 // pred_fallthru
          _
        // Predicated region
        $region17: #{tpu_custom_call.1} parent=11 // pred_check
          %p138 = pneg %p92
        $region18: #{tpu_custom_call.1} parent=11 // pred_check_branch
          %140 = sbr.rel (%p138) target = $region20
        $region19: #{tpu_custom_call.1} parent=11 // pred_region
          _
        $region20: #{tpu_custom_call.1} parent=11 // pred_fallthru
          _
      $region12: #{tpu_custom_call.1} parent=5 // pred_fallthru
        _
      %p141 = scmp.lt.s32.totalorder %s12, 2
      // Predicated region
      $region21: #{tpu_custom_call.1} parent=5 // pred_check
        %p142 = pneg %p141
      $region22: #{tpu_custom_call.1} parent=5 // pred_check_branch
        %144 = sbr.rel (%p142) target = $region24
      $region23: #{tpu_custom_call.1} parent=5 // pred_region
        // Predicated region
        $region25: #{tpu_custom_call.1} parent=23 // pred_check
          %p145 = pneg %p44
        $region26: #{tpu_custom_call.1} parent=23 // pred_check_branch
          %147 = sbr.rel (%p145) target = $region28
        $region27: #{tpu_custom_call.1} parent=23 // pred_region
          %p148 = scmp.lt.s32.totalorder %s19, 1
          %s149 = scalar_select %p148, %s19, 1
          %s150 = smul.addr %s149, 54
          %s151 = smul.addr %s150, 4
          %s152 = scalar_lea.vmem %s0, %s151
        $region28: #{tpu_custom_call.1} parent=23 // pred_fallthru
          _
      $region24: #{tpu_custom_call.1} parent=5 // pred_fallthru
        _
      %p153 = scmp.le.s32.totalorder 1, %s12
      %p154 = scmp.lt.s32.totalorder %s12, 3
      %p155 = pnand %p153, %p154
      %p156 = pneg %p155
      // Predicated region
      $region29: #{tpu_custom_call.1} parent=5 // pred_check
        _
      $region30: #{tpu_custom_call.1} parent=5 // pred_check_branch
        %158 = sbr.rel (%p155) target = $region32
      $region31: #{tpu_custom_call.1} parent=5 // pred_region
        %s159 = ssub.s32 %s12, 1
        %p160 = scmp.lt.s32.totalorder %s21, 1
        %s161 = scalar_select %p160, %s21, 1
        %s162 = smul.addr %s161, 54
        %s163 = smul.addr %s162, 4
        %s164 = scalar_lea.vmem %s0, %s163
        %p165 = pneg %p50
        %p166 = pneg %p47
        %p167 = pneg %p71
        %p168 = pneg %p68
        %p169 = pneg %p92
        %p170 = pneg %p89
        %p171 = pneg %p120
        %p172 = pneg %p117
        %s173 = sand.u32 %s107, 1
        %s174 = scalar_lea.sflag [#allocation3], %s173
        %s175 = sand.u32 %s107, 1
        %s176 = smul.addr %s175, 256
        %s177 = scalar_lea.vmem [#allocation2], %s176
        %p178 = scmp.lt.s32.totalorder %s21, 1
        %s179 = scalar_select %p178, %s21, 1
        %s180 = smul.addr %s179, 54
        %s181 = smul.addr %s180, 4
        %s182 = scalar_lea.vmem %s0, %s181
        %s183 = smul.u32 16, %s22
        %s184 = smul.u32 %s22, 16
        %s185 = smul.u32 %s184, 3
        %s186 = smul.addr %s185, 4
        %s187 = scalar_lea.vmem %s182, %s186
        %v188 = vld [vmem:[%s187] sm:$0xf]
        %v189 = vld [vmem:[%s187 + $0x4] sm:$0xf]
        %v190 = vld [vmem:[%s187 + $0xc] sm:$0xf]
        %v191 = vld [vmem:[%s187 + $0x10] sm:$0xf]
        %v192 = vld [vmem:[%s187 + $0x18] sm:$0xf]
        %v193 = vld [vmem:[%s187 + $0x1c] sm:$0xf]
        %v194 = vld [vmem:[%s187 + $0x24] sm:$0xf]
        %v195 = vld [vmem:[%s187 + $0x28] sm:$0xf]
        %v196 = vld [vmem:[%s187 + $0x30] sm:$0xf]
        %v197 = vld [vmem:[%s187 + $0x34] sm:$0xf]
        %v198 = vld [vmem:[%s187 + $0x3c] sm:$0xf]
        %v199 = vld [vmem:[%s187 + $0x40] sm:$0xf]
        %v200 = vld [vmem:[%s187 + $0x48] sm:$0xf]
        %v201 = vld [vmem:[%s187 + $0x4c] sm:$0xf]
        %v202 = vld [vmem:[%s187 + $0x54] sm:$0xf]
        %v203 = vld [vmem:[%s187 + $0x58] sm:$0xf]
        %v204 = vld [vmem:[%s187 + $0x60] sm:$0xf]
        %v205 = vld [vmem:[%s187 + $0x64] sm:$0xf]
        %v206 = vld [vmem:[%s187 + $0x6c] sm:$0xf]
        %v207 = vld [vmem:[%s187 + $0x70] sm:$0xf]
        %v208 = vld [vmem:[%s187 + $0x78] sm:$0xf]
        %v209 = vld [vmem:[%s187 + $0x7c] sm:$0xf]
        %v210 = vld [vmem:[%s187 + $0x84] sm:$0xf]
        %v211 = vld [vmem:[%s187 + $0x88] sm:$0xf]
        %v212 = vld [vmem:[%s187 + $0x90] sm:$0xf]
        %v213 = vld [vmem:[%s187 + $0x94] sm:$0xf]
        %v214 = vld [vmem:[%s187 + $0x9c] sm:$0xf]
        %v215 = vld [vmem:[%s187 + $0xa0] sm:$0xf]
        %v216 = vld [vmem:[%s187 + $0xa8] sm:$0xf]
        %v217 = vld [vmem:[%s187 + $0xac] sm:$0xf]
        %v218 = vld [vmem:[%s187 + $0xb4] sm:$0xf]
        %v219 = vld [vmem:[%s187 + $0xb8] sm:$0xf]
        %v220 = vld [vmem:[%s1] sm:$0xf]
        %v221 = vld [vmem:[%s1 + $0x4] sm:$0xf]
        %v222 = vld [vmem:[%s1 + $0x8] sm:$0xf]
        %v223 = vld [vmem:[%s1 + $0xc] sm:$0xf]
        %v224 = vld [vmem:[%s1 + $0x10] sm:$0xf]
        %v225 = vld [vmem:[%s1 + $0x14] sm:$0xf]
        %v226 = vld [vmem:[%s1 + $0x18] sm:$0xf]
        %v227 = vld [vmem:[%s1 + $0x1c] sm:$0xf]
        %v228 = vld [vmem:[%s1 + $0x20] sm:$0xf]
        %v229 = vld [vmem:[%s1 + $0x24] sm:$0xf]
        %v230 = vld [vmem:[%s1 + $0x28] sm:$0xf]
        %v231 = vld [vmem:[%s1 + $0x2c] sm:$0xf]
        %v232 = vld [vmem:[%s1 + $0x30] sm:$0xf]
        %v233 = vld [vmem:[%s1 + $0x34] sm:$0xf]
        %v234 = vld [vmem:[%s1 + $0x38] sm:$0xf]
        %v235 = vld [vmem:[%s1 + $0x3c] sm:$0xf]
        %v236 = vld [vmem:[%s187 + $0x8] sm:$0x1]
        %v237 = vld [vmem:[%s187 + $0x14] sm:$0x1]
        %v238 = vld [vmem:[%s187 + $0x20] sm:$0x1]
        %v239 = vld [vmem:[%s187 + $0x2c] sm:$0x1]
        %v240 = vld [vmem:[%s187 + $0x38] sm:$0x1]
        %v241 = vld [vmem:[%s187 + $0x44] sm:$0x1]
        %v242 = vld [vmem:[%s187 + $0x50] sm:$0x1]
        %v243 = vld [vmem:[%s187 + $0x5c] sm:$0x1]
        %v244 = vld [vmem:[%s187 + $0x68] sm:$0x1]
        %v245 = vld [vmem:[%s187 + $0x74] sm:$0x1]
        %v246 = vld [vmem:[%s187 + $0x80] sm:$0x1]
        %v247 = vld [vmem:[%s187 + $0x8c] sm:$0x1]
        %v248 = vld [vmem:[%s187 + $0x98] sm:$0x1]
        %v249 = vld [vmem:[%s187 + $0xa4] sm:$0x1]
        %v250 = vld [vmem:[%s187 + $0xb0] sm:$0x1]
        %v251 = vld [vmem:[%s187 + $0xbc] sm:$0x1]
        %vm252 = vsmask.f32 3328
        %vm253 = vsmask.f32 7440
        %vm254 = vmor %vm252, %vm253
        %v256 = vshrl.u32 %v188, 16
        %v258 = vrot.slane %v256, 4
        %v259 = vshll.u32 %v188, 16
        %v261 = vrot.slane %v259, 5
        %v262 = vor.u32 %v258, %v261
        %v263 = vrot.slane %v262, 4
        %v265 = vshll.u32 %v189, 16
        %v267 = vrot.slane %v265, 5
        %v268 = vsel %vm254, %v263, %v267
        %v269 = vshrl.u32 %v189, 16
        %v271 = vrot.slane %v269, 4
        %v272 = vor.u32 %v271, %v267
        %v273 = vrot.slane %v272, 4
        %v275 = vshll.u32 %v236, 16
        %v277 = vrot.slane %v275, 5
        %v278 = vsel %vm254, %v273, %v277
        %v280 = vshrl.u32 %v190, 16
        %v282 = vrot.slane %v280, 4
        %v283 = vshll.u32 %v190, 16
        %v285 = vrot.slane %v283, 5
        %v286 = vor.u32 %v282, %v285
        %v287 = vrot.slane %v286, 4
        %v289 = vshll.u32 %v191, 16
        %v291 = vrot.slane %v289, 5
        %v292 = vsel %vm254, %v287, %v291
        %v293 = vshrl.u32 %v191, 16
        %v295 = vrot.slane %v293, 4
        %v296 = vor.u32 %v295, %v291
        %v297 = vrot.slane %v296, 4
        %v299 = vshll.u32 %v237, 16
        %v301 = vrot.slane %v299, 5
        %v302 = vsel %vm254, %v297, %v301
        %v304 = vshrl.u32 %v192, 16
        %v306 = vrot.slane %v304, 4
        %v307 = vshll.u32 %v192, 16
        %v309 = vrot.slane %v307, 5
        %v310 = vor.u32 %v306, %v309
        %v311 = vrot.slane %v310, 4
        %v313 = vshll.u32 %v193, 16
        %v315 = vrot.slane %v313, 5
        %v316 = vsel %vm254, %v311, %v315
        %v317 = vshrl.u32 %v193, 16
        %v319 = vrot.slane %v317, 4
        %v320 = vor.u32 %v319, %v315
        %v321 = vrot.slane %v320, 4
        %v323 = vshll.u32 %v238, 16
        %v325 = vrot.slane %v323, 5
        %v326 = vsel %vm254, %v321, %v325
        %v328 = vshrl.u32 %v194, 16
        %v330 = vrot.slane %v328, 4
        %v331 = vshll.u32 %v194, 16
        %v333 = vrot.slane %v331, 5
        %v334 = vor.u32 %v330, %v333
        %v335 = vrot.slane %v334, 4
        %v337 = vshll.u32 %v195, 16
        %v339 = vrot.slane %v337, 5
        %v340 = vsel %vm254, %v335, %v339
        %v341 = vshrl.u32 %v195, 16
        %v343 = vrot.slane %v341, 4
        %v344 = vor.u32 %v343, %v339
        %v345 = vrot.slane %v344, 4
        %v347 = vshll.u32 %v239, 16
        %v349 = vrot.slane %v347, 5
        %v350 = vsel %vm254, %v345, %v349
        %v352 = vshrl.u32 %v196, 16
        %v354 = vrot.slane %v352, 4
        %v355 = vshll.u32 %v196, 16
        %v357 = vrot.slane %v355, 5
        %v358 = vor.u32 %v354, %v357
        %v359 = vrot.slane %v358, 4
        %v361 = vshll.u32 %v197, 16
        %v363 = vrot.slane %v361, 5
        %v364 = vsel %vm254, %v359, %v363
        %v365 = vshrl.u32 %v197, 16
        %v367 = vrot.slane %v365, 4
        %v368 = vor.u32 %v367, %v363
        %v369 = vrot.slane %v368, 4
        %v371 = vshll.u32 %v240, 16
        %v373 = vrot.slane %v371, 5
        %v374 = vsel %vm254, %v369, %v373
        %v376 = vshrl.u32 %v198, 16
        %v378 = vrot.slane %v376, 4
        %v379 = vshll.u32 %v198, 16
        %v381 = vrot.slane %v379, 5
        %v382 = vor.u32 %v378, %v381
        %v383 = vrot.slane %v382, 4
        %v385 = vshll.u32 %v199, 16
        %v387 = vrot.slane %v385, 5
        %v388 = vsel %vm254, %v383, %v387
        %v389 = vshrl.u32 %v199, 16
        %v391 = vrot.slane %v389, 4
        %v392 = vor.u32 %v391, %v387
        %v393 = vrot.slane %v392, 4
        %v395 = vshll.u32 %v241, 16
        %v397 = vrot.slane %v395, 5
        %v398 = vsel %vm254, %v393, %v397
        %v400 = vshrl.u32 %v200, 16
        %v402 = vrot.slane %v400, 4
        %v403 = vshll.u32 %v200, 16
        %v405 = vrot.slane %v403, 5
        %v406 = vor.u32 %v402, %v405
        %v407 = vrot.slane %v406, 4
        %v409 = vshll.u32 %v201, 16
        %v411 = vrot.slane %v409, 5
        %v412 = vsel %vm254, %v407, %v411
        %v413 = vshrl.u32 %v201, 16
        %v415 = vrot.slane %v413, 4
        %v416 = vor.u32 %v415, %v411
        %v417 = vrot.slane %v416, 4
        %v419 = vshll.u32 %v242, 16
        %v421 = vrot.slane %v419, 5
        %v422 = vsel %vm254, %v417, %v421
        %v424 = vshrl.u32 %v202, 16
        %v426 = vrot.slane %v424, 4
        %v427 = vshll.u32 %v202, 16
        %v429 = vrot.slane %v427, 5
        %v430 = vor.u32 %v426, %v429
        %v431 = vrot.slane %v430, 4
        %v433 = vshll.u32 %v203, 16
        %v435 = vrot.slane %v433, 5
        %v436 = vsel %vm254, %v431, %v435
        %v437 = vshrl.u32 %v203, 16
        %v439 = vrot.slane %v437, 4
        %v440 = vor.u32 %v439, %v435
        %v441 = vrot.slane %v440, 4
        %v443 = vshll.u32 %v243, 16
        %v445 = vrot.slane %v443, 5
        %v446 = vsel %vm254, %v441, %v445
        %v448 = vshrl.u32 %v204, 16
        %v450 = vrot.slane %v448, 4
        %v451 = vshll.u32 %v204, 16
        %v453 = vrot.slane %v451, 5
        %v454 = vor.u32 %v450, %v453
        %v455 = vrot.slane %v454, 4
        %v457 = vshll.u32 %v205, 16
        %v459 = vrot.slane %v457, 5
        %v460 = vsel %vm254, %v455, %v459
        %v461 = vshrl.u32 %v205, 16
        %v463 = vrot.slane %v461, 4
        %v464 = vor.u32 %v463, %v459
        %v465 = vrot.slane %v464, 4
        %v467 = vshll.u32 %v244, 16
        %v469 = vrot.slane %v467, 5
        %v470 = vsel %vm254, %v465, %v469
        %v472 = vshrl.u32 %v206, 16
        %v474 = vrot.slane %v472, 4
        %v475 = vshll.u32 %v206, 16
        %v477 = vrot.slane %v475, 5
        %v478 = vor.u32 %v474, %v477
        %v479 = vrot.slane %v478, 4
        %v481 = vshll.u32 %v207, 16
        %v483 = vrot.slane %v481, 5
        %v484 = vsel %vm254, %v479, %v483
        %v485 = vshrl.u32 %v207, 16
        %v487 = vrot.slane %v485, 4
        %v488 = vor.u32 %v487, %v483
        %v489 = vrot.slane %v488, 4
        %v491 = vshll.u32 %v245, 16
        %v493 = vrot.slane %v491, 5
        %v494 = vsel %vm254, %v489, %v493
        %v496 = vshrl.u32 %v208, 16
        %v498 = vrot.slane %v496, 4
        %v499 = vshll.u32 %v208, 16
        %v501 = vrot.slane %v499, 5
        %v502 = vor.u32 %v498, %v501
        %v503 = vrot.slane %v502, 4
        %v505 = vshll.u32 %v209, 16
        %v507 = vrot.slane %v505, 5
        %v508 = vsel %vm254, %v503, %v507
        %v509 = vshrl.u32 %v209, 16
        %v511 = vrot.slane %v509, 4
        %v512 = vor.u32 %v511, %v507
        %v513 = vrot.slane %v512, 4
        %v515 = vshll.u32 %v246, 16
        %v517 = vrot.slane %v515, 5
        %v518 = vsel %vm254, %v513, %v517
        %v520 = vshrl.u32 %v210, 16
        %v522 = vrot.slane %v520, 4
        %v523 = vshll.u32 %v210, 16
        %v525 = vrot.slane %v523, 5
        %v526 = vor.u32 %v522, %v525
        %v527 = vrot.slane %v526, 4
        %v529 = vshll.u32 %v211, 16
        %v531 = vrot.slane %v529, 5
        %v532 = vsel %vm254, %v527, %v531
        %v533 = vshrl.u32 %v211, 16
        %v535 = vrot.slane %v533, 4
        %v536 = vor.u32 %v535, %v531
        %v537 = vrot.slane %v536, 4
        %v539 = vshll.u32 %v247, 16
        %v541 = vrot.slane %v539, 5
        %v542 = vsel %vm254, %v537, %v541
        %v544 = vshrl.u32 %v212, 16
        %v546 = vrot.slane %v544, 4
        %v547 = vshll.u32 %v212, 16
        %v549 = vrot.slane %v547, 5
        %v550 = vor.u32 %v546, %v549
        %v551 = vrot.slane %v550, 4
        %v553 = vshll.u32 %v213, 16
        %v555 = vrot.slane %v553, 5
        %v556 = vsel %vm254, %v551, %v555
        %v557 = vshrl.u32 %v213, 16
        %v559 = vrot.slane %v557, 4
        %v560 = vor.u32 %v559, %v555
        %v561 = vrot.slane %v560, 4
        %v563 = vshll.u32 %v248, 16
        %v565 = vrot.slane %v563, 5
        %v566 = vsel %vm254, %v561, %v565
        %v568 = vshrl.u32 %v214, 16
        %v570 = vrot.slane %v568, 4
        %v571 = vshll.u32 %v214, 16
        %v573 = vrot.slane %v571, 5
        %v574 = vor.u32 %v570, %v573
        %v575 = vrot.slane %v574, 4
        %v577 = vshll.u32 %v215, 16
        %v579 = vrot.slane %v577, 5
        %v580 = vsel %vm254, %v575, %v579
        %v581 = vshrl.u32 %v215, 16
        %v583 = vrot.slane %v581, 4
        %v584 = vor.u32 %v583, %v579
        %v585 = vrot.slane %v584, 4
        %v587 = vshll.u32 %v249, 16
        %v589 = vrot.slane %v587, 5
        %v590 = vsel %vm254, %v585, %v589
        %v592 = vshrl.u32 %v216, 16
        %v594 = vrot.slane %v592, 4
        %v595 = vshll.u32 %v216, 16
        %v597 = vrot.slane %v595, 5
        %v598 = vor.u32 %v594, %v597
        %v599 = vrot.slane %v598, 4
        %v601 = vshll.u32 %v217, 16
        %v603 = vrot.slane %v601, 5
        %v604 = vsel %vm254, %v599, %v603
        %v605 = vshrl.u32 %v217, 16
        %v607 = vrot.slane %v605, 4
        %v608 = vor.u32 %v607, %v603
        %v609 = vrot.slane %v608, 4
        %v611 = vshll.u32 %v250, 16
        %v613 = vrot.slane %v611, 5
        %v614 = vsel %vm254, %v609, %v613
        %v616 = vshrl.u32 %v218, 16
        %v618 = vrot.slane %v616, 4
        %v619 = vshll.u32 %v218, 16
        %v621 = vrot.slane %v619, 5
        %v622 = vor.u32 %v618, %v621
        %v623 = vrot.slane %v622, 4
        %v625 = vshll.u32 %v219, 16
        %v627 = vrot.slane %v625, 5
        %v628 = vsel %vm254, %v623, %v627
        %v629 = vshrl.u32 %v219, 16
        %v631 = vrot.slane %v629, 4
        %v632 = vor.u32 %v631, %v627
        %v633 = vrot.slane %v632, 4
        %v635 = vshll.u32 %v251, 16
        %v637 = vrot.slane %v635, 5
        %v638 = vsel %vm254, %v633, %v637
        %v639 = vld [vmem:[%s1 + $0x40] sm:$0xf]
        %v640 = vld [vmem:[%s1 + $0x44] sm:$0xf]
        %v641 = vld [vmem:[%s1 + $0x48] sm:$0xf]
        %v642 = vld [vmem:[%s1 + $0x4c] sm:$0xf]
        %v643 = vld [vmem:[%s1 + $0x50] sm:$0xf]
        %v644 = vld [vmem:[%s1 + $0x54] sm:$0xf]
        %v645 = vld [vmem:[%s1 + $0x58] sm:$0xf]
        %v646 = vld [vmem:[%s1 + $0x5c] sm:$0xf]
        %v647 = vld [vmem:[%s1 + $0x60] sm:$0xf]
        %v648 = vld [vmem:[%s1 + $0x64] sm:$0xf]
        %v649 = vld [vmem:[%s1 + $0x68] sm:$0xf]
        %v650 = vld [vmem:[%s1 + $0x6c] sm:$0xf]
        %v651 = vld [vmem:[%s1 + $0x70] sm:$0xf]
        %v652 = vld [vmem:[%s1 + $0x74] sm:$0xf]
        %v653 = vld [vmem:[%s1 + $0x78] sm:$0xf]
        %v654 = vld [vmem:[%s1 + $0x7c] sm:$0xf]
        %v655 = vunpack.c.l.b16 %v268
        %v656 = vunpack.c.l.b16 %v278
        %v657 = vunpack.c.l.b16 %v292
        %v658 = vunpack.c.l.b16 %v302
        %v659 = vunpack.c.l.b16 %v316
        %v660 = vunpack.c.l.b16 %v326
        %v661 = vunpack.c.l.b16 %v340
        %v662 = vunpack.c.l.b16 %v350
        %v663 = vunpack.c.l.b16 %v364
        %v664 = vunpack.c.l.b16 %v374
        %v665 = vunpack.c.l.b16 %v388
        %v666 = vunpack.c.l.b16 %v398
        %v667 = vunpack.c.l.b16 %v412
        %v668 = vunpack.c.l.b16 %v422
        %v669 = vunpack.c.l.b16 %v436
        %v670 = vunpack.c.l.b16 %v446
        %v671 = vunpack.c.l.b16 %v460
        %v672 = vunpack.c.l.b16 %v470
        %v673 = vunpack.c.l.b16 %v484
        %v674 = vunpack.c.l.b16 %v494
        %v675 = vunpack.c.l.b16 %v508
        %v676 = vunpack.c.l.b16 %v518
        %v677 = vunpack.c.l.b16 %v532
        %v678 = vunpack.c.l.b16 %v542
        %v679 = vunpack.c.l.b16 %v556
        %v680 = vunpack.c.l.b16 %v566
        %v681 = vunpack.c.l.b16 %v580
        %v682 = vunpack.c.l.b16 %v590
        %v683 = vunpack.c.l.b16 %v604
        %v684 = vunpack.c.l.b16 %v614
        %v685 = vunpack.c.l.b16 %v628
        %v686 = vunpack.c.l.b16 %v638
        %v687 = vpack.c.b16 %v656, %v655
        %v688 = vpack.c.b16 %v658, %v657
        %v689 = vpack.c.b16 %v660, %v659
        %v690 = vpack.c.b16 %v662, %v661
        %v691 = vpack.c.b16 %v664, %v663
        %v692 = vpack.c.b16 %v666, %v665
        %v693 = vpack.c.b16 %v668, %v667
        %v694 = vpack.c.b16 %v670, %v669
        %v695 = vpack.c.b16 %v672, %v671
        %v696 = vpack.c.b16 %v674, %v673
        %v697 = vpack.c.b16 %v676, %v675
        %v698 = vpack.c.b16 %v678, %v677
        %v699 = vpack.c.b16 %v680, %v679
        %v700 = vpack.c.b16 %v682, %v681
        %v701 = vpack.c.b16 %v684, %v683
        %v702 = vpack.c.b16 %v686, %v685
        %v735 = vunpack.c.l.b16 %v639
        %v736 = vunpack.c.l.b16 %v640
        %v737 = vunpack.c.l.b16 %v641
        %v738 = vunpack.c.l.b16 %v642
        %v739 = vunpack.c.l.b16 %v643
        %v740 = vunpack.c.l.b16 %v644
        %v741 = vunpack.c.l.b16 %v645
        %v742 = vunpack.c.l.b16 %v646
        %v743 = vunpack.c.l.b16 %v647
        %v744 = vunpack.c.l.b16 %v648
        %v745 = vunpack.c.l.b16 %v649
        %v746 = vunpack.c.l.b16 %v650
        %v747 = vunpack.c.l.b16 %v651
        %v748 = vunpack.c.l.b16 %v652
        %v749 = vunpack.c.l.b16 %v653
        %v750 = vunpack.c.l.b16 %v654
        %v751 = vpack.c.b16 %v736, %v735
        %v752 = vpack.c.b16 %v738, %v737
        %v753 = vpack.c.b16 %v740, %v739
        %v754 = vpack.c.b16 %v742, %v741
        %v755 = vpack.c.b16 %v744, %v743
        %v756 = vpack.c.b16 %v746, %v745
        %v757 = vpack.c.b16 %v748, %v747
        %v758 = vpack.c.b16 %v750, %v749
        %767 = vmatpush.bf16.msra.mxu0 %v758
        %768 = vmatpush.bf16.msra.mxu0 %v757
        %769 = vmatpush.bf16.msra.mxu0 %v756
        %770 = vmatpush.bf16.msra.mxu0 %v755
        %771 = vmatpush.bf16.msra.mxu0 %v754
        %772 = vmatpush.bf16.msra.mxu0 %v753
        %773 = vmatpush.bf16.msra.mxu0 %v752
        %774 = vmatpush.bf16.msra.mxu0 %v751
        %775 = vmatmul.bf16.gmra.mxu0 %v687
        %v776 = vpop.f32.mrf.mxu0
        %v777 = vadd.f32 0.0, %v776
        %v778 = vpop.f32.mrf.mxu0
        %v779 = vadd.f32 0.0, %v778
        %780 = vmatmul.bf16.gmra.mxu0 %v688
        %v781 = vpop.f32.mrf.mxu0
        %v782 = vadd.f32 0.0, %v781
        %v783 = vpop.f32.mrf.mxu0
        %v784 = vadd.f32 0.0, %v783
        %785 = vmatmul.bf16.gmra.mxu0 %v689
        %v786 = vpop.f32.mrf.mxu0
        %v787 = vadd.f32 0.0, %v786
        %v788 = vpop.f32.mrf.mxu0
        %v789 = vadd.f32 0.0, %v788
        %790 = vmatmul.bf16.gmra.mxu0 %v690
        %v791 = vpop.f32.mrf.mxu0
        %v792 = vadd.f32 0.0, %v791
        %v793 = vpop.f32.mrf.mxu0
        %v794 = vadd.f32 0.0, %v793
        %795 = vmatmul.bf16.gmra.mxu0 %v691
        %v796 = vpop.f32.mrf.mxu0
        %v797 = vadd.f32 0.0, %v796
        %v798 = vpop.f32.mrf.mxu0
        %v799 = vadd.f32 0.0, %v798
        %800 = vmatmul.bf16.gmra.mxu0 %v692
        %v801 = vpop.f32.mrf.mxu0
        %v802 = vadd.f32 0.0, %v801
        %v803 = vpop.f32.mrf.mxu0
        %v804 = vadd.f32 0.0, %v803
        %805 = vmatmul.bf16.gmra.mxu0 %v693
        %v806 = vpop.f32.mrf.mxu0
        %v807 = vadd.f32 0.0, %v806
        %v808 = vpop.f32.mrf.mxu0
        %v809 = vadd.f32 0.0, %v808
        %810 = vmatmul.bf16.gmra.mxu0 %v694
        %v811 = vpop.f32.mrf.mxu0
        %v812 = vadd.f32 0.0, %v811
        %v813 = vpop.f32.mrf.mxu0
        %v814 = vadd.f32 0.0, %v813
        %815 = vmatmul.bf16.gmra.mxu0 %v695
        %v816 = vpop.f32.mrf.mxu0
        %v817 = vadd.f32 0.0, %v816
        %v818 = vpop.f32.mrf.mxu0
        %v819 = vadd.f32 0.0, %v818
        %820 = vmatmul.bf16.gmra.mxu0 %v696
        %v821 = vpop.f32.mrf.mxu0
        %v822 = vadd.f32 0.0, %v821
        %v823 = vpop.f32.mrf.mxu0
        %v824 = vadd.f32 0.0, %v823
        %825 = vmatmul.bf16.gmra.mxu0 %v697
        %v826 = vpop.f32.mrf.mxu0
        %v827 = vadd.f32 0.0, %v826
        %v828 = vpop.f32.mrf.mxu0
        %v829 = vadd.f32 0.0, %v828
        %830 = vmatmul.bf16.gmra.mxu0 %v698
        %v831 = vpop.f32.mrf.mxu0
        %v832 = vadd.f32 0.0, %v831
        %v833 = vpop.f32.mrf.mxu0
        %v834 = vadd.f32 0.0, %v833
        %835 = vmatmul.bf16.gmra.mxu0 %v699
        %v836 = vpop.f32.mrf.mxu0
        %v837 = vadd.f32 0.0, %v836
        %v838 = vpop.f32.mrf.mxu0
        %v839 = vadd.f32 0.0, %v838
        %840 = vmatmul.bf16.gmra.mxu0 %v700
        %v841 = vpop.f32.mrf.mxu0
        %v842 = vadd.f32 0.0, %v841
        %v843 = vpop.f32.mrf.mxu0
        %v844 = vadd.f32 0.0, %v843
        %845 = vmatmul.bf16.gmra.mxu0 %v701
        %v846 = vpop.f32.mrf.mxu0
        %v847 = vadd.f32 0.0, %v846
        %v848 = vpop.f32.mrf.mxu0
        %v849 = vadd.f32 0.0, %v848
        %850 = vmatmul.bf16.gmra.mxu0 %v702
        %v851 = vpop.f32.mrf.mxu0
        %v852 = vadd.f32 0.0, %v851
        %v853 = vpop.f32.mrf.mxu0
        %v854 = vadd.f32 0.0, %v853
        %855 = vdwg.mxu0
        %v888 = vunpack.c.l.b16 %v188
        %v889 = vunpack.c.l.b16 %v189
        %v890 = vunpack.c.l.b16 %v190
        %v891 = vunpack.c.l.b16 %v191
        %v892 = vunpack.c.l.b16 %v192
        %v893 = vunpack.c.l.b16 %v193
        %v894 = vunpack.c.l.b16 %v194
        %v895 = vunpack.c.l.b16 %v195
        %v896 = vunpack.c.l.b16 %v196
        %v897 = vunpack.c.l.b16 %v197
        %v898 = vunpack.c.l.b16 %v198
        %v899 = vunpack.c.l.b16 %v199
        %v900 = vunpack.c.l.b16 %v200
        %v901 = vunpack.c.l.b16 %v201
        %v902 = vunpack.c.l.b16 %v202
        %v903 = vunpack.c.l.b16 %v203
        %v904 = vunpack.c.l.b16 %v204
        %v905 = vunpack.c.l.b16 %v205
        %v906 = vunpack.c.l.b16 %v206
        %v907 = vunpack.c.l.b16 %v207
        %v908 = vunpack.c.l.b16 %v208
        %v909 = vunpack.c.l.b16 %v209
        %v910 = vunpack.c.l.b16 %v210
        %v911 = vunpack.c.l.b16 %v211
        %v912 = vunpack.c.l.b16 %v212
        %v913 = vunpack.c.l.b16 %v213
        %v914 = vunpack.c.l.b16 %v214
        %v915 = vunpack.c.l.b16 %v215
        %v916 = vunpack.c.l.b16 %v216
        %v917 = vunpack.c.l.b16 %v217
        %v918 = vunpack.c.l.b16 %v218
        %v919 = vunpack.c.l.b16 %v219
        %v920 = vpack.c.b16 %v889, %v888
        %v921 = vpack.c.b16 %v891, %v890
        %v922 = vpack.c.b16 %v893, %v892
        %v923 = vpack.c.b16 %v895, %v894
        %v924 = vpack.c.b16 %v897, %v896
        %v925 = vpack.c.b16 %v899, %v898
        %v926 = vpack.c.b16 %v901, %v900
        %v927 = vpack.c.b16 %v903, %v902
        %v928 = vpack.c.b16 %v905, %v904
        %v929 = vpack.c.b16 %v907, %v906
        %v930 = vpack.c.b16 %v909, %v908
        %v931 = vpack.c.b16 %v911, %v910
        %v932 = vpack.c.b16 %v913, %v912
        %v933 = vpack.c.b16 %v915, %v914
        %v934 = vpack.c.b16 %v917, %v916
        %v935 = vpack.c.b16 %v919, %v918
        %v968 = vunpack.c.l.b16 %v220
        %v969 = vunpack.c.l.b16 %v221
        %v970 = vunpack.c.l.b16 %v222
        %v971 = vunpack.c.l.b16 %v223
        %v972 = vunpack.c.l.b16 %v224
        %v973 = vunpack.c.l.b16 %v225
        %v974 = vunpack.c.l.b16 %v226
        %v975 = vunpack.c.l.b16 %v227
        %v976 = vunpack.c.l.b16 %v228
        %v977 = vunpack.c.l.b16 %v229
        %v978 = vunpack.c.l.b16 %v230
        %v979 = vunpack.c.l.b16 %v231
        %v980 = vunpack.c.l.b16 %v232
        %v981 = vunpack.c.l.b16 %v233
        %v982 = vunpack.c.l.b16 %v234
        %v983 = vunpack.c.l.b16 %v235
        %v984 = vpack.c.b16 %v969, %v968
        %v985 = vpack.c.b16 %v971, %v970
        %v986 = vpack.c.b16 %v973, %v972
        %v987 = vpack.c.b16 %v975, %v974
        %v988 = vpack.c.b16 %v977, %v976
        %v989 = vpack.c.b16 %v979, %v978
        %v990 = vpack.c.b16 %v981, %v980
        %v991 = vpack.c.b16 %v983, %v982
        %1000 = vmatpush.bf16.msra.mxu0 %v991
        %1001 = vmatpush.bf16.msra.mxu0 %v990
        %1002 = vmatpush.bf16.msra.mxu0 %v989
        %1003 = vmatpush.bf16.msra.mxu0 %v988
        %1004 = vmatpush.bf16.msra.mxu0 %v987
        %1005 = vmatpush.bf16.msra.mxu0 %v986
        %1006 = vmatpush.bf16.msra.mxu0 %v985
        %1007 = vmatpush.bf16.msra.mxu0 %v984
        %1008 = vmatmul.bf16.gmra.mxu0 %v920
        %v1009 = vpop.f32.mrf.mxu0
        %v1010 = vadd.f32 %v777, %v1009
        %v1011 = vpop.f32.mrf.mxu0
        %v1012 = vadd.f32 %v779, %v1011
        %1013 = vmatmul.bf16.gmra.mxu0 %v921
        %v1014 = vpop.f32.mrf.mxu0
        %v1015 = vadd.f32 %v782, %v1014
        %v1016 = vpop.f32.mrf.mxu0
        %v1017 = vadd.f32 %v784, %v1016
        %1018 = vmatmul.bf16.gmra.mxu0 %v922
        %v1019 = vpop.f32.mrf.mxu0
        %v1020 = vadd.f32 %v787, %v1019
        %v1021 = vpop.f32.mrf.mxu0
        %v1022 = vadd.f32 %v789, %v1021
        %1023 = vmatmul.bf16.gmra.mxu0 %v923
        %v1024 = vpop.f32.mrf.mxu0
        %v1025 = vadd.f32 %v792, %v1024
        %v1026 = vpop.f32.mrf.mxu0
        %v1027 = vadd.f32 %v794, %v1026
        %1028 = vmatmul.bf16.gmra.mxu0 %v924
        %v1029 = vpop.f32.mrf.mxu0
        %v1030 = vadd.f32 %v797, %v1029
        %v1031 = vpop.f32.mrf.mxu0
        %v1032 = vadd.f32 %v799, %v1031
        %1033 = vmatmul.bf16.gmra.mxu0 %v925
        %v1034 = vpop.f32.mrf.mxu0
        %v1035 = vadd.f32 %v802, %v1034
        %v1036 = vpop.f32.mrf.mxu0
        %v1037 = vadd.f32 %v804, %v1036
        %1038 = vmatmul.bf16.gmra.mxu0 %v926
        %v1039 = vpop.f32.mrf.mxu0
        %v1040 = vadd.f32 %v807, %v1039
        %v1041 = vpop.f32.mrf.mxu0
        %v1042 = vadd.f32 %v809, %v1041
        %1043 = vmatmul.bf16.gmra.mxu0 %v927
        %v1044 = vpop.f32.mrf.mxu0
        %v1045 = vadd.f32 %v812, %v1044
        %v1046 = vpop.f32.mrf.mxu0
        %v1047 = vadd.f32 %v814, %v1046
        %1048 = vmatmul.bf16.gmra.mxu0 %v928
        %v1049 = vpop.f32.mrf.mxu0
        %v1050 = vadd.f32 %v817, %v1049
        %v1051 = vpop.f32.mrf.mxu0
        %v1052 = vadd.f32 %v819, %v1051
        %1053 = vmatmul.bf16.gmra.mxu0 %v929
        %v1054 = vpop.f32.mrf.mxu0
        %v1055 = vadd.f32 %v822, %v1054
        %v1056 = vpop.f32.mrf.mxu0
        %v1057 = vadd.f32 %v824, %v1056
        %1058 = vmatmul.bf16.gmra.mxu0 %v930
        %v1059 = vpop.f32.mrf.mxu0
        %v1060 = vadd.f32 %v827, %v1059
        %v1061 = vpop.f32.mrf.mxu0
        %v1062 = vadd.f32 %v829, %v1061
        %1063 = vmatmul.bf16.gmra.mxu0 %v931
        %v1064 = vpop.f32.mrf.mxu0
        %v1065 = vadd.f32 %v832, %v1064
        %v1066 = vpop.f32.mrf.mxu0
        %v1067 = vadd.f32 %v834, %v1066
        %1068 = vmatmul.bf16.gmra.mxu0 %v932
        %v1069 = vpop.f32.mrf.mxu0
        %v1070 = vadd.f32 %v837, %v1069
        %v1071 = vpop.f32.mrf.mxu0
        %v1072 = vadd.f32 %v839, %v1071
        %1073 = vmatmul.bf16.gmra.mxu0 %v933
        %v1074 = vpop.f32.mrf.mxu0
        %v1075 = vadd.f32 %v842, %v1074
        %v1076 = vpop.f32.mrf.mxu0
        %v1077 = vadd.f32 %v844, %v1076
        %1078 = vmatmul.bf16.gmra.mxu0 %v934
        %v1079 = vpop.f32.mrf.mxu0
        %v1080 = vadd.f32 %v847, %v1079
        %v1081 = vpop.f32.mrf.mxu0
        %v1082 = vadd.f32 %v849, %v1081
        %1083 = vmatmul.bf16.gmra.mxu0 %v935
        %v1084 = vpop.f32.mrf.mxu0
        %v1085 = vadd.f32 %v852, %v1084
        %v1086 = vpop.f32.mrf.mxu0
        %v1087 = vadd.f32 %v854, %v1086
        %1088 = vdwg.mxu0
        %v1089 = vld [vmem:[%s187] sm:$0xe]
        %v1090 = vld [vmem:[%s187 + $0xc] sm:$0xe]
        %v1091 = vld [vmem:[%s187 + $0x18] sm:$0xe]
        %v1092 = vld [vmem:[%s187 + $0x24] sm:$0xe]
        %v1093 = vld [vmem:[%s187 + $0x30] sm:$0xe]
        %v1094 = vld [vmem:[%s187 + $0x3c] sm:$0xe]
        %v1095 = vld [vmem:[%s187 + $0x48] sm:$0xe]
        %v1096 = vld [vmem:[%s187 + $0x54] sm:$0xe]
        %v1097 = vld [vmem:[%s187 + $0x60] sm:$0xe]
        %v1098 = vld [vmem:[%s187 + $0x6c] sm:$0xe]
        %v1099 = vld [vmem:[%s187 + $0x78] sm:$0xe]
        %v1100 = vld [vmem:[%s187 + $0x84] sm:$0xe]
        %v1101 = vld [vmem:[%s187 + $0x90] sm:$0xe]
        %v1102 = vld [vmem:[%s187 + $0x9c] sm:$0xe]
        %v1103 = vld [vmem:[%s187 + $0xa8] sm:$0xe]
        %v1104 = vld [vmem:[%s187 + $0xb4] sm:$0xe]
        %vm1137 = vcmask 1042432
        %vm1138 = vcmask 1046532
        %vm1139 = vmor %vm1137, %vm1138
        %v1140 = vrot.slane %v1089, 5
        %v1141 = vrot.slane %v1140, 4
        %v1142 = vrot.slane %v189, 5
        %v1143 = vsel %vm1139, %v1141, %v1142
        %v1144 = vrot.slane %v1142, 4
        %v1145 = vrot.slane %v236, 5
        %v1146 = vsel %vm1139, %v1144, %v1145
        %v1147 = vrot.slane %v1090, 5
        %v1148 = vrot.slane %v1147, 4
        %v1149 = vrot.slane %v191, 5
        %v1150 = vsel %vm1139, %v1148, %v1149
        %v1151 = vrot.slane %v1149, 4
        %v1152 = vrot.slane %v237, 5
        %v1153 = vsel %vm1139, %v1151, %v1152
        %v1154 = vrot.slane %v1091, 5
        %v1155 = vrot.slane %v1154, 4
        %v1156 = vrot.slane %v193, 5
        %v1157 = vsel %vm1139, %v1155, %v1156
        %v1158 = vrot.slane %v1156, 4
        %v1159 = vrot.slane %v238, 5
        %v1160 = vsel %vm1139, %v1158, %v1159
        %v1161 = vrot.slane %v1092, 5
        %v1162 = vrot.slane %v1161, 4
        %v1163 = vrot.slane %v195, 5
        %v1164 = vsel %vm1139, %v1162, %v1163
        %v1165 = vrot.slane %v1163, 4
        %v1166 = vrot.slane %v239, 5
        %v1167 = vsel %vm1139, %v1165, %v1166
        %v1168 = vrot.slane %v1093, 5
        %v1169 = vrot.slane %v1168, 4
        %v1170 = vrot.slane %v197, 5
        %v1171 = vsel %vm1139, %v1169, %v1170
        %v1172 = vrot.slane %v1170, 4
        %v1173 = vrot.slane %v240, 5
        %v1174 = vsel %vm1139, %v1172, %v1173
        %v1175 = vrot.slane %v1094, 5
        %v1176 = vrot.slane %v1175, 4
        %v1177 = vrot.slane %v199, 5
        %v1178 = vsel %vm1139, %v1176, %v1177
        %v1179 = vrot.slane %v1177, 4
        %v1180 = vrot.slane %v241, 5
        %v1181 = vsel %vm1139, %v1179, %v1180
        %v1182 = vrot.slane %v1095, 5
        %v1183 = vrot.slane %v1182, 4
        %v1184 = vrot.slane %v201, 5
        %v1185 = vsel %vm1139, %v1183, %v1184
        %v1186 = vrot.slane %v1184, 4
        %v1187 = vrot.slane %v242, 5
        %v1188 = vsel %vm1139, %v1186, %v1187
        %v1189 = vrot.slane %v1096, 5
        %v1190 = vrot.slane %v1189, 4
        %v1191 = vrot.slane %v203, 5
        %v1192 = vsel %vm1139, %v1190, %v1191
        %v1193 = vrot.slane %v1191, 4
        %v1194 = vrot.slane %v243, 5
        %v1195 = vsel %vm1139, %v1193, %v1194
        %v1196 = vrot.slane %v1097, 5
        %v1197 = vrot.slane %v1196, 4
        %v1198 = vrot.slane %v205, 5
        %v1199 = vsel %vm1139, %v1197, %v1198
        %v1200 = vrot.slane %v1198, 4
        %v1201 = vrot.slane %v244, 5
        %v1202 = vsel %vm1139, %v1200, %v1201
        %v1203 = vrot.slane %v1098, 5
        %v1204 = vrot.slane %v1203, 4
        %v1205 = vrot.slane %v207, 5
        %v1206 = vsel %vm1139, %v1204, %v1205
        %v1207 = vrot.slane %v1205, 4
        %v1208 = vrot.slane %v245, 5
        %v1209 = vsel %vm1139, %v1207, %v1208
        %v1210 = vrot.slane %v1099, 5
        %v1211 = vrot.slane %v1210, 4
        %v1212 = vrot.slane %v209, 5
        %v1213 = vsel %vm1139, %v1211, %v1212
        %v1214 = vrot.slane %v1212, 4
        %v1215 = vrot.slane %v246, 5
        %v1216 = vsel %vm1139, %v1214, %v1215
        %v1217 = vrot.slane %v1100, 5
        %v1218 = vrot.slane %v1217, 4
        %v1219 = vrot.slane %v211, 5
        %v1220 = vsel %vm1139, %v1218, %v1219
        %v1221 = vrot.slane %v1219, 4
        %v1222 = vrot.slane %v247, 5
        %v1223 = vsel %vm1139, %v1221, %v1222
        %v1224 = vrot.slane %v1101, 5
        %v1225 = vrot.slane %v1224, 4
        %v1226 = vrot.slane %v213, 5
        %v1227 = vsel %vm1139, %v1225, %v1226
        %v1228 = vrot.slane %v1226, 4
        %v1229 = vrot.slane %v248, 5
        %v1230 = vsel %vm1139, %v1228, %v1229
        %v1231 = vrot.slane %v1102, 5
        %v1232 = vrot.slane %v1231, 4
        %v1233 = vrot.slane %v215, 5
        %v1234 = vsel %vm1139, %v1232, %v1233
        %v1235 = vrot.slane %v1233, 4
        %v1236 = vrot.slane %v249, 5
        %v1237 = vsel %vm1139, %v1235, %v1236
        %v1238 = vrot.slane %v1103, 5
        %v1239 = vrot.slane %v1238, 4
        %v1240 = vrot.slane %v217, 5
        %v1241 = vsel %vm1139, %v1239, %v1240
        %v1242 = vrot.slane %v1240, 4
        %v1243 = vrot.slane %v250, 5
        %v1244 = vsel %vm1139, %v1242, %v1243
        %v1245 = vrot.slane %v1104, 5
        %v1246 = vrot.slane %v1245, 4
        %v1247 = vrot.slane %v219, 5
        %v1248 = vsel %vm1139, %v1246, %v1247
        %v1249 = vrot.slane %v1247, 4
        %v1250 = vrot.slane %v251, 5
        %v1251 = vsel %vm1139, %v1249, %v1250
        %v1252 = vld [vmem:[%s1 + $0x80] sm:$0xf]
        %v1253 = vld [vmem:[%s1 + $0x84] sm:$0xf]
        %v1254 = vld [vmem:[%s1 + $0x88] sm:$0xf]
        %v1255 = vld [vmem:[%s1 + $0x8c] sm:$0xf]
        %v1256 = vld [vmem:[%s1 + $0x90] sm:$0xf]
        %v1257 = vld [vmem:[%s1 + $0x94] sm:$0xf]
        %v1258 = vld [vmem:[%s1 + $0x98] sm:$0xf]
        %v1259 = vld [vmem:[%s1 + $0x9c] sm:$0xf]
        %v1260 = vld [vmem:[%s1 + $0xa0] sm:$0xf]
        %v1261 = vld [vmem:[%s1 + $0xa4] sm:$0xf]
        %v1262 = vld [vmem:[%s1 + $0xa8] sm:$0xf]
        %v1263 = vld [vmem:[%s1 + $0xac] sm:$0xf]
        %v1264 = vld [vmem:[%s1 + $0xb0] sm:$0xf]
        %v1265 = vld [vmem:[%s1 + $0xb4] sm:$0xf]
        %v1266 = vld [vmem:[%s1 + $0xb8] sm:$0xf]
        %v1267 = vld [vmem:[%s1 + $0xbc] sm:$0xf]
        %v1268 = vunpack.c.l.b16 %v1143
        %v1269 = vunpack.c.l.b16 %v1146
        %v1270 = vunpack.c.l.b16 %v1150
        %v1271 = vunpack.c.l.b16 %v1153
        %v1272 = vunpack.c.l.b16 %v1157
        %v1273 = vunpack.c.l.b16 %v1160
        %v1274 = vunpack.c.l.b16 %v1164
        %v1275 = vunpack.c.l.b16 %v1167
        %v1276 = vunpack.c.l.b16 %v1171
        %v1277 = vunpack.c.l.b16 %v1174
        %v1278 = vunpack.c.l.b16 %v1178
        %v1279 = vunpack.c.l.b16 %v1181
        %v1280 = vunpack.c.l.b16 %v1185
        %v1281 = vunpack.c.l.b16 %v1188
        %v1282 = vunpack.c.l.b16 %v1192
        %v1283 = vunpack.c.l.b16 %v1195
        %v1284 = vunpack.c.l.b16 %v1199
        %v1285 = vunpack.c.l.b16 %v1202
        %v1286 = vunpack.c.l.b16 %v1206
        %v1287 = vunpack.c.l.b16 %v1209
        %v1288 = vunpack.c.l.b16 %v1213
        %v1289 = vunpack.c.l.b16 %v1216
        %v1290 = vunpack.c.l.b16 %v1220
        %v1291 = vunpack.c.l.b16 %v1223
        %v1292 = vunpack.c.l.b16 %v1227
        %v1293 = vunpack.c.l.b16 %v1230
        %v1294 = vunpack.c.l.b16 %v1234
        %v1295 = vunpack.c.l.b16 %v1237
        %v1296 = vunpack.c.l.b16 %v1241
        %v1297 = vunpack.c.l.b16 %v1244
        %v1298 = vunpack.c.l.b16 %v1248
        %v1299 = vunpack.c.l.b16 %v1251
        %v1300 = vpack.c.b16 %v1269, %v1268
        %v1301 = vpack.c.b16 %v1271, %v1270
        %v1302 = vpack.c.b16 %v1273, %v1272
        %v1303 = vpack.c.b16 %v1275, %v1274
        %v1304 = vpack.c.b16 %v1277, %v1276
        %v1305 = vpack.c.b16 %v1279, %v1278
        %v1306 = vpack.c.b16 %v1281, %v1280
        %v1307 = vpack.c.b16 %v1283, %v1282
        %v1308 = vpack.c.b16 %v1285, %v1284
        %v1309 = vpack.c.b16 %v1287, %v1286
        %v1310 = vpack.c.b16 %v1289, %v1288
        %v1311 = vpack.c.b16 %v1291, %v1290
        %v1312 = vpack.c.b16 %v1293, %v1292
        %v1313 = vpack.c.b16 %v1295, %v1294
        %v1314 = vpack.c.b16 %v1297, %v1296
        %v1315 = vpack.c.b16 %v1299, %v1298
        %v1348 = vunpack.c.l.b16 %v1252
        %v1349 = vunpack.c.l.b16 %v1253
        %v1350 = vunpack.c.l.b16 %v1254
        %v1351 = vunpack.c.l.b16 %v1255
        %v1352 = vunpack.c.l.b16 %v1256
        %v1353 = vunpack.c.l.b16 %v1257
        %v1354 = vunpack.c.l.b16 %v1258
        %v1355 = vunpack.c.l.b16 %v1259
        %v1356 = vunpack.c.l.b16 %v1260
        %v1357 = vunpack.c.l.b16 %v1261
        %v1358 = vunpack.c.l.b16 %v1262
        %v1359 = vunpack.c.l.b16 %v1263
        %v1360 = vunpack.c.l.b16 %v1264
        %v1361 = vunpack.c.l.b16 %v1265
        %v1362 = vunpack.c.l.b16 %v1266
        %v1363 = vunpack.c.l.b16 %v1267
        %v1364 = vpack.c.b16 %v1349, %v1348
        %v1365 = vpack.c.b16 %v1351, %v1350
        %v1366 = vpack.c.b16 %v1353, %v1352
        %v1367 = vpack.c.b16 %v1355, %v1354
        %v1368 = vpack.c.b16 %v1357, %v1356
        %v1369 = vpack.c.b16 %v1359, %v1358
        %v1370 = vpack.c.b16 %v1361, %v1360
        %v1371 = vpack.c.b16 %v1363, %v1362
        %1380 = vmatpush.bf16.msra.mxu0 %v1371
        %1381 = vmatpush.bf16.msra.mxu0 %v1370
        %1382 = vmatpush.bf16.msra.mxu0 %v1369
        %1383 = vmatpush.bf16.msra.mxu0 %v1368
        %1384 = vmatpush.bf16.msra.mxu0 %v1367
        %1385 = vmatpush.bf16.msra.mxu0 %v1366
        %1386 = vmatpush.bf16.msra.mxu0 %v1365
        %1387 = vmatpush.bf16.msra.mxu0 %v1364
        %1388 = vmatmul.bf16.gmra.mxu0 %v1300
        %v1389 = vpop.f32.mrf.mxu0
        %v1390 = vadd.f32 0.0, %v1389
        %v1391 = vpop.f32.mrf.mxu0
        %v1392 = vadd.f32 0.0, %v1391
        %1393 = vmatmul.bf16.gmra.mxu0 %v1301
        %v1394 = vpop.f32.mrf.mxu0
        %v1395 = vadd.f32 0.0, %v1394
        %v1396 = vpop.f32.mrf.mxu0
        %v1397 = vadd.f32 0.0, %v1396
        %1398 = vmatmul.bf16.gmra.mxu0 %v1302
        %v1399 = vpop.f32.mrf.mxu0
        %v1400 = vadd.f32 0.0, %v1399
        %v1401 = vpop.f32.mrf.mxu0
        %v1402 = vadd.f32 0.0, %v1401
        %1403 = vmatmul.bf16.gmra.mxu0 %v1303
        %v1404 = vpop.f32.mrf.mxu0
        %v1405 = vadd.f32 0.0, %v1404
        %v1406 = vpop.f32.mrf.mxu0
        %v1407 = vadd.f32 0.0, %v1406
        %1408 = vmatmul.bf16.gmra.mxu0 %v1304
        %v1409 = vpop.f32.mrf.mxu0
        %v1410 = vadd.f32 0.0, %v1409
        %v1411 = vpop.f32.mrf.mxu0
        %v1412 = vadd.f32 0.0, %v1411
        %1413 = vmatmul.bf16.gmra.mxu0 %v1305
        %v1414 = vpop.f32.mrf.mxu0
        %v1415 = vadd.f32 0.0, %v1414
        %v1416 = vpop.f32.mrf.mxu0
        %v1417 = vadd.f32 0.0, %v1416
        %1418 = vmatmul.bf16.gmra.mxu0 %v1306
        %v1419 = vpop.f32.mrf.mxu0
        %v1420 = vadd.f32 0.0, %v1419
        %v1421 = vpop.f32.mrf.mxu0
        %v1422 = vadd.f32 0.0, %v1421
        %1423 = vmatmul.bf16.gmra.mxu0 %v1307
        %v1424 = vpop.f32.mrf.mxu0
        %v1425 = vadd.f32 0.0, %v1424
        %v1426 = vpop.f32.mrf.mxu0
        %v1427 = vadd.f32 0.0, %v1426
        %1428 = vmatmul.bf16.gmra.mxu0 %v1308
        %v1429 = vpop.f32.mrf.mxu0
        %v1430 = vadd.f32 0.0, %v1429
        %v1431 = vpop.f32.mrf.mxu0
        %v1432 = vadd.f32 0.0, %v1431
        %1433 = vmatmul.bf16.gmra.mxu0 %v1309
        %v1434 = vpop.f32.mrf.mxu0
        %v1435 = vadd.f32 0.0, %v1434
        %v1436 = vpop.f32.mrf.mxu0
        %v1437 = vadd.f32 0.0, %v1436
        %1438 = vmatmul.bf16.gmra.mxu0 %v1310
        %v1439 = vpop.f32.mrf.mxu0
        %v1440 = vadd.f32 0.0, %v1439
        %v1441 = vpop.f32.mrf.mxu0
        %v1442 = vadd.f32 0.0, %v1441
        %1443 = vmatmul.bf16.gmra.mxu0 %v1311
        %v1444 = vpop.f32.mrf.mxu0
        %v1445 = vadd.f32 0.0, %v1444
        %v1446 = vpop.f32.mrf.mxu0
        %v1447 = vadd.f32 0.0, %v1446
        %1448 = vmatmul.bf16.gmra.mxu0 %v1312
        %v1449 = vpop.f32.mrf.mxu0
        %v1450 = vadd.f32 0.0, %v1449
        %v1451 = vpop.f32.mrf.mxu0
        %v1452 = vadd.f32 0.0, %v1451
        %1453 = vmatmul.bf16.gmra.mxu0 %v1313
        %v1454 = vpop.f32.mrf.mxu0
        %v1455 = vadd.f32 0.0, %v1454
        %v1456 = vpop.f32.mrf.mxu0
        %v1457 = vadd.f32 0.0, %v1456
        %1458 = vmatmul.bf16.gmra.mxu0 %v1314
        %v1459 = vpop.f32.mrf.mxu0
        %v1460 = vadd.f32 0.0, %v1459
        %v1461 = vpop.f32.mrf.mxu0
        %v1462 = vadd.f32 0.0, %v1461
        %1463 = vmatmul.bf16.gmra.mxu0 %v1315
        %v1464 = vpop.f32.mrf.mxu0
        %v1465 = vadd.f32 0.0, %v1464
        %v1466 = vpop.f32.mrf.mxu0
        %v1467 = vadd.f32 0.0, %v1466
        %1468 = vdwg.mxu0
        %v1469 = vadd.f32 %v1010, %v1390
        %v1470 = vadd.f32 %v1012, %v1392
        %v1471 = vadd.f32 %v1015, %v1395
        %v1472 = vadd.f32 %v1017, %v1397
        %v1473 = vadd.f32 %v1020, %v1400
        %v1474 = vadd.f32 %v1022, %v1402
        %v1475 = vadd.f32 %v1025, %v1405
        %v1476 = vadd.f32 %v1027, %v1407
        %v1477 = vadd.f32 %v1030, %v1410
        %v1478 = vadd.f32 %v1032, %v1412
        %v1479 = vadd.f32 %v1035, %v1415
        %v1480 = vadd.f32 %v1037, %v1417
        %v1481 = vadd.f32 %v1040, %v1420
        %v1482 = vadd.f32 %v1042, %v1422
        %v1483 = vadd.f32 %v1045, %v1425
        %v1484 = vadd.f32 %v1047, %v1427
        %v1485 = vadd.f32 %v1050, %v1430
        %v1486 = vadd.f32 %v1052, %v1432
        %v1487 = vadd.f32 %v1055, %v1435
        %v1488 = vadd.f32 %v1057, %v1437
        %v1489 = vadd.f32 %v1060, %v1440
        %v1490 = vadd.f32 %v1062, %v1442
        %v1491 = vadd.f32 %v1065, %v1445
        %v1492 = vadd.f32 %v1067, %v1447
        %v1493 = vadd.f32 %v1070, %v1450
        %v1494 = vadd.f32 %v1072, %v1452
        %v1495 = vadd.f32 %v1075, %v1455
        %v1496 = vadd.f32 %v1077, %v1457
        %v1497 = vadd.f32 %v1080, %v1460
        %v1498 = vadd.f32 %v1082, %v1462
        %v1499 = vadd.f32 %v1085, %v1465
        %v1500 = vadd.f32 %v1087, %v1467
        %s1501 = sadd.s32 %s184, 1
        %s1502 = smul.u32 %s1501, 3
        %s1503 = smul.addr %s1502, 4
        %s1504 = scalar_lea.vmem %s182, %s1503
        %v1505 = vld [vmem:[%s1504] sm:$0xf]
        %v1506 = vld [vmem:[%s1504 + $0x4] sm:$0xf]
        %v1507 = vld [vmem:[%s1504 + $0xc] sm:$0xf]
        %v1508 = vld [vmem:[%s1504 + $0x10] sm:$0xf]
        %v1509 = vld [vmem:[%s1504 + $0x18] sm:$0xf]
        %v1510 = vld [vmem:[%s1504 + $0x1c] sm:$0xf]
        %v1511 = vld [vmem:[%s1504 + $0x24] sm:$0xf]
        %v1512 = vld [vmem:[%s1504 + $0x28] sm:$0xf]
        %v1513 = vld [vmem:[%s1504 + $0x30] sm:$0xf]
        %v1514 = vld [vmem:[%s1504 + $0x34] sm:$0xf]
        %v1515 = vld [vmem:[%s1504 + $0x3c] sm:$0xf]
        %v1516 = vld [vmem:[%s1504 + $0x40] sm:$0xf]
        %v1517 = vld [vmem:[%s1504 + $0x48] sm:$0xf]
        %v1518 = vld [vmem:[%s1504 + $0x4c] sm:$0xf]
        %v1519 = vld [vmem:[%s1504 + $0x54] sm:$0xf]
        %v1520 = vld [vmem:[%s1504 + $0x58] sm:$0xf]
        %v1521 = vld [vmem:[%s1504 + $0x60] sm:$0xf]
        %v1522 = vld [vmem:[%s1504 + $0x64] sm:$0xf]
        %v1523 = vld [vmem:[%s1504 + $0x6c] sm:$0xf]
        %v1524 = vld [vmem:[%s1504 + $0x70] sm:$0xf]
        %v1525 = vld [vmem:[%s1504 + $0x78] sm:$0xf]
        %v1526 = vld [vmem:[%s1504 + $0x7c] sm:$0xf]
        %v1527 = vld [vmem:[%s1504 + $0x84] sm:$0xf]
        %v1528 = vld [vmem:[%s1504 + $0x88] sm:$0xf]
        %v1529 = vld [vmem:[%s1504 + $0x90] sm:$0xf]
        %v1530 = vld [vmem:[%s1504 + $0x94] sm:$0xf]
        %v1531 = vld [vmem:[%s1504 + $0x9c] sm:$0xf]
        %v1532 = vld [vmem:[%s1504 + $0xa0] sm:$0xf]
        %v1533 = vld [vmem:[%s1504 + $0xa8] sm:$0xf]
        %v1534 = vld [vmem:[%s1504 + $0xac] sm:$0xf]
        %v1535 = vld [vmem:[%s1504 + $0xb4] sm:$0xf]
        %v1536 = vld [vmem:[%s1504 + $0xb8] sm:$0xf]
        %v1537 = vld [vmem:[%s1 + $0xc0] sm:$0xf]
        %v1538 = vld [vmem:[%s1 + $0xc4] sm:$0xf]
        %v1539 = vld [vmem:[%s1 + $0xc8] sm:$0xf]
        %v1540 = vld [vmem:[%s1 + $0xcc] sm:$0xf]
        %v1541 = vld [vmem:[%s1 + $0xd0] sm:$0xf]
        %v1542 = vld [vmem:[%s1 + $0xd4] sm:$0xf]
        %v1543 = vld [vmem:[%s1 + $0xd8] sm:$0xf]
        %v1544 = vld [vmem:[%s1 + $0xdc] sm:$0xf]
        %v1545 = vld [vmem:[%s1 + $0xe0] sm:$0xf]
        %v1546 = vld [vmem:[%s1 + $0xe4] sm:$0xf]
        %v1547 = vld [vmem:[%s1 + $0xe8] sm:$0xf]
        %v1548 = vld [vmem:[%s1 + $0xec] sm:$0xf]
        %v1549 = vld [vmem:[%s1 + $0xf0] sm:$0xf]
        %v1550 = vld [vmem:[%s1 + $0xf4] sm:$0xf]
        %v1551 = vld [vmem:[%s1 + $0xf8] sm:$0xf]
        %v1552 = vld [vmem:[%s1 + $0xfc] sm:$0xf]
        %v1585 = vunpack.c.l.b16 %v1505
        %v1586 = vunpack.c.l.b16 %v1506
        %v1587 = vunpack.c.l.b16 %v1507
        %v1588 = vunpack.c.l.b16 %v1508
        %v1589 = vunpack.c.l.b16 %v1509
        %v1590 = vunpack.c.l.b16 %v1510
        %v1591 = vunpack.c.l.b16 %v1511
        %v1592 = vunpack.c.l.b16 %v1512
        %v1593 = vunpack.c.l.b16 %v1513
        %v1594 = vunpack.c.l.b16 %v1514
        %v1595 = vunpack.c.l.b16 %v1515
        %v1596 = vunpack.c.l.b16 %v1516
        %v1597 = vunpack.c.l.b16 %v1517
        %v1598 = vunpack.c.l.b16 %v1518
        %v1599 = vunpack.c.l.b16 %v1519
        %v1600 = vunpack.c.l.b16 %v1520
        %v1601 = vunpack.c.l.b16 %v1521
        %v1602 = vunpack.c.l.b16 %v1522
        %v1603 = vunpack.c.l.b16 %v1523
        %v1604 = vunpack.c.l.b16 %v1524
        %v1605 = vunpack.c.l.b16 %v1525
        %v1606 = vunpack.c.l.b16 %v1526
        %v1607 = vunpack.c.l.b16 %v1527
        %v1608 = vunpack.c.l.b16 %v1528
        %v1609 = vunpack.c.l.b16 %v1529
        %v1610 = vunpack.c.l.b16 %v1530
        %v1611 = vunpack.c.l.b16 %v1531
        %v1612 = vunpack.c.l.b16 %v1532
        %v1613 = vunpack.c.l.b16 %v1533
        %v1614 = vunpack.c.l.b16 %v1534
        %v1615 = vunpack.c.l.b16 %v1535
        %v1616 = vunpack.c.l.b16 %v1536
        %v1617 = vpack.c.b16 %v1586, %v1585
        %v1618 = vpack.c.b16 %v1588, %v1587
        %v1619 = vpack.c.b16 %v1590, %v1589
        %v1620 = vpack.c.b16 %v1592, %v1591
        %v1621 = vpack.c.b16 %v1594, %v1593
        %v1622 = vpack.c.b16 %v1596, %v1595
        %v1623 = vpack.c.b16 %v1598, %v1597
        %v1624 = vpack.c.b16 %v1600, %v1599
        %v1625 = vpack.c.b16 %v1602, %v1601
        %v1626 = vpack.c.b16 %v1604, %v1603
        %v1627 = vpack.c.b16 %v1606, %v1605
        %v1628 = vpack.c.b16 %v1608, %v1607
        %v1629 = vpack.c.b16 %v1610, %v1609
        %v1630 = vpack.c.b16 %v1612, %v1611
        %v1631 = vpack.c.b16 %v1614, %v1613
        %v1632 = vpack.c.b16 %v1616, %v1615
        %v1665 = vunpack.c.l.b16 %v1537
        %v1666 = vunpack.c.l.b16 %v1538
        %v1667 = vunpack.c.l.b16 %v1539
        %v1668 = vunpack.c.l.b16 %v1540
        %v1669 = vunpack.c.l.b16 %v1541
        %v1670 = vunpack.c.l.b16 %v1542
        %v1671 = vunpack.c.l.b16 %v1543
        %v1672 = vunpack.c.l.b16 %v1544
        %v1673 = vunpack.c.l.b16 %v1545
        %v1674 = vunpack.c.l.b16 %v1546
        %v1675 = vunpack.c.l.b16 %v1547
        %v1676 = vunpack.c.l.b16 %v1548
        %v1677 = vunpack.c.l.b16 %v1549
        %v1678 = vunpack.c.l.b16 %v1550
        %v1679 = vunpack.c.l.b16 %v1551
        %v1680 = vunpack.c.l.b16 %v1552
        %v1681 = vpack.c.b16 %v1666, %v1665
        %v1682 = vpack.c.b16 %v1668, %v1667
        %v1683 = vpack.c.b16 %v1670, %v1669
        %v1684 = vpack.c.b16 %v1672, %v1671
        %v1685 = vpack.c.b16 %v1674, %v1673
        %v1686 = vpack.c.b16 %v1676, %v1675
        %v1687 = vpack.c.b16 %v1678, %v1677
        %v1688 = vpack.c.b16 %v1680, %v1679
        %1697 = vmatpush.bf16.msra.mxu0 %v1688
        %1698 = vmatpush.bf16.msra.mxu0 %v1687
        %1699 = vmatpush.bf16.msra.mxu0 %v1686
        %1700 = vmatpush.bf16.msra.mxu0 %v1685
        %1701 = vmatpush.bf16.msra.mxu0 %v1684
        %1702 = vmatpush.bf16.msra.mxu0 %v1683
        %1703 = vmatpush.bf16.msra.mxu0 %v1682
        %1704 = vmatpush.bf16.msra.mxu0 %v1681
        %1705 = vmatmul.bf16.gmra.mxu0 %v1617
        %v1706 = vpop.f32.mrf.mxu0
        %v1707 = vadd.f32 0.0, %v1706
        %v1708 = vpop.f32.mrf.mxu0
        %v1709 = vadd.f32 0.0, %v1708
        %1710 = vmatmul.bf16.gmra.mxu0 %v1618
        %v1711 = vpop.f32.mrf.mxu0
        %v1712 = vadd.f32 0.0, %v1711
        %v1713 = vpop.f32.mrf.mxu0
        %v1714 = vadd.f32 0.0, %v1713
        %1715 = vmatmul.bf16.gmra.mxu0 %v1619
        %v1716 = vpop.f32.mrf.mxu0
        %v1717 = vadd.f32 0.0, %v1716
        %v1718 = vpop.f32.mrf.mxu0
        %v1719 = vadd.f32 0.0, %v1718
        %1720 = vmatmul.bf16.gmra.mxu0 %v1620
        %v1721 = vpop.f32.mrf.mxu0
        %v1722 = vadd.f32 0.0, %v1721
        %v1723 = vpop.f32.mrf.mxu0
        %v1724 = vadd.f32 0.0, %v1723
        %1725 = vmatmul.bf16.gmra.mxu0 %v1621
        %v1726 = vpop.f32.mrf.mxu0
        %v1727 = vadd.f32 0.0, %v1726
        %v1728 = vpop.f32.mrf.mxu0
        %v1729 = vadd.f32 0.0, %v1728
        %1730 = vmatmul.bf16.gmra.mxu0 %v1622
        %v1731 = vpop.f32.mrf.mxu0
        %v1732 = vadd.f32 0.0, %v1731
        %v1733 = vpop.f32.mrf.mxu0
        %v1734 = vadd.f32 0.0, %v1733
        %1735 = vmatmul.bf16.gmra.mxu0 %v1623
        %v1736 = vpop.f32.mrf.mxu0
        %v1737 = vadd.f32 0.0, %v1736
        %v1738 = vpop.f32.mrf.mxu0
        %v1739 = vadd.f32 0.0, %v1738
        %1740 = vmatmul.bf16.gmra.mxu0 %v1624
        %v1741 = vpop.f32.mrf.mxu0
        %v1742 = vadd.f32 0.0, %v1741
        %v1743 = vpop.f32.mrf.mxu0
        %v1744 = vadd.f32 0.0, %v1743
        %1745 = vmatmul.bf16.gmra.mxu0 %v1625
        %v1746 = vpop.f32.mrf.mxu0
        %v1747 = vadd.f32 0.0, %v1746
        %v1748 = vpop.f32.mrf.mxu0
        %v1749 = vadd.f32 0.0, %v1748
        %1750 = vmatmul.bf16.gmra.mxu0 %v1626
        %v1751 = vpop.f32.mrf.mxu0
        %v1752 = vadd.f32 0.0, %v1751
        %v1753 = vpop.f32.mrf.mxu0
        %v1754 = vadd.f32 0.0, %v1753
        %1755 = vmatmul.bf16.gmra.mxu0 %v1627
        %v1756 = vpop.f32.mrf.mxu0
        %v1757 = vadd.f32 0.0, %v1756
        %v1758 = vpop.f32.mrf.mxu0
        %v1759 = vadd.f32 0.0, %v1758
        %1760 = vmatmul.bf16.gmra.mxu0 %v1628
        %v1761 = vpop.f32.mrf.mxu0
        %v1762 = vadd.f32 0.0, %v1761
        %v1763 = vpop.f32.mrf.mxu0
        %v1764 = vadd.f32 0.0, %v1763
        %1765 = vmatmul.bf16.gmra.mxu0 %v1629
        %v1766 = vpop.f32.mrf.mxu0
        %v1767 = vadd.f32 0.0, %v1766
        %v1768 = vpop.f32.mrf.mxu0
        %v1769 = vadd.f32 0.0, %v1768
        %1770 = vmatmul.bf16.gmra.mxu0 %v1630
        %v1771 = vpop.f32.mrf.mxu0
        %v1772 = vadd.f32 0.0, %v1771
        %v1773 = vpop.f32.mrf.mxu0
        %v1774 = vadd.f32 0.0, %v1773
        %1775 = vmatmul.bf16.gmra.mxu0 %v1631
        %v1776 = vpop.f32.mrf.mxu0
        %v1777 = vadd.f32 0.0, %v1776
        %v1778 = vpop.f32.mrf.mxu0
        %v1779 = vadd.f32 0.0, %v1778
        %1780 = vmatmul.bf16.gmra.mxu0 %v1632
        %v1781 = vpop.f32.mrf.mxu0
        %v1782 = vadd.f32 0.0, %v1781
        %v1783 = vpop.f32.mrf.mxu0
        %v1784 = vadd.f32 0.0, %v1783
        %1785 = vdwg.mxu0
        %v1786 = vadd.f32 %v1469, %v1707
        %v1787 = vadd.f32 %v1470, %v1709
        %v1788 = vadd.f32 %v1471, %v1712
        %v1789 = vadd.f32 %v1472, %v1714
        %v1790 = vadd.f32 %v1473, %v1717
        %v1791 = vadd.f32 %v1474, %v1719
        %v1792 = vadd.f32 %v1475, %v1722
        %v1793 = vadd.f32 %v1476, %v1724
        %v1794 = vadd.f32 %v1477, %v1727
        %v1795 = vadd.f32 %v1478, %v1729
        %v1796 = vadd.f32 %v1479, %v1732
        %v1797 = vadd.f32 %v1480, %v1734
        %v1798 = vadd.f32 %v1481, %v1737
        %v1799 = vadd.f32 %v1482, %v1739
        %v1800 = vadd.f32 %v1483, %v1742
        %v1801 = vadd.f32 %v1484, %v1744
        %v1802 = vadd.f32 %v1485, %v1747
        %v1803 = vadd.f32 %v1486, %v1749
        %v1804 = vadd.f32 %v1487, %v1752
        %v1805 = vadd.f32 %v1488, %v1754
        %v1806 = vadd.f32 %v1489, %v1757
        %v1807 = vadd.f32 %v1490, %v1759
        %v1808 = vadd.f32 %v1491, %v1762
        %v1809 = vadd.f32 %v1492, %v1764
        %v1810 = vadd.f32 %v1493, %v1767
        %v1811 = vadd.f32 %v1494, %v1769
        %v1812 = vadd.f32 %v1495, %v1772
        %v1813 = vadd.f32 %v1496, %v1774
        %v1814 = vadd.f32 %v1497, %v1777
        %v1815 = vadd.f32 %v1498, %v1779
        %v1816 = vadd.f32 %v1499, %v1782
        %v1817 = vadd.f32 %v1500, %v1784
        %v1818 = vld [vmem:[%s1504] sm:$0xf]
        %v1819 = vld [vmem:[%s1504 + $0x4] sm:$0xf]
        %v1820 = vld [vmem:[%s1504 + $0x8] sm:$0x1]
        %v1821 = vld [vmem:[%s1504 + $0xc] sm:$0xf]
        %v1822 = vld [vmem:[%s1504 + $0x10] sm:$0xf]
        %v1823 = vld [vmem:[%s1504 + $0x14] sm:$0x1]
        %v1824 = vld [vmem:[%s1504 + $0x18] sm:$0xf]
        %v1825 = vld [vmem:[%s1504 + $0x1c] sm:$0xf]
        %v1826 = vld [vmem:[%s1504 + $0x20] sm:$0x1]
        %v1827 = vld [vmem:[%s1504 + $0x24] sm:$0xf]
        %v1828 = vld [vmem:[%s1504 + $0x28] sm:$0xf]
        %v1829 = vld [vmem:[%s1504 + $0x2c] sm:$0x1]
        %v1830 = vld [vmem:[%s1504 + $0x30] sm:$0xf]
        %v1831 = vld [vmem:[%s1504 + $0x34] sm:$0xf]
        %v1832 = vld [vmem:[%s1504 + $0x38] sm:$0x1]
        %v1833 = vld [vmem:[%s1504 + $0x3c] sm:$0xf]
        %v1834 = vld [vmem:[%s1504 + $0x40] sm:$0xf]
        %v1835 = vld [vmem:[%s1504 + $0x44] sm:$0x1]
        %v1836 = vld [vmem:[%s1504 + $0x48] sm:$0xf]
        %v1837 = vld [vmem:[%s1504 + $0x4c] sm:$0xf]
        %v1838 = vld [vmem:[%s1504 + $0x50] sm:$0x1]
        %v1839 = vld [vmem:[%s1504 + $0x54] sm:$0xf]
        %v1840 = vld [vmem:[%s1504 + $0x58] sm:$0xf]
        %v1841 = vld [vmem:[%s1504 + $0x5c] sm:$0x1]
        %v1842 = vld [vmem:[%s1504 + $0x60] sm:$0xf]
        %v1843 = vld [vmem:[%s1504 + $0x64] sm:$0xf]
        %v1844 = vld [vmem:[%s1504 + $0x68] sm:$0x1]
        %v1845 = vld [vmem:[%s1504 + $0x6c] sm:$0xf]
        %v1846 = vld [vmem:[%s1504 + $0x70] sm:$0xf]
        %v1847 = vld [vmem:[%s1504 + $0x74] sm:$0x1]
        %v1848 = vld [vmem:[%s1504 + $0x78] sm:$0xf]
        %v1849 = vld [vmem:[%s1504 + $0x7c] sm:$0xf]
        %v1850 = vld [vmem:[%s1504 + $0x80] sm:$0x1]
        %v1851 = vld [vmem:[%s1504 + $0x84] sm:$0xf]
        %v1852 = vld [vmem:[%s1504 + $0x88] sm:$0xf]
        %v1853 = vld [vmem:[%s1504 + $0x8c] sm:$0x1]
        %v1854 = vld [vmem:[%s1504 + $0x90] sm:$0xf]
        %v1855 = vld [vmem:[%s1504 + $0x94] sm:$0xf]
        %v1856 = vld [vmem:[%s1504 + $0x98] sm:$0x1]
        %v1857 = vld [vmem:[%s1504 + $0x9c] sm:$0xf]
        %v1858 = vld [vmem:[%s1504 + $0xa0] sm:$0xf]
        %v1859 = vld [vmem:[%s1504 + $0xa4] sm:$0x1]
        %v1860 = vld [vmem:[%s1504 + $0xa8] sm:$0xf]
        %v1861 = vld [vmem:[%s1504 + $0xac] sm:$0xf]
        %v1862 = vld [vmem:[%s1504 + $0xb0] sm:$0x1]
        %v1863 = vld [vmem:[%s1504 + $0xb4] sm:$0xf]
        %v1864 = vld [vmem:[%s1504 + $0xb8] sm:$0xf]
        %v1865 = vld [vmem:[%s1504 + $0xbc] sm:$0x1]
        %v1867 = vshrl.u32 %v1818, 16
        %v1869 = vrot.slane %v1867, 4
        %v1870 = vshll.u32 %v1818, 16
        %v1872 = vrot.slane %v1870, 5
        %v1873 = vor.u32 %v1869, %v1872
        %v1874 = vrot.slane %v1873, 4
        %v1876 = vshll.u32 %v1819, 16
        %v1878 = vrot.slane %v1876, 5
        %v1879 = vsel %vm254, %v1874, %v1878
        %v1880 = vshrl.u32 %v1819, 16
        %v1882 = vrot.slane %v1880, 4
        %v1883 = vor.u32 %v1882, %v1878
        %v1884 = vrot.slane %v1883, 4
        %v1886 = vshll.u32 %v1820, 16
        %v1888 = vrot.slane %v1886, 5
        %v1889 = vsel %vm254, %v1884, %v1888
        %v1891 = vshrl.u32 %v1821, 16
        %v1893 = vrot.slane %v1891, 4
        %v1894 = vshll.u32 %v1821, 16
        %v1896 = vrot.slane %v1894, 5
        %v1897 = vor.u32 %v1893, %v1896
        %v1898 = vrot.slane %v1897, 4
        %v1900 = vshll.u32 %v1822, 16
        %v1902 = vrot.slane %v1900, 5
        %v1903 = vsel %vm254, %v1898, %v1902
        %v1904 = vshrl.u32 %v1822, 16
        %v1906 = vrot.slane %v1904, 4
        %v1907 = vor.u32 %v1906, %v1902
        %v1908 = vrot.slane %v1907, 4
        %v1910 = vshll.u32 %v1823, 16
        %v1912 = vrot.slane %v1910, 5
        %v1913 = vsel %vm254, %v1908, %v1912
        %v1915 = vshrl.u32 %v1824, 16
        %v1917 = vrot.slane %v1915, 4
        %v1918 = vshll.u32 %v1824, 16
        %v1920 = vrot.slane %v1918, 5
        %v1921 = vor.u32 %v1917, %v1920
        %v1922 = vrot.slane %v1921, 4
        %v1924 = vshll.u32 %v1825, 16
        %v1926 = vrot.slane %v1924, 5
        %v1927 = vsel %vm254, %v1922, %v1926
        %v1928 = vshrl.u32 %v1825, 16
        %v1930 = vrot.slane %v1928, 4
        %v1931 = vor.u32 %v1930, %v1926
        %v1932 = vrot.slane %v1931, 4
        %v1934 = vshll.u32 %v1826, 16
        %v1936 = vrot.slane %v1934, 5
        %v1937 = vsel %vm254, %v1932, %v1936
        %v1939 = vshrl.u32 %v1827, 16
        %v1941 = vrot.slane %v1939, 4
        %v1942 = vshll.u32 %v1827, 16
        %v1944 = vrot.slane %v1942, 5
        %v1945 = vor.u32 %v1941, %v1944
        %v1946 = vrot.slane %v1945, 4
        %v1948 = vshll.u32 %v1828, 16
        %v1950 = vrot.slane %v1948, 5
        %v1951 = vsel %vm254, %v1946, %v1950
        %v1952 = vshrl.u32 %v1828, 16
        %v1954 = vrot.slane %v1952, 4
        %v1955 = vor.u32 %v1954, %v1950
        %v1956 = vrot.slane %v1955, 4
        %v1958 = vshll.u32 %v1829, 16
        %v1960 = vrot.slane %v1958, 5
        %v1961 = vsel %vm254, %v1956, %v1960
        %v1963 = vshrl.u32 %v1830, 16
        %v1965 = vrot.slane %v1963, 4
        %v1966 = vshll.u32 %v1830, 16
        %v1968 = vrot.slane %v1966, 5
        %v1969 = vor.u32 %v1965, %v1968
        %v1970 = vrot.slane %v1969, 4
        %v1972 = vshll.u32 %v1831, 16
        %v1974 = vrot.slane %v1972, 5
        %v1975 = vsel %vm254, %v1970, %v1974
        %v1976 = vshrl.u32 %v1831, 16
        %v1978 = vrot.slane %v1976, 4
        %v1979 = vor.u32 %v1978, %v1974
        %v1980 = vrot.slane %v1979, 4
        %v1982 = vshll.u32 %v1832, 16
        %v1984 = vrot.slane %v1982, 5
        %v1985 = vsel %vm254, %v1980, %v1984
        %v1987 = vshrl.u32 %v1833, 16
        %v1989 = vrot.slane %v1987, 4
        %v1990 = vshll.u32 %v1833, 16
        %v1992 = vrot.slane %v1990, 5
        %v1993 = vor.u32 %v1989, %v1992
        %v1994 = vrot.slane %v1993, 4
        %v1996 = vshll.u32 %v1834, 16
        %v1998 = vrot.slane %v1996, 5
        %v1999 = vsel %vm254, %v1994, %v1998
        %v2000 = vshrl.u32 %v1834, 16
        %v2002 = vrot.slane %v2000, 4
        %v2003 = vor.u32 %v2002, %v1998
        %v2004 = vrot.slane %v2003, 4
        %v2006 = vshll.u32 %v1835, 16
        %v2008 = vrot.slane %v2006, 5
        %v2009 = vsel %vm254, %v2004, %v2008
        %v2011 = vshrl.u32 %v1836, 16
        %v2013 = vrot.slane %v2011, 4
        %v2014 = vshll.u32 %v1836, 16
        %v2016 = vrot.slane %v2014, 5
        %v2017 = vor.u32 %v2013, %v2016
        %v2018 = vrot.slane %v2017, 4
        %v2020 = vshll.u32 %v1837, 16
        %v2022 = vrot.slane %v2020, 5
        %v2023 = vsel %vm254, %v2018, %v2022
        %v2024 = vshrl.u32 %v1837, 16
        %v2026 = vrot.slane %v2024, 4
        %v2027 = vor.u32 %v2026, %v2022
        %v2028 = vrot.slane %v2027, 4
        %v2030 = vshll.u32 %v1838, 16
        %v2032 = vrot.slane %v2030, 5
        %v2033 = vsel %vm254, %v2028, %v2032
        %v2035 = vshrl.u32 %v1839, 16
        %v2037 = vrot.slane %v2035, 4
        %v2038 = vshll.u32 %v1839, 16
        %v2040 = vrot.slane %v2038, 5
        %v2041 = vor.u32 %v2037, %v2040
        %v2042 = vrot.slane %v2041, 4
        %v2044 = vshll.u32 %v1840, 16
        %v2046 = vrot.slane %v2044, 5
        %v2047 = vsel %vm254, %v2042, %v2046
        %v2048 = vshrl.u32 %v1840, 16
        %v2050 = vrot.slane %v2048, 4
        %v2051 = vor.u32 %v2050, %v2046
        %v2052 = vrot.slane %v2051, 4
        %v2054 = vshll.u32 %v1841, 16
        %v2056 = vrot.slane %v2054, 5
        %v2057 = vsel %vm254, %v2052, %v2056
        %v2059 = vshrl.u32 %v1842, 16
        %v2061 = vrot.slane %v2059, 4
        %v2062 = vshll.u32 %v1842, 16
        %v2064 = vrot.slane %v2062, 5
        %v2065 = vor.u32 %v2061, %v2064
        %v2066 = vrot.slane %v2065, 4
        %v2068 = vshll.u32 %v1843, 16
        %v2070 = vrot.slane %v2068, 5
        %v2071 = vsel %vm254, %v2066, %v2070
        %v2072 = vshrl.u32 %v1843, 16
        %v2074 = vrot.slane %v2072, 4
        %v2075 = vor.u32 %v2074, %v2070
        %v2076 = vrot.slane %v2075, 4
        %v2078 = vshll.u32 %v1844, 16
        %v2080 = vrot.slane %v2078, 5
        %v2081 = vsel %vm254, %v2076, %v2080
        %v2083 = vshrl.u32 %v1845, 16
        %v2085 = vrot.slane %v2083, 4
        %v2086 = vshll.u32 %v1845, 16
        %v2088 = vrot.slane %v2086, 5
        %v2089 = vor.u32 %v2085, %v2088
        %v2090 = vrot.slane %v2089, 4
        %v2092 = vshll.u32 %v1846, 16
        %v2094 = vrot.slane %v2092, 5
        %v2095 = vsel %vm254, %v2090, %v2094
        %v2096 = vshrl.u32 %v1846, 16
        %v2098 = vrot.slane %v2096, 4
        %v2099 = vor.u32 %v2098, %v2094
        %v2100 = vrot.slane %v2099, 4
        %v2102 = vshll.u32 %v1847, 16
        %v2104 = vrot.slane %v2102, 5
        %v2105 = vsel %vm254, %v2100, %v2104
        %v2107 = vshrl.u32 %v1848, 16
        %v2109 = vrot.slane %v2107, 4
        %v2110 = vshll.u32 %v1848, 16
        %v2112 = vrot.slane %v2110, 5
        %v2113 = vor.u32 %v2109, %v2112
        %v2114 = vrot.slane %v2113, 4
        %v2116 = vshll.u32 %v1849, 16
        %v2118 = vrot.slane %v2116, 5
        %v2119 = vsel %vm254, %v2114, %v2118
        %v2120 = vshrl.u32 %v1849, 16
        %v2122 = vrot.slane %v2120, 4
        %v2123 = vor.u32 %v2122, %v2118
        %v2124 = vrot.slane %v2123, 4
        %v2126 = vshll.u32 %v1850, 16
        %v2128 = vrot.slane %v2126, 5
        %v2129 = vsel %vm254, %v2124, %v2128
        %v2131 = vshrl.u32 %v1851, 16
        %v2133 = vrot.slane %v2131, 4
        %v2134 = vshll.u32 %v1851, 16
        %v2136 = vrot.slane %v2134, 5
        %v2137 = vor.u32 %v2133, %v2136
        %v2138 = vrot.slane %v2137, 4
        %v2140 = vshll.u32 %v1852, 16
        %v2142 = vrot.slane %v2140, 5
        %v2143 = vsel %vm254, %v2138, %v2142
        %v2144 = vshrl.u32 %v1852, 16
        %v2146 = vrot.slane %v2144, 4
        %v2147 = vor.u32 %v2146, %v2142
        %v2148 = vrot.slane %v2147, 4
        %v2150 = vshll.u32 %v1853, 16
        %v2152 = vrot.slane %v2150, 5
        %v2153 = vsel %vm254, %v2148, %v2152
        %v2155 = vshrl.u32 %v1854, 16
        %v2157 = vrot.slane %v2155, 4
        %v2158 = vshll.u32 %v1854, 16
        %v2160 = vrot.slane %v2158, 5
        %v2161 = vor.u32 %v2157, %v2160
        %v2162 = vrot.slane %v2161, 4
        %v2164 = vshll.u32 %v1855, 16
        %v2166 = vrot.slane %v2164, 5
        %v2167 = vsel %vm254, %v2162, %v2166
        %v2168 = vshrl.u32 %v1855, 16
        %v2170 = vrot.slane %v2168, 4
        %v2171 = vor.u32 %v2170, %v2166
        %v2172 = vrot.slane %v2171, 4
        %v2174 = vshll.u32 %v1856, 16
        %v2176 = vrot.slane %v2174, 5
        %v2177 = vsel %vm254, %v2172, %v2176
        %v2179 = vshrl.u32 %v1857, 16
        %v2181 = vrot.slane %v2179, 4
        %v2182 = vshll.u32 %v1857, 16
        %v2184 = vrot.slane %v2182, 5
        %v2185 = vor.u32 %v2181, %v2184
        %v2186 = vrot.slane %v2185, 4
        %v2188 = vshll.u32 %v1858, 16
        %v2190 = vrot.slane %v2188, 5
        %v2191 = vsel %vm254, %v2186, %v2190
        %v2192 = vshrl.u32 %v1858, 16
        %v2194 = vrot.slane %v2192, 4
        %v2195 = vor.u32 %v2194, %v2190
        %v2196 = vrot.slane %v2195, 4
        %v2198 = vshll.u32 %v1859, 16
        %v2200 = vrot.slane %v2198, 5
        %v2201 = vsel %vm254, %v2196, %v2200
        %v2203 = vshrl.u32 %v1860, 16
        %v2205 = vrot.slane %v2203, 4
        %v2206 = vshll.u32 %v1860, 16
        %v2208 = vrot.slane %v2206, 5
        %v2209 = vor.u32 %v2205, %v2208
        %v2210 = vrot.slane %v2209, 4
        %v2212 = vshll.u32 %v1861, 16
        %v2214 = vrot.slane %v2212, 5
        %v2215 = vsel %vm254, %v2210, %v2214
        %v2216 = vshrl.u32 %v1861, 16
        %v2218 = vrot.slane %v2216, 4
        %v2219 = vor.u32 %v2218, %v2214
        %v2220 = vrot.slane %v2219, 4
        %v2222 = vshll.u32 %v1862, 16
        %v2224 = vrot.slane %v2222, 5
        %v2225 = vsel %vm254, %v2220, %v2224
        %v2227 = vshrl.u32 %v1863, 16
        %v2229 = vrot.slane %v2227, 4
        %v2230 = vshll.u32 %v1863, 16
        %v2232 = vrot.slane %v2230, 5
        %v2233 = vor.u32 %v2229, %v2232
        %v2234 = vrot.slane %v2233, 4
        %v2236 = vshll.u32 %v1864, 16
        %v2238 = vrot.slane %v2236, 5
        %v2239 = vsel %vm254, %v2234, %v2238
        %v2240 = vshrl.u32 %v1864, 16
        %v2242 = vrot.slane %v2240, 4
        %v2243 = vor.u32 %v2242, %v2238
        %v2244 = vrot.slane %v2243, 4
        %v2246 = vshll.u32 %v1865, 16
        %v2248 = vrot.slane %v2246, 5
        %v2249 = vsel %vm254, %v2244, %v2248
        %v2250 = vld [vmem:[%s1 + $0x100] sm:$0xf]
        %v2251 = vld [vmem:[%s1 + $0x104] sm:$0xf]
        %v2252 = vld [vmem:[%s1 + $0x108] sm:$0xf]
        %v2253 = vld [vmem:[%s1 + $0x10c] sm:$0xf]
        %v2254 = vld [vmem:[%s1 + $0x110] sm:$0xf]
        %v2255 = vld [vmem:[%s1 + $0x114] sm:$0xf]
        %v2256 = vld [vmem:[%s1 + $0x118] sm:$0xf]
        %v2257 = vld [vmem:[%s1 + $0x11c] sm:$0xf]
        %v2258 = vld [vmem:[%s1 + $0x120] sm:$0xf]
        %v2259 = vld [vmem:[%s1 + $0x124] sm:$0xf]
        %v2260 = vld [vmem:[%s1 + $0x128] sm:$0xf]
        %v2261 = vld [vmem:[%s1 + $0x12c] sm:$0xf]
        %v2262 = vld [vmem:[%s1 + $0x130] sm:$0xf]
        %v2263 = vld [vmem:[%s1 + $0x134] sm:$0xf]
        %v2264 = vld [vmem:[%s1 + $0x138] sm:$0xf]
        %v2265 = vld [vmem:[%s1 + $0x13c] sm:$0xf]
        %v2266 = vunpack.c.l.b16 %v1879
        %v2267 = vunpack.c.l.b16 %v1889
        %v2268 = vunpack.c.l.b16 %v1903
        %v2269 = vunpack.c.l.b16 %v1913
        %v2270 = vunpack.c.l.b16 %v1927
        %v2271 = vunpack.c.l.b16 %v1937
        %v2272 = vunpack.c.l.b16 %v1951
        %v2273 = vunpack.c.l.b16 %v1961
        %v2274 = vunpack.c.l.b16 %v1975
        %v2275 = vunpack.c.l.b16 %v1985
        %v2276 = vunpack.c.l.b16 %v1999
        %v2277 = vunpack.c.l.b16 %v2009
        %v2278 = vunpack.c.l.b16 %v2023
        %v2279 = vunpack.c.l.b16 %v2033
        %v2280 = vunpack.c.l.b16 %v2047
        %v2281 = vunpack.c.l.b16 %v2057
        %v2282 = vunpack.c.l.b16 %v2071
        %v2283 = vunpack.c.l.b16 %v2081
        %v2284 = vunpack.c.l.b16 %v2095
        %v2285 = vunpack.c.l.b16 %v2105
        %v2286 = vunpack.c.l.b16 %v2119
        %v2287 = vunpack.c.l.b16 %v2129
        %v2288 = vunpack.c.l.b16 %v2143
        %v2289 = vunpack.c.l.b16 %v2153
        %v2290 = vunpack.c.l.b16 %v2167
        %v2291 = vunpack.c.l.b16 %v2177
        %v2292 = vunpack.c.l.b16 %v2191
        %v2293 = vunpack.c.l.b16 %v2201
        %v2294 = vunpack.c.l.b16 %v2215
        %v2295 = vunpack.c.l.b16 %v2225
        %v2296 = vunpack.c.l.b16 %v2239
        %v2297 = vunpack.c.l.b16 %v2249
        %v2298 = vpack.c.b16 %v2267, %v2266
        %v2299 = vpack.c.b16 %v2269, %v2268
        %v2300 = vpack.c.b16 %v2271, %v2270
        %v2301 = vpack.c.b16 %v2273, %v2272
        %v2302 = vpack.c.b16 %v2275, %v2274
        %v2303 = vpack.c.b16 %v2277, %v2276
        %v2304 = vpack.c.b16 %v2279, %v2278
        %v2305 = vpack.c.b16 %v2281, %v2280
        %v2306 = vpack.c.b16 %v2283, %v2282
        %v2307 = vpack.c.b16 %v2285, %v2284
        %v2308 = vpack.c.b16 %v2287, %v2286
        %v2309 = vpack.c.b16 %v2289, %v2288
        %v2310 = vpack.c.b16 %v2291, %v2290
        %v2311 = vpack.c.b16 %v2293, %v2292
        %v2312 = vpack.c.b16 %v2295, %v2294
        %v2313 = vpack.c.b16 %v2297, %v2296
        %v2346 = vunpack.c.l.b16 %v2250
        %v2347 = vunpack.c.l.b16 %v2251
        %v2348 = vunpack.c.l.b16 %v2252
        %v2349 = vunpack.c.l.b16 %v2253
        %v2350 = vunpack.c.l.b16 %v2254
        %v2351 = vunpack.c.l.b16 %v2255
        %v2352 = vunpack.c.l.b16 %v2256
        %v2353 = vunpack.c.l.b16 %v2257
        %v2354 = vunpack.c.l.b16 %v2258
        %v2355 = vunpack.c.l.b16 %v2259
        %v2356 = vunpack.c.l.b16 %v2260
        %v2357 = vunpack.c.l.b16 %v2261
        %v2358 = vunpack.c.l.b16 %v2262
        %v2359 = vunpack.c.l.b16 %v2263
        %v2360 = vunpack.c.l.b16 %v2264
        %v2361 = vunpack.c.l.b16 %v2265
        %v2362 = vpack.c.b16 %v2347, %v2346
        %v2363 = vpack.c.b16 %v2349, %v2348
        %v2364 = vpack.c.b16 %v2351, %v2350
        %v2365 = vpack.c.b16 %v2353, %v2352
        %v2366 = vpack.c.b16 %v2355, %v2354
        %v2367 = vpack.c.b16 %v2357, %v2356
        %v2368 = vpack.c.b16 %v2359, %v2358
        %v2369 = vpack.c.b16 %v2361, %v2360
        %2378 = vmatpush.bf16.msra.mxu0 %v2369
        %2379 = vmatpush.bf16.msra.mxu0 %v2368
        %2380 = vmatpush.bf16.msra.mxu0 %v2367
        %2381 = vmatpush.bf16.msra.mxu0 %v2366
        %2382 = vmatpush.bf16.msra.mxu0 %v2365
        %2383 = vmatpush.bf16.msra.mxu0 %v2364
        %2384 = vmatpush.bf16.msra.mxu0 %v2363
        %2385 = vmatpush.bf16.msra.mxu0 %v2362
        %2386 = vmatmul.bf16.gmra.mxu0 %v2298
        %v2387 = vpop.f32.mrf.mxu0
        %v2388 = vadd.f32 0.0, %v2387
        %v2389 = vpop.f32.mrf.mxu0
        %v2390 = vadd.f32 0.0, %v2389
        %2391 = vmatmul.bf16.gmra.mxu0 %v2299
        %v2392 = vpop.f32.mrf.mxu0
        %v2393 = vadd.f32 0.0, %v2392
        %v2394 = vpop.f32.mrf.mxu0
        %v2395 = vadd.f32 0.0, %v2394
        %2396 = vmatmul.bf16.gmra.mxu0 %v2300
        %v2397 = vpop.f32.mrf.mxu0
        %v2398 = vadd.f32 0.0, %v2397
        %v2399 = vpop.f32.mrf.mxu0
        %v2400 = vadd.f32 0.0, %v2399
        %2401 = vmatmul.bf16.gmra.mxu0 %v2301
        %v2402 = vpop.f32.mrf.mxu0
        %v2403 = vadd.f32 0.0, %v2402
        %v2404 = vpop.f32.mrf.mxu0
        %v2405 = vadd.f32 0.0, %v2404
        %2406 = vmatmul.bf16.gmra.mxu0 %v2302
        %v2407 = vpop.f32.mrf.mxu0
        %v2408 = vadd.f32 0.0, %v2407
        %v2409 = vpop.f32.mrf.mxu0
        %v2410 = vadd.f32 0.0, %v2409
        %2411 = vmatmul.bf16.gmra.mxu0 %v2303
        %v2412 = vpop.f32.mrf.mxu0
        %v2413 = vadd.f32 0.0, %v2412
        %v2414 = vpop.f32.mrf.mxu0
        %v2415 = vadd.f32 0.0, %v2414
        %2416 = vmatmul.bf16.gmra.mxu0 %v2304
        %v2417 = vpop.f32.mrf.mxu0
        %v2418 = vadd.f32 0.0, %v2417
        %v2419 = vpop.f32.mrf.mxu0
        %v2420 = vadd.f32 0.0, %v2419
        %2421 = vmatmul.bf16.gmra.mxu0 %v2305
        %v2422 = vpop.f32.mrf.mxu0
        %v2423 = vadd.f32 0.0, %v2422
        %v2424 = vpop.f32.mrf.mxu0
        %v2425 = vadd.f32 0.0, %v2424
        %2426 = vmatmul.bf16.gmra.mxu0 %v2306
        %v2427 = vpop.f32.mrf.mxu0
        %v2428 = vadd.f32 0.0, %v2427
        %v2429 = vpop.f32.mrf.mxu0
        %v2430 = vadd.f32 0.0, %v2429
        %2431 = vmatmul.bf16.gmra.mxu0 %v2307
        %v2432 = vpop.f32.mrf.mxu0
        %v2433 = vadd.f32 0.0, %v2432
        %v2434 = vpop.f32.mrf.mxu0
        %v2435 = vadd.f32 0.0, %v2434
        %2436 = vmatmul.bf16.gmra.mxu0 %v2308
        %v2437 = vpop.f32.mrf.mxu0
        %v2438 = vadd.f32 0.0, %v2437
        %v2439 = vpop.f32.mrf.mxu0
        %v2440 = vadd.f32 0.0, %v2439
        %2441 = vmatmul.bf16.gmra.mxu0 %v2309
        %v2442 = vpop.f32.mrf.mxu0
        %v2443 = vadd.f32 0.0, %v2442
        %v2444 = vpop.f32.mrf.mxu0
        %v2445 = vadd.f32 0.0, %v2444
        %2446 = vmatmul.bf16.gmra.mxu0 %v2310
        %v2447 = vpop.f32.mrf.mxu0
        %v2448 = vadd.f32 0.0, %v2447
        %v2449 = vpop.f32.mrf.mxu0
        %v2450 = vadd.f32 0.0, %v2449
        %2451 = vmatmul.bf16.gmra.mxu0 %v2311
        %v2452 = vpop.f32.mrf.mxu0
        %v2453 = vadd.f32 0.0, %v2452
        %v2454 = vpop.f32.mrf.mxu0
        %v2455 = vadd.f32 0.0, %v2454
        %2456 = vmatmul.bf16.gmra.mxu0 %v2312
        %v2457 = vpop.f32.mrf.mxu0
        %v2458 = vadd.f32 0.0, %v2457
        %v2459 = vpop.f32.mrf.mxu0
        %v2460 = vadd.f32 0.0, %v2459
        %2461 = vmatmul.bf16.gmra.mxu0 %v2313
        %v2462 = vpop.f32.mrf.mxu0
        %v2463 = vadd.f32 0.0, %v2462
        %v2464 = vpop.f32.mrf.mxu0
        %v2465 = vadd.f32 0.0, %v2464
        %2466 = vdwg.mxu0
        %v2467 = vadd.f32 %v1786, %v2388
        %v2468 = vadd.f32 %v1787, %v2390
        %v2469 = vadd.f32 %v1788, %v2393
        %v2470 = vadd.f32 %v1789, %v2395
        %v2471 = vadd.f32 %v1790, %v2398
        %v2472 = vadd.f32 %v1791, %v2400
        %v2473 = vadd.f32 %v1792, %v2403
        %v2474 = vadd.f32 %v1793, %v2405
        %v2475 = vadd.f32 %v1794, %v2408
        %v2476 = vadd.f32 %v1795, %v2410
        %v2477 = vadd.f32 %v1796, %v2413
        %v2478 = vadd.f32 %v1797, %v2415
        %v2479 = vadd.f32 %v1798, %v2418
        %v2480 = vadd.f32 %v1799, %v2420
        %v2481 = vadd.f32 %v1800, %v2423
        %v2482 = vadd.f32 %v1801, %v2425
        %v2483 = vadd.f32 %v1802, %v2428
        %v2484 = vadd.f32 %v1803, %v2430
        %v2485 = vadd.f32 %v1804, %v2433
        %v2486 = vadd.f32 %v1805, %v2435
        %v2487 = vadd.f32 %v1806, %v2438
        %v2488 = vadd.f32 %v1807, %v2440
        %v2489 = vadd.f32 %v1808, %v2443
        %v2490 = vadd.f32 %v1809, %v2445
        %v2491 = vadd.f32 %v1810, %v2448
        %v2492 = vadd.f32 %v1811, %v2450
        %v2493 = vadd.f32 %v1812, %v2453
        %v2494 = vadd.f32 %v1813, %v2455
        %v2495 = vadd.f32 %v1814, %v2458
        %v2496 = vadd.f32 %v1815, %v2460
        %v2497 = vadd.f32 %v1816, %v2463
        %v2498 = vadd.f32 %v1817, %v2465
        %v2499 = vld [vmem:[%s1504] sm:$0xe]
        %v2500 = vld [vmem:[%s1504 + $0xc] sm:$0xe]
        %v2501 = vld [vmem:[%s1504 + $0x18] sm:$0xe]
        %v2502 = vld [vmem:[%s1504 + $0x24] sm:$0xe]
        %v2503 = vld [vmem:[%s1504 + $0x30] sm:$0xe]
        %v2504 = vld [vmem:[%s1504 + $0x3c] sm:$0xe]
        %v2505 = vld [vmem:[%s1504 + $0x48] sm:$0xe]
        %v2506 = vld [vmem:[%s1504 + $0x54] sm:$0xe]
        %v2507 = vld [vmem:[%s1504 + $0x60] sm:$0xe]
        %v2508 = vld [vmem:[%s1504 + $0x6c] sm:$0xe]
        %v2509 = vld [vmem:[%s1504 + $0x78] sm:$0xe]
        %v2510 = vld [vmem:[%s1504 + $0x84] sm:$0xe]
        %v2511 = vld [vmem:[%s1504 + $0x90] sm:$0xe]
        %v2512 = vld [vmem:[%s1504 + $0x9c] sm:$0xe]
        %v2513 = vld [vmem:[%s1504 + $0xa8] sm:$0xe]
        %v2514 = vld [vmem:[%s1504 + $0xb4] sm:$0xe]
        %v2563 = vrot.slane %v2499, 5
        %v2564 = vrot.slane %v2563, 4
        %v2565 = vrot.slane %v1819, 5
        %v2566 = vsel %vm1139, %v2564, %v2565
        %v2567 = vrot.slane %v2565, 4
        %v2568 = vrot.slane %v1820, 5
        %v2569 = vsel %vm1139, %v2567, %v2568
        %v2570 = vrot.slane %v2500, 5
        %v2571 = vrot.slane %v2570, 4
        %v2572 = vrot.slane %v1822, 5
        %v2573 = vsel %vm1139, %v2571, %v2572
        %v2574 = vrot.slane %v2572, 4
        %v2575 = vrot.slane %v1823, 5
        %v2576 = vsel %vm1139, %v2574, %v2575
        %v2577 = vrot.slane %v2501, 5
        %v2578 = vrot.slane %v2577, 4
        %v2579 = vrot.slane %v1825, 5
        %v2580 = vsel %vm1139, %v2578, %v2579
        %v2581 = vrot.slane %v2579, 4
        %v2582 = vrot.slane %v1826, 5
        %v2583 = vsel %vm1139, %v2581, %v2582
        %v2584 = vrot.slane %v2502, 5
        %v2585 = vrot.slane %v2584, 4
        %v2586 = vrot.slane %v1828, 5
        %v2587 = vsel %vm1139, %v2585, %v2586
        %v2588 = vrot.slane %v2586, 4
        %v2589 = vrot.slane %v1829, 5
        %v2590 = vsel %vm1139, %v2588, %v2589
        %v2591 = vrot.slane %v2503, 5
        %v2592 = vrot.slane %v2591, 4
        %v2593 = vrot.slane %v1831, 5
        %v2594 = vsel %vm1139, %v2592, %v2593
        %v2595 = vrot.slane %v2593, 4
        %v2596 = vrot.slane %v1832, 5
        %v2597 = vsel %vm1139, %v2595, %v2596
        %v2598 = vrot.slane %v2504, 5
        %v2599 = vrot.slane %v2598, 4
        %v2600 = vrot.slane %v1834, 5
        %v2601 = vsel %vm1139, %v2599, %v2600
        %v2602 = vrot.slane %v2600, 4
        %v2603 = vrot.slane %v1835, 5
        %v2604 = vsel %vm1139, %v2602, %v2603
        %v2605 = vrot.slane %v2505, 5
        %v2606 = vrot.slane %v2605, 4
        %v2607 = vrot.slane %v1837, 5
        %v2608 = vsel %vm1139, %v2606, %v2607
        %v2609 = vrot.slane %v2607, 4
        %v2610 = vrot.slane %v1838, 5
        %v2611 = vsel %vm1139, %v2609, %v2610
        %v2612 = vrot.slane %v2506, 5
        %v2613 = vrot.slane %v2612, 4
        %v2614 = vrot.slane %v1840, 5
        %v2615 = vsel %vm1139, %v2613, %v2614
        %v2616 = vrot.slane %v2614, 4
        %v2617 = vrot.slane %v1841, 5
        %v2618 = vsel %vm1139, %v2616, %v2617
        %v2619 = vrot.slane %v2507, 5
        %v2620 = vrot.slane %v2619, 4
        %v2621 = vrot.slane %v1843, 5
        %v2622 = vsel %vm1139, %v2620, %v2621
        %v2623 = vrot.slane %v2621, 4
        %v2624 = vrot.slane %v1844, 5
        %v2625 = vsel %vm1139, %v2623, %v2624
        %v2626 = vrot.slane %v2508, 5
        %v2627 = vrot.slane %v2626, 4
        %v2628 = vrot.slane %v1846, 5
        %v2629 = vsel %vm1139, %v2627, %v2628
        %v2630 = vrot.slane %v2628, 4
        %v2631 = vrot.slane %v1847, 5
        %v2632 = vsel %vm1139, %v2630, %v2631
        %v2633 = vrot.slane %v2509, 5
        %v2634 = vrot.slane %v2633, 4
        %v2635 = vrot.slane %v1849, 5
        %v2636 = vsel %vm1139, %v2634, %v2635
        %v2637 = vrot.slane %v2635, 4
        %v2638 = vrot.slane %v1850, 5
        %v2639 = vsel %vm1139, %v2637, %v2638
        %v2640 = vrot.slane %v2510, 5
        %v2641 = vrot.slane %v2640, 4
        %v2642 = vrot.slane %v1852, 5
        %v2643 = vsel %vm1139, %v2641, %v2642
        %v2644 = vrot.slane %v2642, 4
        %v2645 = vrot.slane %v1853, 5
        %v2646 = vsel %vm1139, %v2644, %v2645
        %v2647 = vrot.slane %v2511, 5
        %v2648 = vrot.slane %v2647, 4
        %v2649 = vrot.slane %v1855, 5
        %v2650 = vsel %vm1139, %v2648, %v2649
        %v2651 = vrot.slane %v2649, 4
        %v2652 = vrot.slane %v1856, 5
        %v2653 = vsel %vm1139, %v2651, %v2652
        %v2654 = vrot.slane %v2512, 5
        %v2655 = vrot.slane %v2654, 4
        %v2656 = vrot.slane %v1858, 5
        %v2657 = vsel %vm1139, %v2655, %v2656
        %v2658 = vrot.slane %v2656, 4
        %v2659 = vrot.slane %v1859, 5
        %v2660 = vsel %vm1139, %v2658, %v2659
        %v2661 = vrot.slane %v2513, 5
        %v2662 = vrot.slane %v2661, 4
        %v2663 = vrot.slane %v1861, 5
        %v2664 = vsel %vm1139, %v2662, %v2663
        %v2665 = vrot.slane %v2663, 4
        %v2666 = vrot.slane %v1862, 5
        %v2667 = vsel %vm1139, %v2665, %v2666
        %v2668 = vrot.slane %v2514, 5
        %v2669 = vrot.slane %v2668, 4
        %v2670 = vrot.slane %v1864, 5
        %v2671 = vsel %vm1139, %v2669, %v2670
        %v2672 = vrot.slane %v2670, 4
        %v2673 = vrot.slane %v1865, 5
        %v2674 = vsel %vm1139, %v2672, %v2673
        %v2675 = vld [vmem:[%s1 + $0x140] sm:$0xf]
        %v2676 = vld [vmem:[%s1 + $0x144] sm:$0xf]
        %v2677 = vld [vmem:[%s1 + $0x148] sm:$0xf]
        %v2678 = vld [vmem:[%s1 + $0x14c] sm:$0xf]
        %v2679 = vld [vmem:[%s1 + $0x150] sm:$0xf]
        %v2680 = vld [vmem:[%s1 + $0x154] sm:$0xf]
        %v2681 = vld [vmem:[%s1 + $0x158] sm:$0xf]
        %v2682 = vld [vmem:[%s1 + $0x15c] sm:$0xf]
        %v2683 = vld [vmem:[%s1 + $0x160] sm:$0xf]
        %v2684 = vld [vmem:[%s1 + $0x164] sm:$0xf]
        %v2685 = vld [vmem:[%s1 + $0x168] sm:$0xf]
        %v2686 = vld [vmem:[%s1 + $0x16c] sm:$0xf]
        %v2687 = vld [vmem:[%s1 + $0x170] sm:$0xf]
        %v2688 = vld [vmem:[%s1 + $0x174] sm:$0xf]
        %v2689 = vld [vmem:[%s1 + $0x178] sm:$0xf]
        %v2690 = vld [vmem:[%s1 + $0x17c] sm:$0xf]
        %v2691 = vunpack.c.l.b16 %v2566
        %v2692 = vunpack.c.l.b16 %v2569
        %v2693 = vunpack.c.l.b16 %v2573
        %v2694 = vunpack.c.l.b16 %v2576
        %v2695 = vunpack.c.l.b16 %v2580
        %v2696 = vunpack.c.l.b16 %v2583
        %v2697 = vunpack.c.l.b16 %v2587
        %v2698 = vunpack.c.l.b16 %v2590
        %v2699 = vunpack.c.l.b16 %v2594
        %v2700 = vunpack.c.l.b16 %v2597
        %v2701 = vunpack.c.l.b16 %v2601
        %v2702 = vunpack.c.l.b16 %v2604
        %v2703 = vunpack.c.l.b16 %v2608
        %v2704 = vunpack.c.l.b16 %v2611
        %v2705 = vunpack.c.l.b16 %v2615
        %v2706 = vunpack.c.l.b16 %v2618
        %v2707 = vunpack.c.l.b16 %v2622
        %v2708 = vunpack.c.l.b16 %v2625
        %v2709 = vunpack.c.l.b16 %v2629
        %v2710 = vunpack.c.l.b16 %v2632
        %v2711 = vunpack.c.l.b16 %v2636
        %v2712 = vunpack.c.l.b16 %v2639
        %v2713 = vunpack.c.l.b16 %v2643
        %v2714 = vunpack.c.l.b16 %v2646
        %v2715 = vunpack.c.l.b16 %v2650
        %v2716 = vunpack.c.l.b16 %v2653
        %v2717 = vunpack.c.l.b16 %v2657
        %v2718 = vunpack.c.l.b16 %v2660
        %v2719 = vunpack.c.l.b16 %v2664
        %v2720 = vunpack.c.l.b16 %v2667
        %v2721 = vunpack.c.l.b16 %v2671
        %v2722 = vunpack.c.l.b16 %v2674
        %v2723 = vpack.c.b16 %v2692, %v2691
        %v2724 = vpack.c.b16 %v2694, %v2693
        %v2725 = vpack.c.b16 %v2696, %v2695
        %v2726 = vpack.c.b16 %v2698, %v2697
        %v2727 = vpack.c.b16 %v2700, %v2699
        %v2728 = vpack.c.b16 %v2702, %v2701
        %v2729 = vpack.c.b16 %v2704, %v2703
        %v2730 = vpack.c.b16 %v2706, %v2705
        %v2731 = vpack.c.b16 %v2708, %v2707
        %v2732 = vpack.c.b16 %v2710, %v2709
        %v2733 = vpack.c.b16 %v2712, %v2711
        %v2734 = vpack.c.b16 %v2714, %v2713
        %v2735 = vpack.c.b16 %v2716, %v2715
        %v2736 = vpack.c.b16 %v2718, %v2717
        %v2737 = vpack.c.b16 %v2720, %v2719
        %v2738 = vpack.c.b16 %v2722, %v2721
        %v2771 = vunpack.c.l.b16 %v2675
        %v2772 = vunpack.c.l.b16 %v2676
        %v2773 = vunpack.c.l.b16 %v2677
        %v2774 = vunpack.c.l.b16 %v2678
        %v2775 = vunpack.c.l.b16 %v2679
        %v2776 = vunpack.c.l.b16 %v2680
        %v2777 = vunpack.c.l.b16 %v2681
        %v2778 = vunpack.c.l.b16 %v2682
        %v2779 = vunpack.c.l.b16 %v2683
        %v2780 = vunpack.c.l.b16 %v2684
        %v2781 = vunpack.c.l.b16 %v2685
        %v2782 = vunpack.c.l.b16 %v2686
        %v2783 = vunpack.c.l.b16 %v2687
        %v2784 = vunpack.c.l.b16 %v2688
        %v2785 = vunpack.c.l.b16 %v2689
        %v2786 = vunpack.c.l.b16 %v2690
        %v2787 = vpack.c.b16 %v2772, %v2771
        %v2788 = vpack.c.b16 %v2774, %v2773
        %v2789 = vpack.c.b16 %v2776, %v2775
        %v2790 = vpack.c.b16 %v2778, %v2777
        %v2791 = vpack.c.b16 %v2780, %v2779
        %v2792 = vpack.c.b16 %v2782, %v2781
        %v2793 = vpack.c.b16 %v2784, %v2783
        %v2794 = vpack.c.b16 %v2786, %v2785
        %2803 = vmatpush.bf16.msra.mxu0 %v2794
        %2804 = vmatpush.bf16.msra.mxu0 %v2793
        %2805 = vmatpush.bf16.msra.mxu0 %v2792
        %2806 = vmatpush.bf16.msra.mxu0 %v2791
        %2807 = vmatpush.bf16.msra.mxu0 %v2790
        %2808 = vmatpush.bf16.msra.mxu0 %v2789
        %2809 = vmatpush.bf16.msra.mxu0 %v2788
        %2810 = vmatpush.bf16.msra.mxu0 %v2787
        %2811 = vmatmul.bf16.gmra.mxu0 %v2723
        %v2812 = vpop.f32.mrf.mxu0
        %v2813 = vadd.f32 0.0, %v2812
        %v2814 = vpop.f32.mrf.mxu0
        %v2815 = vadd.f32 0.0, %v2814
        %2816 = vmatmul.bf16.gmra.mxu0 %v2724
        %v2817 = vpop.f32.mrf.mxu0
        %v2818 = vadd.f32 0.0, %v2817
        %v2819 = vpop.f32.mrf.mxu0
        %v2820 = vadd.f32 0.0, %v2819
        %2821 = vmatmul.bf16.gmra.mxu0 %v2725
        %v2822 = vpop.f32.mrf.mxu0
        %v2823 = vadd.f32 0.0, %v2822
        %v2824 = vpop.f32.mrf.mxu0
        %v2825 = vadd.f32 0.0, %v2824
        %2826 = vmatmul.bf16.gmra.mxu0 %v2726
        %v2827 = vpop.f32.mrf.mxu0
        %v2828 = vadd.f32 0.0, %v2827
        %v2829 = vpop.f32.mrf.mxu0
        %v2830 = vadd.f32 0.0, %v2829
        %2831 = vmatmul.bf16.gmra.mxu0 %v2727
        %v2832 = vpop.f32.mrf.mxu0
        %v2833 = vadd.f32 0.0, %v2832
        %v2834 = vpop.f32.mrf.mxu0
        %v2835 = vadd.f32 0.0, %v2834
        %2836 = vmatmul.bf16.gmra.mxu0 %v2728
        %v2837 = vpop.f32.mrf.mxu0
        %v2838 = vadd.f32 0.0, %v2837
        %v2839 = vpop.f32.mrf.mxu0
        %v2840 = vadd.f32 0.0, %v2839
        %2841 = vmatmul.bf16.gmra.mxu0 %v2729
        %v2842 = vpop.f32.mrf.mxu0
        %v2843 = vadd.f32 0.0, %v2842
        %v2844 = vpop.f32.mrf.mxu0
        %v2845 = vadd.f32 0.0, %v2844
        %2846 = vmatmul.bf16.gmra.mxu0 %v2730
        %v2847 = vpop.f32.mrf.mxu0
        %v2848 = vadd.f32 0.0, %v2847
        %v2849 = vpop.f32.mrf.mxu0
        %v2850 = vadd.f32 0.0, %v2849
        %2851 = vmatmul.bf16.gmra.mxu0 %v2731
        %v2852 = vpop.f32.mrf.mxu0
        %v2853 = vadd.f32 0.0, %v2852
        %v2854 = vpop.f32.mrf.mxu0
        %v2855 = vadd.f32 0.0, %v2854
        %2856 = vmatmul.bf16.gmra.mxu0 %v2732
        %v2857 = vpop.f32.mrf.mxu0
        %v2858 = vadd.f32 0.0, %v2857
        %v2859 = vpop.f32.mrf.mxu0
        %v2860 = vadd.f32 0.0, %v2859
        %2861 = vmatmul.bf16.gmra.mxu0 %v2733
        %v2862 = vpop.f32.mrf.mxu0
        %v2863 = vadd.f32 0.0, %v2862
        %v2864 = vpop.f32.mrf.mxu0
        %v2865 = vadd.f32 0.0, %v2864
        %2866 = vmatmul.bf16.gmra.mxu0 %v2734
        %v2867 = vpop.f32.mrf.mxu0
        %v2868 = vadd.f32 0.0, %v2867
        %v2869 = vpop.f32.mrf.mxu0
        %v2870 = vadd.f32 0.0, %v2869
        %2871 = vmatmul.bf16.gmra.mxu0 %v2735
        %v2872 = vpop.f32.mrf.mxu0
        %v2873 = vadd.f32 0.0, %v2872
        %v2874 = vpop.f32.mrf.mxu0
        %v2875 = vadd.f32 0.0, %v2874
        %2876 = vmatmul.bf16.gmra.mxu0 %v2736
        %v2877 = vpop.f32.mrf.mxu0
        %v2878 = vadd.f32 0.0, %v2877
        %v2879 = vpop.f32.mrf.mxu0
        %v2880 = vadd.f32 0.0, %v2879
        %2881 = vmatmul.bf16.gmra.mxu0 %v2737
        %v2882 = vpop.f32.mrf.mxu0
        %v2883 = vadd.f32 0.0, %v2882
        %v2884 = vpop.f32.mrf.mxu0
        %v2885 = vadd.f32 0.0, %v2884
        %2886 = vmatmul.bf16.gmra.mxu0 %v2738
        %v2887 = vpop.f32.mrf.mxu0
        %v2888 = vadd.f32 0.0, %v2887
        %v2889 = vpop.f32.mrf.mxu0
        %v2890 = vadd.f32 0.0, %v2889
        %2891 = vdwg.mxu0
        %v2892 = vadd.f32 %v2467, %v2813
        %v2893 = vadd.f32 %v2468, %v2815
        %v2894 = vadd.f32 %v2469, %v2818
        %v2895 = vadd.f32 %v2470, %v2820
        %v2896 = vadd.f32 %v2471, %v2823
        %v2897 = vadd.f32 %v2472, %v2825
        %v2898 = vadd.f32 %v2473, %v2828
        %v2899 = vadd.f32 %v2474, %v2830
        %v2900 = vadd.f32 %v2475, %v2833
        %v2901 = vadd.f32 %v2476, %v2835
        %v2902 = vadd.f32 %v2477, %v2838
        %v2903 = vadd.f32 %v2478, %v2840
        %v2904 = vadd.f32 %v2479, %v2843
        %v2905 = vadd.f32 %v2480, %v2845
        %v2906 = vadd.f32 %v2481, %v2848
        %v2907 = vadd.f32 %v2482, %v2850
        %v2908 = vadd.f32 %v2483, %v2853
        %v2909 = vadd.f32 %v2484, %v2855
        %v2910 = vadd.f32 %v2485, %v2858
        %v2911 = vadd.f32 %v2486, %v2860
        %v2912 = vadd.f32 %v2487, %v2863
        %v2913 = vadd.f32 %v2488, %v2865
        %v2914 = vadd.f32 %v2489, %v2868
        %v2915 = vadd.f32 %v2490, %v2870
        %v2916 = vadd.f32 %v2491, %v2873
        %v2917 = vadd.f32 %v2492, %v2875
        %v2918 = vadd.f32 %v2493, %v2878
        %v2919 = vadd.f32 %v2494, %v2880
        %v2920 = vadd.f32 %v2495, %v2883
        %v2921 = vadd.f32 %v2496, %v2885
        %v2922 = vadd.f32 %v2497, %v2888
        %v2923 = vadd.f32 %v2498, %v2890
        %s2924 = sadd.s32 %s184, 2
        %s2925 = smul.u32 %s2924, 3
        %s2926 = smul.addr %s2925, 4
        %s2927 = scalar_lea.vmem %s182, %s2926
        %v2928 = vld [vmem:[%s2927] sm:$0xf]
        %v2929 = vld [vmem:[%s2927 + $0x4] sm:$0xf]
        %v2930 = vld [vmem:[%s2927 + $0xc] sm:$0xf]
        %v2931 = vld [vmem:[%s2927 + $0x10] sm:$0xf]
        %v2932 = vld [vmem:[%s2927 + $0x18] sm:$0xf]
        %v2933 = vld [vmem:[%s2927 + $0x1c] sm:$0xf]
        %v2934 = vld [vmem:[%s2927 + $0x24] sm:$0xf]
        %v2935 = vld [vmem:[%s2927 + $0x28] sm:$0xf]
        %v2936 = vld [vmem:[%s2927 + $0x30] sm:$0xf]
        %v2937 = vld [vmem:[%s2927 + $0x34] sm:$0xf]
        %v2938 = vld [vmem:[%s2927 + $0x3c] sm:$0xf]
        %v2939 = vld [vmem:[%s2927 + $0x40] sm:$0xf]
        %v2940 = vld [vmem:[%s2927 + $0x48] sm:$0xf]
        %v2941 = vld [vmem:[%s2927 + $0x4c] sm:$0xf]
        %v2942 = vld [vmem:[%s2927 + $0x54] sm:$0xf]
        %v2943 = vld [vmem:[%s2927 + $0x58] sm:$0xf]
        %v2944 = vld [vmem:[%s2927 + $0x60] sm:$0xf]
        %v2945 = vld [vmem:[%s2927 + $0x64] sm:$0xf]
        %v2946 = vld [vmem:[%s2927 + $0x6c] sm:$0xf]
        %v2947 = vld [vmem:[%s2927 + $0x70] sm:$0xf]
        %v2948 = vld [vmem:[%s2927 + $0x78] sm:$0xf]
        %v2949 = vld [vmem:[%s2927 + $0x7c] sm:$0xf]
        %v2950 = vld [vmem:[%s2927 + $0x84] sm:$0xf]
        %v2951 = vld [vmem:[%s2927 + $0x88] sm:$0xf]
        %v2952 = vld [vmem:[%s2927 + $0x90] sm:$0xf]
        %v2953 = vld [vmem:[%s2927 + $0x94] sm:$0xf]
        %v2954 = vld [vmem:[%s2927 + $0x9c] sm:$0xf]
        %v2955 = vld [vmem:[%s2927 + $0xa0] sm:$0xf]
        %v2956 = vld [vmem:[%s2927 + $0xa8] sm:$0xf]
        %v2957 = vld [vmem:[%s2927 + $0xac] sm:$0xf]
        %v2958 = vld [vmem:[%s2927 + $0xb4] sm:$0xf]
        %v2959 = vld [vmem:[%s2927 + $0xb8] sm:$0xf]
        %v2960 = vld [vmem:[%s1 + $0x180] sm:$0xf]
        %v2961 = vld [vmem:[%s1 + $0x184] sm:$0xf]
        %v2962 = vld [vmem:[%s1 + $0x188] sm:$0xf]
        %v2963 = vld [vmem:[%s1 + $0x18c] sm:$0xf]
        %v2964 = vld [vmem:[%s1 + $0x190] sm:$0xf]
        %v2965 = vld [vmem:[%s1 + $0x194] sm:$0xf]
        %v2966 = vld [vmem:[%s1 + $0x198] sm:$0xf]
        %v2967 = vld [vmem:[%s1 + $0x19c] sm:$0xf]
        %v2968 = vld [vmem:[%s1 + $0x1a0] sm:$0xf]
        %v2969 = vld [vmem:[%s1 + $0x1a4] sm:$0xf]
        %v2970 = vld [vmem:[%s1 + $0x1a8] sm:$0xf]
        %v2971 = vld [vmem:[%s1 + $0x1ac] sm:$0xf]
        %v2972 = vld [vmem:[%s1 + $0x1b0] sm:$0xf]
        %v2973 = vld [vmem:[%s1 + $0x1b4] sm:$0xf]
        %v2974 = vld [vmem:[%s1 + $0x1b8] sm:$0xf]
        %v2975 = vld [vmem:[%s1 + $0x1bc] sm:$0xf]
        %v3008 = vunpack.c.l.b16 %v2928
        %v3009 = vunpack.c.l.b16 %v2929
        %v3010 = vunpack.c.l.b16 %v2930
        %v3011 = vunpack.c.l.b16 %v2931
        %v3012 = vunpack.c.l.b16 %v2932
        %v3013 = vunpack.c.l.b16 %v2933
        %v3014 = vunpack.c.l.b16 %v2934
        %v3015 = vunpack.c.l.b16 %v2935
        %v3016 = vunpack.c.l.b16 %v2936
        %v3017 = vunpack.c.l.b16 %v2937
        %v3018 = vunpack.c.l.b16 %v2938
        %v3019 = vunpack.c.l.b16 %v2939
        %v3020 = vunpack.c.l.b16 %v2940
        %v3021 = vunpack.c.l.b16 %v2941
        %v3022 = vunpack.c.l.b16 %v2942
        %v3023 = vunpack.c.l.b16 %v2943
        %v3024 = vunpack.c.l.b16 %v2944
        %v3025 = vunpack.c.l.b16 %v2945
        %v3026 = vunpack.c.l.b16 %v2946
        %v3027 = vunpack.c.l.b16 %v2947
        %v3028 = vunpack.c.l.b16 %v2948
        %v3029 = vunpack.c.l.b16 %v2949
        %v3030 = vunpack.c.l.b16 %v2950
        %v3031 = vunpack.c.l.b16 %v2951
        %v3032 = vunpack.c.l.b16 %v2952
        %v3033 = vunpack.c.l.b16 %v2953
        %v3034 = vunpack.c.l.b16 %v2954
        %v3035 = vunpack.c.l.b16 %v2955
        %v3036 = vunpack.c.l.b16 %v2956
        %v3037 = vunpack.c.l.b16 %v2957
        %v3038 = vunpack.c.l.b16 %v2958
        %v3039 = vunpack.c.l.b16 %v2959
        %v3040 = vpack.c.b16 %v3009, %v3008
        %v3041 = vpack.c.b16 %v3011, %v3010
        %v3042 = vpack.c.b16 %v3013, %v3012
        %v3043 = vpack.c.b16 %v3015, %v3014
        %v3044 = vpack.c.b16 %v3017, %v3016
        %v3045 = vpack.c.b16 %v3019, %v3018
        %v3046 = vpack.c.b16 %v3021, %v3020
        %v3047 = vpack.c.b16 %v3023, %v3022
        %v3048 = vpack.c.b16 %v3025, %v3024
        %v3049 = vpack.c.b16 %v3027, %v3026
        %v3050 = vpack.c.b16 %v3029, %v3028
        %v3051 = vpack.c.b16 %v3031, %v3030
        %v3052 = vpack.c.b16 %v3033, %v3032
        %v3053 = vpack.c.b16 %v3035, %v3034
        %v3054 = vpack.c.b16 %v3037, %v3036
        %v3055 = vpack.c.b16 %v3039, %v3038
        %v3088 = vunpack.c.l.b16 %v2960
        %v3089 = vunpack.c.l.b16 %v2961
        %v3090 = vunpack.c.l.b16 %v2962
        %v3091 = vunpack.c.l.b16 %v2963
        %v3092 = vunpack.c.l.b16 %v2964
        %v3093 = vunpack.c.l.b16 %v2965
        %v3094 = vunpack.c.l.b16 %v2966
        %v3095 = vunpack.c.l.b16 %v2967
        %v3096 = vunpack.c.l.b16 %v2968
        %v3097 = vunpack.c.l.b16 %v2969
        %v3098 = vunpack.c.l.b16 %v2970
        %v3099 = vunpack.c.l.b16 %v2971
        %v3100 = vunpack.c.l.b16 %v2972
        %v3101 = vunpack.c.l.b16 %v2973
        %v3102 = vunpack.c.l.b16 %v2974
        %v3103 = vunpack.c.l.b16 %v2975
        %v3104 = vpack.c.b16 %v3089, %v3088
        %v3105 = vpack.c.b16 %v3091, %v3090
        %v3106 = vpack.c.b16 %v3093, %v3092
        %v3107 = vpack.c.b16 %v3095, %v3094
        %v3108 = vpack.c.b16 %v3097, %v3096
        %v3109 = vpack.c.b16 %v3099, %v3098
        %v3110 = vpack.c.b16 %v3101, %v3100
        %v3111 = vpack.c.b16 %v3103, %v3102
        %3120 = vmatpush.bf16.msra.mxu0 %v3111
        %3121 = vmatpush.bf16.msra.mxu0 %v3110
        %3122 = vmatpush.bf16.msra.mxu0 %v3109
        %3123 = vmatpush.bf16.msra.mxu0 %v3108
        %3124 = vmatpush.bf16.msra.mxu0 %v3107
        %3125 = vmatpush.bf16.msra.mxu0 %v3106
        %3126 = vmatpush.bf16.msra.mxu0 %v3105
        %3127 = vmatpush.bf16.msra.mxu0 %v3104
        %3128 = vmatmul.bf16.gmra.mxu0 %v3040
        %v3129 = vpop.f32.mrf.mxu0
        %v3130 = vadd.f32 0.0, %v3129
        %v3131 = vpop.f32.mrf.mxu0
        %v3132 = vadd.f32 0.0, %v3131
        %3133 = vmatmul.bf16.gmra.mxu0 %v3041
        %v3134 = vpop.f32.mrf.mxu0
        %v3135 = vadd.f32 0.0, %v3134
        %v3136 = vpop.f32.mrf.mxu0
        %v3137 = vadd.f32 0.0, %v3136
        %3138 = vmatmul.bf16.gmra.mxu0 %v3042
        %v3139 = vpop.f32.mrf.mxu0
        %v3140 = vadd.f32 0.0, %v3139
        %v3141 = vpop.f32.mrf.mxu0
        %v3142 = vadd.f32 0.0, %v3141
        %3143 = vmatmul.bf16.gmra.mxu0 %v3043
        %v3144 = vpop.f32.mrf.mxu0
        %v3145 = vadd.f32 0.0, %v3144
        %v3146 = vpop.f32.mrf.mxu0
        %v3147 = vadd.f32 0.0, %v3146
        %3148 = vmatmul.bf16.gmra.mxu0 %v3044
        %v3149 = vpop.f32.mrf.mxu0
        %v3150 = vadd.f32 0.0, %v3149
        %v3151 = vpop.f32.mrf.mxu0
        %v3152 = vadd.f32 0.0, %v3151
        %3153 = vmatmul.bf16.gmra.mxu0 %v3045
        %v3154 = vpop.f32.mrf.mxu0
        %v3155 = vadd.f32 0.0, %v3154
        %v3156 = vpop.f32.mrf.mxu0
        %v3157 = vadd.f32 0.0, %v3156
        %3158 = vmatmul.bf16.gmra.mxu0 %v3046
        %v3159 = vpop.f32.mrf.mxu0
        %v3160 = vadd.f32 0.0, %v3159
        %v3161 = vpop.f32.mrf.mxu0
        %v3162 = vadd.f32 0.0, %v3161
        %3163 = vmatmul.bf16.gmra.mxu0 %v3047
        %v3164 = vpop.f32.mrf.mxu0
        %v3165 = vadd.f32 0.0, %v3164
        %v3166 = vpop.f32.mrf.mxu0
        %v3167 = vadd.f32 0.0, %v3166
        %3168 = vmatmul.bf16.gmra.mxu0 %v3048
        %v3169 = vpop.f32.mrf.mxu0
        %v3170 = vadd.f32 0.0, %v3169
        %v3171 = vpop.f32.mrf.mxu0
        %v3172 = vadd.f32 0.0, %v3171
        %3173 = vmatmul.bf16.gmra.mxu0 %v3049
        %v3174 = vpop.f32.mrf.mxu0
        %v3175 = vadd.f32 0.0, %v3174
        %v3176 = vpop.f32.mrf.mxu0
        %v3177 = vadd.f32 0.0, %v3176
        %3178 = vmatmul.bf16.gmra.mxu0 %v3050
        %v3179 = vpop.f32.mrf.mxu0
        %v3180 = vadd.f32 0.0, %v3179
        %v3181 = vpop.f32.mrf.mxu0
        %v3182 = vadd.f32 0.0, %v3181
        %3183 = vmatmul.bf16.gmra.mxu0 %v3051
        %v3184 = vpop.f32.mrf.mxu0
        %v3185 = vadd.f32 0.0, %v3184
        %v3186 = vpop.f32.mrf.mxu0
        %v3187 = vadd.f32 0.0, %v3186
        %3188 = vmatmul.bf16.gmra.mxu0 %v3052
        %v3189 = vpop.f32.mrf.mxu0
        %v3190 = vadd.f32 0.0, %v3189
        %v3191 = vpop.f32.mrf.mxu0
        %v3192 = vadd.f32 0.0, %v3191
        %3193 = vmatmul.bf16.gmra.mxu0 %v3053
        %v3194 = vpop.f32.mrf.mxu0
        %v3195 = vadd.f32 0.0, %v3194
        %v3196 = vpop.f32.mrf.mxu0
        %v3197 = vadd.f32 0.0, %v3196
        %3198 = vmatmul.bf16.gmra.mxu0 %v3054
        %v3199 = vpop.f32.mrf.mxu0
        %v3200 = vadd.f32 0.0, %v3199
        %v3201 = vpop.f32.mrf.mxu0
        %v3202 = vadd.f32 0.0, %v3201
        %3203 = vmatmul.bf16.gmra.mxu0 %v3055
        %v3204 = vpop.f32.mrf.mxu0
        %v3205 = vadd.f32 0.0, %v3204
        %v3206 = vpop.f32.mrf.mxu0
        %v3207 = vadd.f32 0.0, %v3206
        %3208 = vdwg.mxu0
        %v3209 = vadd.f32 %v2892, %v3130
        %v3210 = vadd.f32 %v2893, %v3132
        %v3211 = vadd.f32 %v2894, %v3135
        %v3212 = vadd.f32 %v2895, %v3137
        %v3213 = vadd.f32 %v2896, %v3140
        %v3214 = vadd.f32 %v2897, %v3142
        %v3215 = vadd.f32 %v2898, %v3145
        %v3216 = vadd.f32 %v2899, %v3147
        %v3217 = vadd.f32 %v2900, %v3150
        %v3218 = vadd.f32 %v2901, %v3152
        %v3219 = vadd.f32 %v2902, %v3155
        %v3220 = vadd.f32 %v2903, %v3157
        %v3221 = vadd.f32 %v2904, %v3160
        %v3222 = vadd.f32 %v2905, %v3162
        %v3223 = vadd.f32 %v2906, %v3165
        %v3224 = vadd.f32 %v2907, %v3167
        %v3225 = vadd.f32 %v2908, %v3170
        %v3226 = vadd.f32 %v2909, %v3172
        %v3227 = vadd.f32 %v2910, %v3175
        %v3228 = vadd.f32 %v2911, %v3177
        %v3229 = vadd.f32 %v2912, %v3180
        %v3230 = vadd.f32 %v2913, %v3182
        %v3231 = vadd.f32 %v2914, %v3185
        %v3232 = vadd.f32 %v2915, %v3187
        %v3233 = vadd.f32 %v2916, %v3190
        %v3234 = vadd.f32 %v2917, %v3192
        %v3235 = vadd.f32 %v2918, %v3195
        %v3236 = vadd.f32 %v2919, %v3197
        %v3237 = vadd.f32 %v2920, %v3200
        %v3238 = vadd.f32 %v2921, %v3202
        %v3239 = vadd.f32 %v2922, %v3205
        %v3240 = vadd.f32 %v2923, %v3207
        %v3241 = vld [vmem:[%s2927] sm:$0xf]
        %v3242 = vld [vmem:[%s2927 + $0x4] sm:$0xf]
        %v3243 = vld [vmem:[%s2927 + $0x8] sm:$0x1]
        %v3244 = vld [vmem:[%s2927 + $0xc] sm:$0xf]
        %v3245 = vld [vmem:[%s2927 + $0x10] sm:$0xf]
        %v3246 = vld [vmem:[%s2927 + $0x14] sm:$0x1]
        %v3247 = vld [vmem:[%s2927 + $0x18] sm:$0xf]
        %v3248 = vld [vmem:[%s2927 + $0x1c] sm:$0xf]
        %v3249 = vld [vmem:[%s2927 + $0x20] sm:$0x1]
        %v3250 = vld [vmem:[%s2927 + $0x24] sm:$0xf]
        %v3251 = vld [vmem:[%s2927 + $0x28] sm:$0xf]
        %v3252 = vld [vmem:[%s2927 + $0x2c] sm:$0x1]
        %v3253 = vld [vmem:[%s2927 + $0x30] sm:$0xf]
        %v3254 = vld [vmem:[%s2927 + $0x34] sm:$0xf]
        %v3255 = vld [vmem:[%s2927 + $0x38] sm:$0x1]
        %v3256 = vld [vmem:[%s2927 + $0x3c] sm:$0xf]
        %v3257 = vld [vmem:[%s2927 + $0x40] sm:$0xf]
        %v3258 = vld [vmem:[%s2927 + $0x44] sm:$0x1]
        %v3259 = vld [vmem:[%s2927 + $0x48] sm:$0xf]
        %v3260 = vld [vmem:[%s2927 + $0x4c] sm:$0xf]
        %v3261 = vld [vmem:[%s2927 + $0x50] sm:$0x1]
        %v3262 = vld [vmem:[%s2927 + $0x54] sm:$0xf]
        %v3263 = vld [vmem:[%s2927 + $0x58] sm:$0xf]
        %v3264 = vld [vmem:[%s2927 + $0x5c] sm:$0x1]
        %v3265 = vld [vmem:[%s2927 + $0x60] sm:$0xf]
        %v3266 = vld [vmem:[%s2927 + $0x64] sm:$0xf]
        %v3267 = vld [vmem:[%s2927 + $0x68] sm:$0x1]
        %v3268 = vld [vmem:[%s2927 + $0x6c] sm:$0xf]
        %v3269 = vld [vmem:[%s2927 + $0x70] sm:$0xf]
        %v3270 = vld [vmem:[%s2927 + $0x74] sm:$0x1]
        %v3271 = vld [vmem:[%s2927 + $0x78] sm:$0xf]
        %v3272 = vld [vmem:[%s2927 + $0x7c] sm:$0xf]
        %v3273 = vld [vmem:[%s2927 + $0x80] sm:$0x1]
        %v3274 = vld [vmem:[%s2927 + $0x84] sm:$0xf]
        %v3275 = vld [vmem:[%s2927 + $0x88] sm:$0xf]
        %v3276 = vld [vmem:[%s2927 + $0x8c] sm:$0x1]
        %v3277 = vld [vmem:[%s2927 + $0x90] sm:$0xf]
        %v3278 = vld [vmem:[%s2927 + $0x94] sm:$0xf]
        %v3279 = vld [vmem:[%s2927 + $0x98] sm:$0x1]
        %v3280 = vld [vmem:[%s2927 + $0x9c] sm:$0xf]
        %v3281 = vld [vmem:[%s2927 + $0xa0] sm:$0xf]
        %v3282 = vld [vmem:[%s2927 + $0xa4] sm:$0x1]
        %v3283 = vld [vmem:[%s2927 + $0xa8] sm:$0xf]
        %v3284 = vld [vmem:[%s2927 + $0xac] sm:$0xf]
        %v3285 = vld [vmem:[%s2927 + $0xb0] sm:$0x1]
        %v3286 = vld [vmem:[%s2927 + $0xb4] sm:$0xf]
        %v3287 = vld [vmem:[%s2927 + $0xb8] sm:$0xf]
        %v3288 = vld [vmem:[%s2927 + $0xbc] sm:$0x1]
        %v3290 = vshrl.u32 %v3241, 16
        %v3292 = vrot.slane %v3290, 4
        %v3293 = vshll.u32 %v3241, 16
        %v3295 = vrot.slane %v3293, 5
        %v3296 = vor.u32 %v3292, %v3295
        %v3297 = vrot.slane %v3296, 4
        %v3299 = vshll.u32 %v3242, 16
        %v3301 = vrot.slane %v3299, 5
        %v3302 = vsel %vm254, %v3297, %v3301
        %v3303 = vshrl.u32 %v3242, 16
        %v3305 = vrot.slane %v3303, 4
        %v3306 = vor.u32 %v3305, %v3301
        %v3307 = vrot.slane %v3306, 4
        %v3309 = vshll.u32 %v3243, 16
        %v3311 = vrot.slane %v3309, 5
        %v3312 = vsel %vm254, %v3307, %v3311
        %v3314 = vshrl.u32 %v3244, 16
        %v3316 = vrot.slane %v3314, 4
        %v3317 = vshll.u32 %v3244, 16
        %v3319 = vrot.slane %v3317, 5
        %v3320 = vor.u32 %v3316, %v3319
        %v3321 = vrot.slane %v3320, 4
        %v3323 = vshll.u32 %v3245, 16
        %v3325 = vrot.slane %v3323, 5
        %v3326 = vsel %vm254, %v3321, %v3325
        %v3327 = vshrl.u32 %v3245, 16
        %v3329 = vrot.slane %v3327, 4
        %v3330 = vor.u32 %v3329, %v3325
        %v3331 = vrot.slane %v3330, 4
        %v3333 = vshll.u32 %v3246, 16
        %v3335 = vrot.slane %v3333, 5
        %v3336 = vsel %vm254, %v3331, %v3335
        %v3338 = vshrl.u32 %v3247, 16
        %v3340 = vrot.slane %v3338, 4
        %v3341 = vshll.u32 %v3247, 16
        %v3343 = vrot.slane %v3341, 5
        %v3344 = vor.u32 %v3340, %v3343
        %v3345 = vrot.slane %v3344, 4
        %v3347 = vshll.u32 %v3248, 16
        %v3349 = vrot.slane %v3347, 5
        %v3350 = vsel %vm254, %v3345, %v3349
        %v3351 = vshrl.u32 %v3248, 16
        %v3353 = vrot.slane %v3351, 4
        %v3354 = vor.u32 %v3353, %v3349
        %v3355 = vrot.slane %v3354, 4
        %v3357 = vshll.u32 %v3249, 16
        %v3359 = vrot.slane %v3357, 5
        %v3360 = vsel %vm254, %v3355, %v3359
        %v3362 = vshrl.u32 %v3250, 16
        %v3364 = vrot.slane %v3362, 4
        %v3365 = vshll.u32 %v3250, 16
        %v3367 = vrot.slane %v3365, 5
        %v3368 = vor.u32 %v3364, %v3367
        %v3369 = vrot.slane %v3368, 4
        %v3371 = vshll.u32 %v3251, 16
        %v3373 = vrot.slane %v3371, 5
        %v3374 = vsel %vm254, %v3369, %v3373
        %v3375 = vshrl.u32 %v3251, 16
        %v3377 = vrot.slane %v3375, 4
        %v3378 = vor.u32 %v3377, %v3373
        %v3379 = vrot.slane %v3378, 4
        %v3381 = vshll.u32 %v3252, 16
        %v3383 = vrot.slane %v3381, 5
        %v3384 = vsel %vm254, %v3379, %v3383
        %v3386 = vshrl.u32 %v3253, 16
        %v3388 = vrot.slane %v3386, 4
        %v3389 = vshll.u32 %v3253, 16
        %v3391 = vrot.slane %v3389, 5
        %v3392 = vor.u32 %v3388, %v3391
        %v3393 = vrot.slane %v3392, 4
        %v3395 = vshll.u32 %v3254, 16
        %v3397 = vrot.slane %v3395, 5
        %v3398 = vsel %vm254, %v3393, %v3397
        %v3399 = vshrl.u32 %v3254, 16
        %v3401 = vrot.slane %v3399, 4
        %v3402 = vor.u32 %v3401, %v3397
        %v3403 = vrot.slane %v3402, 4
        %v3405 = vshll.u32 %v3255, 16
        %v3407 = vrot.slane %v3405, 5
        %v3408 = vsel %vm254, %v3403, %v3407
        %v3410 = vshrl.u32 %v3256, 16
        %v3412 = vrot.slane %v3410, 4
        %v3413 = vshll.u32 %v3256, 16
        %v3415 = vrot.slane %v3413, 5
        %v3416 = vor.u32 %v3412, %v3415
        %v3417 = vrot.slane %v3416, 4
        %v3419 = vshll.u32 %v3257, 16
        %v3421 = vrot.slane %v3419, 5
        %v3422 = vsel %vm254, %v3417, %v3421
        %v3423 = vshrl.u32 %v3257, 16
        %v3425 = vrot.slane %v3423, 4
        %v3426 = vor.u32 %v3425, %v3421
        %v3427 = vrot.slane %v3426, 4
        %v3429 = vshll.u32 %v3258, 16
        %v3431 = vrot.slane %v3429, 5
        %v3432 = vsel %vm254, %v3427, %v3431
        %v3434 = vshrl.u32 %v3259, 16
        %v3436 = vrot.slane %v3434, 4
        %v3437 = vshll.u32 %v3259, 16
        %v3439 = vrot.slane %v3437, 5
        %v3440 = vor.u32 %v3436, %v3439
        %v3441 = vrot.slane %v3440, 4
        %v3443 = vshll.u32 %v3260, 16
        %v3445 = vrot.slane %v3443, 5
        %v3446 = vsel %vm254, %v3441, %v3445
        %v3447 = vshrl.u32 %v3260, 16
        %v3449 = vrot.slane %v3447, 4
        %v3450 = vor.u32 %v3449, %v3445
        %v3451 = vrot.slane %v3450, 4
        %v3453 = vshll.u32 %v3261, 16
        %v3455 = vrot.slane %v3453, 5
        %v3456 = vsel %vm254, %v3451, %v3455
        %v3458 = vshrl.u32 %v3262, 16
        %v3460 = vrot.slane %v3458, 4
        %v3461 = vshll.u32 %v3262, 16
        %v3463 = vrot.slane %v3461, 5
        %v3464 = vor.u32 %v3460, %v3463
        %v3465 = vrot.slane %v3464, 4
        %v3467 = vshll.u32 %v3263, 16
        %v3469 = vrot.slane %v3467, 5
        %v3470 = vsel %vm254, %v3465, %v3469
        %v3471 = vshrl.u32 %v3263, 16
        %v3473 = vrot.slane %v3471, 4
        %v3474 = vor.u32 %v3473, %v3469
        %v3475 = vrot.slane %v3474, 4
        %v3477 = vshll.u32 %v3264, 16
        %v3479 = vrot.slane %v3477, 5
        %v3480 = vsel %vm254, %v3475, %v3479
        %v3482 = vshrl.u32 %v3265, 16
        %v3484 = vrot.slane %v3482, 4
        %v3485 = vshll.u32 %v3265, 16
        %v3487 = vrot.slane %v3485, 5
        %v3488 = vor.u32 %v3484, %v3487
        %v3489 = vrot.slane %v3488, 4
        %v3491 = vshll.u32 %v3266, 16
        %v3493 = vrot.slane %v3491, 5
        %v3494 = vsel %vm254, %v3489, %v3493
        %v3495 = vshrl.u32 %v3266, 16
        %v3497 = vrot.slane %v3495, 4
        %v3498 = vor.u32 %v3497, %v3493
        %v3499 = vrot.slane %v3498, 4
        %v3501 = vshll.u32 %v3267, 16
        %v3503 = vrot.slane %v3501, 5
        %v3504 = vsel %vm254, %v3499, %v3503
        %v3506 = vshrl.u32 %v3268, 16
        %v3508 = vrot.slane %v3506, 4
        %v3509 = vshll.u32 %v3268, 16
        %v3511 = vrot.slane %v3509, 5
        %v3512 = vor.u32 %v3508, %v3511
        %v3513 = vrot.slane %v3512, 4
        %v3515 = vshll.u32 %v3269, 16
        %v3517 = vrot.slane %v3515, 5
        %v3518 = vsel %vm254, %v3513, %v3517
        %v3519 = vshrl.u32 %v3269, 16
        %v3521 = vrot.slane %v3519, 4
        %v3522 = vor.u32 %v3521, %v3517
        %v3523 = vrot.slane %v3522, 4
        %v3525 = vshll.u32 %v3270, 16
        %v3527 = vrot.slane %v3525, 5
        %v3528 = vsel %vm254, %v3523, %v3527
        %v3530 = vshrl.u32 %v3271, 16
        %v3532 = vrot.slane %v3530, 4
        %v3533 = vshll.u32 %v3271, 16
        %v3535 = vrot.slane %v3533, 5
        %v3536 = vor.u32 %v3532, %v3535
        %v3537 = vrot.slane %v3536, 4
        %v3539 = vshll.u32 %v3272, 16
        %v3541 = vrot.slane %v3539, 5
        %v3542 = vsel %vm254, %v3537, %v3541
        %v3543 = vshrl.u32 %v3272, 16
        %v3545 = vrot.slane %v3543, 4
        %v3546 = vor.u32 %v3545, %v3541
        %v3547 = vrot.slane %v3546, 4
        %v3549 = vshll.u32 %v3273, 16
        %v3551 = vrot.slane %v3549, 5
        %v3552 = vsel %vm254, %v3547, %v3551
        %v3554 = vshrl.u32 %v3274, 16
        %v3556 = vrot.slane %v3554, 4
        %v3557 = vshll.u32 %v3274, 16
        %v3559 = vrot.slane %v3557, 5
        %v3560 = vor.u32 %v3556, %v3559
        %v3561 = vrot.slane %v3560, 4
        %v3563 = vshll.u32 %v3275, 16
        %v3565 = vrot.slane %v3563, 5
        %v3566 = vsel %vm254, %v3561, %v3565
        %v3567 = vshrl.u32 %v3275, 16
        %v3569 = vrot.slane %v3567, 4
        %v3570 = vor.u32 %v3569, %v3565
        %v3571 = vrot.slane %v3570, 4
        %v3573 = vshll.u32 %v3276, 16
        %v3575 = vrot.slane %v3573, 5
        %v3576 = vsel %vm254, %v3571, %v3575
        %v3578 = vshrl.u32 %v3277, 16
        %v3580 = vrot.slane %v3578, 4
        %v3581 = vshll.u32 %v3277, 16
        %v3583 = vrot.slane %v3581, 5
        %v3584 = vor.u32 %v3580, %v3583
        %v3585 = vrot.slane %v3584, 4
        %v3587 = vshll.u32 %v3278, 16
        %v3589 = vrot.slane %v3587, 5
        %v3590 = vsel %vm254, %v3585, %v3589
        %v3591 = vshrl.u32 %v3278, 16
        %v3593 = vrot.slane %v3591, 4
        %v3594 = vor.u32 %v3593, %v3589
        %v3595 = vrot.slane %v3594, 4
        %v3597 = vshll.u32 %v3279, 16
        %v3599 = vrot.slane %v3597, 5
        %v3600 = vsel %vm254, %v3595, %v3599
        %v3602 = vshrl.u32 %v3280, 16
        %v3604 = vrot.slane %v3602, 4
        %v3605 = vshll.u32 %v3280, 16
        %v3607 = vrot.slane %v3605, 5
        %v3608 = vor.u32 %v3604, %v3607
        %v3609 = vrot.slane %v3608, 4
        %v3611 = vshll.u32 %v3281, 16
        %v3613 = vrot.slane %v3611, 5
        %v3614 = vsel %vm254, %v3609, %v3613
        %v3615 = vshrl.u32 %v3281, 16
        %v3617 = vrot.slane %v3615, 4
        %v3618 = vor.u32 %v3617, %v3613
        %v3619 = vrot.slane %v3618, 4
        %v3621 = vshll.u32 %v3282, 16
        %v3623 = vrot.slane %v3621, 5
        %v3624 = vsel %vm254, %v3619, %v3623
        %v3626 = vshrl.u32 %v3283, 16
        %v3628 = vrot.slane %v3626, 4
        %v3629 = vshll.u32 %v3283, 16
        %v3631 = vrot.slane %v3629, 5
        %v3632 = vor.u32 %v3628, %v3631
        %v3633 = vrot.slane %v3632, 4
        %v3635 = vshll.u32 %v3284, 16
        %v3637 = vrot.slane %v3635, 5
        %v3638 = vsel %vm254, %v3633, %v3637
        %v3639 = vshrl.u32 %v3284, 16
        %v3641 = vrot.slane %v3639, 4
        %v3642 = vor.u32 %v3641, %v3637
        %v3643 = vrot.slane %v3642, 4
        %v3645 = vshll.u32 %v3285, 16
        %v3647 = vrot.slane %v3645, 5
        %v3648 = vsel %vm254, %v3643, %v3647
        %v3650 = vshrl.u32 %v3286, 16
        %v3652 = vrot.slane %v3650, 4
        %v3653 = vshll.u32 %v3286, 16
        %v3655 = vrot.slane %v3653, 5
        %v3656 = vor.u32 %v3652, %v3655
        %v3657 = vrot.slane %v3656, 4
        %v3659 = vshll.u32 %v3287, 16
        %v3661 = vrot.slane %v3659, 5
        %v3662 = vsel %vm254, %v3657, %v3661
        %v3663 = vshrl.u32 %v3287, 16
        %v3665 = vrot.slane %v3663, 4
        %v3666 = vor.u32 %v3665, %v3661
        %v3667 = vrot.slane %v3666, 4
        %v3669 = vshll.u32 %v3288, 16
        %v3671 = vrot.slane %v3669, 5
        %v3672 = vsel %vm254, %v3667, %v3671
        %v3673 = vld [vmem:[%s1 + $0x1c0] sm:$0xf]
        %v3674 = vld [vmem:[%s1 + $0x1c4] sm:$0xf]
        %v3675 = vld [vmem:[%s1 + $0x1c8] sm:$0xf]
        %v3676 = vld [vmem:[%s1 + $0x1cc] sm:$0xf]
        %v3677 = vld [vmem:[%s1 + $0x1d0] sm:$0xf]
        %v3678 = vld [vmem:[%s1 + $0x1d4] sm:$0xf]
        %v3679 = vld [vmem:[%s1 + $0x1d8] sm:$0xf]
        %v3680 = vld [vmem:[%s1 + $0x1dc] sm:$0xf]
        %v3681 = vld [vmem:[%s1 + $0x1e0] sm:$0xf]
        %v3682 = vld [vmem:[%s1 + $0x1e4] sm:$0xf]
        %v3683 = vld [vmem:[%s1 + $0x1e8] sm:$0xf]
        %v3684 = vld [vmem:[%s1 + $0x1ec] sm:$0xf]
        %v3685 = vld [vmem:[%s1 + $0x1f0] sm:$0xf]
        %v3686 = vld [vmem:[%s1 + $0x1f4] sm:$0xf]
        %v3687 = vld [vmem:[%s1 + $0x1f8] sm:$0xf]
        %v3688 = vld [vmem:[%s1 + $0x1fc] sm:$0xf]
        %v3689 = vunpack.c.l.b16 %v3302
        %v3690 = vunpack.c.l.b16 %v3312
        %v3691 = vunpack.c.l.b16 %v3326
        %v3692 = vunpack.c.l.b16 %v3336
        %v3693 = vunpack.c.l.b16 %v3350
        %v3694 = vunpack.c.l.b16 %v3360
        %v3695 = vunpack.c.l.b16 %v3374
        %v3696 = vunpack.c.l.b16 %v3384
        %v3697 = vunpack.c.l.b16 %v3398
        %v3698 = vunpack.c.l.b16 %v3408
        %v3699 = vunpack.c.l.b16 %v3422
        %v3700 = vunpack.c.l.b16 %v3432
        %v3701 = vunpack.c.l.b16 %v3446
        %v3702 = vunpack.c.l.b16 %v3456
        %v3703 = vunpack.c.l.b16 %v3470
        %v3704 = vunpack.c.l.b16 %v3480
        %v3705 = vunpack.c.l.b16 %v3494
        %v3706 = vunpack.c.l.b16 %v3504
        %v3707 = vunpack.c.l.b16 %v3518
        %v3708 = vunpack.c.l.b16 %v3528
        %v3709 = vunpack.c.l.b16 %v3542
        %v3710 = vunpack.c.l.b16 %v3552
        %v3711 = vunpack.c.l.b16 %v3566
        %v3712 = vunpack.c.l.b16 %v3576
        %v3713 = vunpack.c.l.b16 %v3590
        %v3714 = vunpack.c.l.b16 %v3600
        %v3715 = vunpack.c.l.b16 %v3614
        %v3716 = vunpack.c.l.b16 %v3624
        %v3717 = vunpack.c.l.b16 %v3638
        %v3718 = vunpack.c.l.b16 %v3648
        %v3719 = vunpack.c.l.b16 %v3662
        %v3720 = vunpack.c.l.b16 %v3672
        %v3721 = vpack.c.b16 %v3690, %v3689
        %v3722 = vpack.c.b16 %v3692, %v3691
        %v3723 = vpack.c.b16 %v3694, %v3693
        %v3724 = vpack.c.b16 %v3696, %v3695
        %v3725 = vpack.c.b16 %v3698, %v3697
        %v3726 = vpack.c.b16 %v3700, %v3699
        %v3727 = vpack.c.b16 %v3702, %v3701
        %v3728 = vpack.c.b16 %v3704, %v3703
        %v3729 = vpack.c.b16 %v3706, %v3705
        %v3730 = vpack.c.b16 %v3708, %v3707
        %v3731 = vpack.c.b16 %v3710, %v3709
        %v3732 = vpack.c.b16 %v3712, %v3711
        %v3733 = vpack.c.b16 %v3714, %v3713
        %v3734 = vpack.c.b16 %v3716, %v3715
        %v3735 = vpack.c.b16 %v3718, %v3717
        %v3736 = vpack.c.b16 %v3720, %v3719
        %v3769 = vunpack.c.l.b16 %v3673
        %v3770 = vunpack.c.l.b16 %v3674
        %v3771 = vunpack.c.l.b16 %v3675
        %v3772 = vunpack.c.l.b16 %v3676
        %v3773 = vunpack.c.l.b16 %v3677
        %v3774 = vunpack.c.l.b16 %v3678
        %v3775 = vunpack.c.l.b16 %v3679
        %v3776 = vunpack.c.l.b16 %v3680
        %v3777 = vunpack.c.l.b16 %v3681
        %v3778 = vunpack.c.l.b16 %v3682
        %v3779 = vunpack.c.l.b16 %v3683
        %v3780 = vunpack.c.l.b16 %v3684
        %v3781 = vunpack.c.l.b16 %v3685
        %v3782 = vunpack.c.l.b16 %v3686
        %v3783 = vunpack.c.l.b16 %v3687
        %v3784 = vunpack.c.l.b16 %v3688
        %v3785 = vpack.c.b16 %v3770, %v3769
        %v3786 = vpack.c.b16 %v3772, %v3771
        %v3787 = vpack.c.b16 %v3774, %v3773
        %v3788 = vpack.c.b16 %v3776, %v3775
        %v3789 = vpack.c.b16 %v3778, %v3777
        %v3790 = vpack.c.b16 %v3780, %v3779
        %v3791 = vpack.c.b16 %v3782, %v3781
        %v3792 = vpack.c.b16 %v3784, %v3783
        %3801 = vmatpush.bf16.msra.mxu0 %v3792
        %3802 = vmatpush.bf16.msra.mxu0 %v3791
        %3803 = vmatpush.bf16.msra.mxu0 %v3790
        %3804 = vmatpush.bf16.msra.mxu0 %v3789
        %3805 = vmatpush.bf16.msra.mxu0 %v3788
        %3806 = vmatpush.bf16.msra.mxu0 %v3787
        %3807 = vmatpush.bf16.msra.mxu0 %v3786
        %3808 = vmatpush.bf16.msra.mxu0 %v3785
        %3809 = vmatmul.bf16.gmra.mxu0 %v3721
        %v3810 = vpop.f32.mrf.mxu0
        %v3811 = vadd.f32 0.0, %v3810
        %v3812 = vpop.f32.mrf.mxu0
        %v3813 = vadd.f32 0.0, %v3812
        %3814 = vmatmul.bf16.gmra.mxu0 %v3722
        %v3815 = vpop.f32.mrf.mxu0
        %v3816 = vadd.f32 0.0, %v3815
        %v3817 = vpop.f32.mrf.mxu0
        %v3818 = vadd.f32 0.0, %v3817
        %3819 = vmatmul.bf16.gmra.mxu0 %v3723
        %v3820 = vpop.f32.mrf.mxu0
        %v3821 = vadd.f32 0.0, %v3820
        %v3822 = vpop.f32.mrf.mxu0
        %v3823 = vadd.f32 0.0, %v3822
        %3824 = vmatmul.bf16.gmra.mxu0 %v3724
        %v3825 = vpop.f32.mrf.mxu0
        %v3826 = vadd.f32 0.0, %v3825
        %v3827 = vpop.f32.mrf.mxu0
        %v3828 = vadd.f32 0.0, %v3827
        %3829 = vmatmul.bf16.gmra.mxu0 %v3725
        %v3830 = vpop.f32.mrf.mxu0
        %v3831 = vadd.f32 0.0, %v3830
        %v3832 = vpop.f32.mrf.mxu0
        %v3833 = vadd.f32 0.0, %v3832
        %3834 = vmatmul.bf16.gmra.mxu0 %v3726
        %v3835 = vpop.f32.mrf.mxu0
        %v3836 = vadd.f32 0.0, %v3835
        %v3837 = vpop.f32.mrf.mxu0
        %v3838 = vadd.f32 0.0, %v3837
        %3839 = vmatmul.bf16.gmra.mxu0 %v3727
        %v3840 = vpop.f32.mrf.mxu0
        %v3841 = vadd.f32 0.0, %v3840
        %v3842 = vpop.f32.mrf.mxu0
        %v3843 = vadd.f32 0.0, %v3842
        %3844 = vmatmul.bf16.gmra.mxu0 %v3728
        %v3845 = vpop.f32.mrf.mxu0
        %v3846 = vadd.f32 0.0, %v3845
        %v3847 = vpop.f32.mrf.mxu0
        %v3848 = vadd.f32 0.0, %v3847
        %3849 = vmatmul.bf16.gmra.mxu0 %v3729
        %v3850 = vpop.f32.mrf.mxu0
        %v3851 = vadd.f32 0.0, %v3850
        %v3852 = vpop.f32.mrf.mxu0
        %v3853 = vadd.f32 0.0, %v3852
        %3854 = vmatmul.bf16.gmra.mxu0 %v3730
        %v3855 = vpop.f32.mrf.mxu0
        %v3856 = vadd.f32 0.0, %v3855
        %v3857 = vpop.f32.mrf.mxu0
        %v3858 = vadd.f32 0.0, %v3857
        %3859 = vmatmul.bf16.gmra.mxu0 %v3731
        %v3860 = vpop.f32.mrf.mxu0
        %v3861 = vadd.f32 0.0, %v3860
        %v3862 = vpop.f32.mrf.mxu0
        %v3863 = vadd.f32 0.0, %v3862
        %3864 = vmatmul.bf16.gmra.mxu0 %v3732
        %v3865 = vpop.f32.mrf.mxu0
        %v3866 = vadd.f32 0.0, %v3865
        %v3867 = vpop.f32.mrf.mxu0
        %v3868 = vadd.f32 0.0, %v3867
        %3869 = vmatmul.bf16.gmra.mxu0 %v3733
        %v3870 = vpop.f32.mrf.mxu0
        %v3871 = vadd.f32 0.0, %v3870
        %v3872 = vpop.f32.mrf.mxu0
        %v3873 = vadd.f32 0.0, %v3872
        %3874 = vmatmul.bf16.gmra.mxu0 %v3734
        %v3875 = vpop.f32.mrf.mxu0
        %v3876 = vadd.f32 0.0, %v3875
        %v3877 = vpop.f32.mrf.mxu0
        %v3878 = vadd.f32 0.0, %v3877
        %3879 = vmatmul.bf16.gmra.mxu0 %v3735
        %v3880 = vpop.f32.mrf.mxu0
        %v3881 = vadd.f32 0.0, %v3880
        %v3882 = vpop.f32.mrf.mxu0
        %v3883 = vadd.f32 0.0, %v3882
        %3884 = vmatmul.bf16.gmra.mxu0 %v3736
        %v3885 = vpop.f32.mrf.mxu0
        %v3886 = vadd.f32 0.0, %v3885
        %v3887 = vpop.f32.mrf.mxu0
        %v3888 = vadd.f32 0.0, %v3887
        %3889 = vdwg.mxu0
        %v3890 = vadd.f32 %v3209, %v3811
        %v3891 = vadd.f32 %v3210, %v3813
        %v3892 = vadd.f32 %v3211, %v3816
        %v3893 = vadd.f32 %v3212, %v3818
        %v3894 = vadd.f32 %v3213, %v3821
        %v3895 = vadd.f32 %v3214, %v3823
        %v3896 = vadd.f32 %v3215, %v3826
        %v3897 = vadd.f32 %v3216, %v3828
        %v3898 = vadd.f32 %v3217, %v3831
        %v3899 = vadd.f32 %v3218, %v3833
        %v3900 = vadd.f32 %v3219, %v3836
        %v3901 = vadd.f32 %v3220, %v3838
        %v3902 = vadd.f32 %v3221, %v3841
        %v3903 = vadd.f32 %v3222, %v3843
        %v3904 = vadd.f32 %v3223, %v3846
        %v3905 = vadd.f32 %v3224, %v3848
        %v3906 = vadd.f32 %v3225, %v3851
        %v3907 = vadd.f32 %v3226, %v3853
        %v3908 = vadd.f32 %v3227, %v3856
        %v3909 = vadd.f32 %v3228, %v3858
        %v3910 = vadd.f32 %v3229, %v3861
        %v3911 = vadd.f32 %v3230, %v3863
        %v3912 = vadd.f32 %v3231, %v3866
        %v3913 = vadd.f32 %v3232, %v3868
        %v3914 = vadd.f32 %v3233, %v3871
        %v3915 = vadd.f32 %v3234, %v3873
        %v3916 = vadd.f32 %v3235, %v3876
        %v3917 = vadd.f32 %v3236, %v3878
        %v3918 = vadd.f32 %v3237, %v3881
        %v3919 = vadd.f32 %v3238, %v3883
        %v3920 = vadd.f32 %v3239, %v3886
        %v3921 = vadd.f32 %v3240, %v3888
        %v3922 = vld [vmem:[%s2927] sm:$0xe]
        %v3923 = vld [vmem:[%s2927 + $0xc] sm:$0xe]
        %v3924 = vld [vmem:[%s2927 + $0x18] sm:$0xe]
        %v3925 = vld [vmem:[%s2927 + $0x24] sm:$0xe]
        %v3926 = vld [vmem:[%s2927 + $0x30] sm:$0xe]
        %v3927 = vld [vmem:[%s2927 + $0x3c] sm:$0xe]
        %v3928 = vld [vmem:[%s2927 + $0x48] sm:$0xe]
        %v3929 = vld [vmem:[%s2927 + $0x54] sm:$0xe]
        %v3930 = vld [vmem:[%s2927 + $0x60] sm:$0xe]
        %v3931 = vld [vmem:[%s2927 + $0x6c] sm:$0xe]
        %v3932 = vld [vmem:[%s2927 + $0x78] sm:$0xe]
        %v3933 = vld [vmem:[%s2927 + $0x84] sm:$0xe]
        %v3934 = vld [vmem:[%s2927 + $0x90] sm:$0xe]
        %v3935 = vld [vmem:[%s2927 + $0x9c] sm:$0xe]
        %v3936 = vld [vmem:[%s2927 + $0xa8] sm:$0xe]
        %v3937 = vld [vmem:[%s2927 + $0xb4] sm:$0xe]
        %v3986 = vrot.slane %v3922, 5
        %v3987 = vrot.slane %v3986, 4
        %v3988 = vrot.slane %v3242, 5
        %v3989 = vsel %vm1139, %v3987, %v3988
        %v3990 = vrot.slane %v3988, 4
        %v3991 = vrot.slane %v3243, 5
        %v3992 = vsel %vm1139, %v3990, %v3991
        %v3993 = vrot.slane %v3923, 5
        %v3994 = vrot.slane %v3993, 4
        %v3995 = vrot.slane %v3245, 5
        %v3996 = vsel %vm1139, %v3994, %v3995
        %v3997 = vrot.slane %v3995, 4
        %v3998 = vrot.slane %v3246, 5
        %v3999 = vsel %vm1139, %v3997, %v3998
        %v4000 = vrot.slane %v3924, 5
        %v4001 = vrot.slane %v4000, 4
        %v4002 = vrot.slane %v3248, 5
        %v4003 = vsel %vm1139, %v4001, %v4002
        %v4004 = vrot.slane %v4002, 4
        %v4005 = vrot.slane %v3249, 5
        %v4006 = vsel %vm1139, %v4004, %v4005
        %v4007 = vrot.slane %v3925, 5
        %v4008 = vrot.slane %v4007, 4
        %v4009 = vrot.slane %v3251, 5
        %v4010 = vsel %vm1139, %v4008, %v4009
        %v4011 = vrot.slane %v4009, 4
        %v4012 = vrot.slane %v3252, 5
        %v4013 = vsel %vm1139, %v4011, %v4012
        %v4014 = vrot.slane %v3926, 5
        %v4015 = vrot.slane %v4014, 4
        %v4016 = vrot.slane %v3254, 5
        %v4017 = vsel %vm1139, %v4015, %v4016
        %v4018 = vrot.slane %v4016, 4
        %v4019 = vrot.slane %v3255, 5
        %v4020 = vsel %vm1139, %v4018, %v4019
        %v4021 = vrot.slane %v3927, 5
        %v4022 = vrot.slane %v4021, 4
        %v4023 = vrot.slane %v3257, 5
        %v4024 = vsel %vm1139, %v4022, %v4023
        %v4025 = vrot.slane %v4023, 4
        %v4026 = vrot.slane %v3258, 5
        %v4027 = vsel %vm1139, %v4025, %v4026
        %v4028 = vrot.slane %v3928, 5
        %v4029 = vrot.slane %v4028, 4
        %v4030 = vrot.slane %v3260, 5
        %v4031 = vsel %vm1139, %v4029, %v4030
        %v4032 = vrot.slane %v4030, 4
        %v4033 = vrot.slane %v3261, 5
        %v4034 = vsel %vm1139, %v4032, %v4033
        %v4035 = vrot.slane %v3929, 5
        %v4036 = vrot.slane %v4035, 4
        %v4037 = vrot.slane %v3263, 5
        %v4038 = vsel %vm1139, %v4036, %v4037
        %v4039 = vrot.slane %v4037, 4
        %v4040 = vrot.slane %v3264, 5
        %v4041 = vsel %vm1139, %v4039, %v4040
        %v4042 = vrot.slane %v3930, 5
        %v4043 = vrot.slane %v4042, 4
        %v4044 = vrot.slane %v3266, 5
        %v4045 = vsel %vm1139, %v4043, %v4044
        %v4046 = vrot.slane %v4044, 4
        %v4047 = vrot.slane %v3267, 5
        %v4048 = vsel %vm1139, %v4046, %v4047
        %v4049 = vrot.slane %v3931, 5
        %v4050 = vrot.slane %v4049, 4
        %v4051 = vrot.slane %v3269, 5
        %v4052 = vsel %vm1139, %v4050, %v4051
        %v4053 = vrot.slane %v4051, 4
        %v4054 = vrot.slane %v3270, 5
        %v4055 = vsel %vm1139, %v4053, %v4054
        %v4056 = vrot.slane %v3932, 5
        %v4057 = vrot.slane %v4056, 4
        %v4058 = vrot.slane %v3272, 5
        %v4059 = vsel %vm1139, %v4057, %v4058
        %v4060 = vrot.slane %v4058, 4
        %v4061 = vrot.slane %v3273, 5
        %v4062 = vsel %vm1139, %v4060, %v4061
        %v4063 = vrot.slane %v3933, 5
        %v4064 = vrot.slane %v4063, 4
        %v4065 = vrot.slane %v3275, 5
        %v4066 = vsel %vm1139, %v4064, %v4065
        %v4067 = vrot.slane %v4065, 4
        %v4068 = vrot.slane %v3276, 5
        %v4069 = vsel %vm1139, %v4067, %v4068
        %v4070 = vrot.slane %v3934, 5
        %v4071 = vrot.slane %v4070, 4
        %v4072 = vrot.slane %v3278, 5
        %v4073 = vsel %vm1139, %v4071, %v4072
        %v4074 = vrot.slane %v4072, 4
        %v4075 = vrot.slane %v3279, 5
        %v4076 = vsel %vm1139, %v4074, %v4075
        %v4077 = vrot.slane %v3935, 5
        %v4078 = vrot.slane %v4077, 4
        %v4079 = vrot.slane %v3281, 5
        %v4080 = vsel %vm1139, %v4078, %v4079
        %v4081 = vrot.slane %v4079, 4
        %v4082 = vrot.slane %v3282, 5
        %v4083 = vsel %vm1139, %v4081, %v4082
        %v4084 = vrot.slane %v3936, 5
        %v4085 = vrot.slane %v4084, 4
        %v4086 = vrot.slane %v3284, 5
        %v4087 = vsel %vm1139, %v4085, %v4086
        %v4088 = vrot.slane %v4086, 4
        %v4089 = vrot.slane %v3285, 5
        %v4090 = vsel %vm1139, %v4088, %v4089
        %v4091 = vrot.slane %v3937, 5
        %v4092 = vrot.slane %v4091, 4
        %v4093 = vrot.slane %v3287, 5
        %v4094 = vsel %vm1139, %v4092, %v4093
        %v4095 = vrot.slane %v4093, 4
        %v4096 = vrot.slane %v3288, 5
        %v4097 = vsel %vm1139, %v4095, %v4096
        %v4098 = vld [vmem:[%s1 + $0x200] sm:$0xf]
        %v4099 = vld [vmem:[%s1 + $0x204] sm:$0xf]
        %v4100 = vld [vmem:[%s1 + $0x208] sm:$0xf]
        %v4101 = vld [vmem:[%s1 + $0x20c] sm:$0xf]
        %v4102 = vld [vmem:[%s1 + $0x210] sm:$0xf]
        %v4103 = vld [vmem:[%s1 + $0x214] sm:$0xf]
        %v4104 = vld [vmem:[%s1 + $0x218] sm:$0xf]
        %v4105 = vld [vmem:[%s1 + $0x21c] sm:$0xf]
        %v4106 = vld [vmem:[%s1 + $0x220] sm:$0xf]
        %v4107 = vld [vmem:[%s1 + $0x224] sm:$0xf]
        %v4108 = vld [vmem:[%s1 + $0x228] sm:$0xf]
        %v4109 = vld [vmem:[%s1 + $0x22c] sm:$0xf]
        %v4110 = vld [vmem:[%s1 + $0x230] sm:$0xf]
        %v4111 = vld [vmem:[%s1 + $0x234] sm:$0xf]
        %v4112 = vld [vmem:[%s1 + $0x238] sm:$0xf]
        %v4113 = vld [vmem:[%s1 + $0x23c] sm:$0xf]
        %v4114 = vunpack.c.l.b16 %v3989
        %v4115 = vunpack.c.l.b16 %v3992
        %v4116 = vunpack.c.l.b16 %v3996
        %v4117 = vunpack.c.l.b16 %v3999
        %v4118 = vunpack.c.l.b16 %v4003
        %v4119 = vunpack.c.l.b16 %v4006
        %v4120 = vunpack.c.l.b16 %v4010
        %v4121 = vunpack.c.l.b16 %v4013
        %v4122 = vunpack.c.l.b16 %v4017
        %v4123 = vunpack.c.l.b16 %v4020
        %v4124 = vunpack.c.l.b16 %v4024
        %v4125 = vunpack.c.l.b16 %v4027
        %v4126 = vunpack.c.l.b16 %v4031
        %v4127 = vunpack.c.l.b16 %v4034
        %v4128 = vunpack.c.l.b16 %v4038
        %v4129 = vunpack.c.l.b16 %v4041
        %v4130 = vunpack.c.l.b16 %v4045
        %v4131 = vunpack.c.l.b16 %v4048
        %v4132 = vunpack.c.l.b16 %v4052
        %v4133 = vunpack.c.l.b16 %v4055
        %v4134 = vunpack.c.l.b16 %v4059
        %v4135 = vunpack.c.l.b16 %v4062
        %v4136 = vunpack.c.l.b16 %v4066
        %v4137 = vunpack.c.l.b16 %v4069
        %v4138 = vunpack.c.l.b16 %v4073
        %v4139 = vunpack.c.l.b16 %v4076
        %v4140 = vunpack.c.l.b16 %v4080
        %v4141 = vunpack.c.l.b16 %v4083
        %v4142 = vunpack.c.l.b16 %v4087
        %v4143 = vunpack.c.l.b16 %v4090
        %v4144 = vunpack.c.l.b16 %v4094
        %v4145 = vunpack.c.l.b16 %v4097
        %v4146 = vpack.c.b16 %v4115, %v4114
        %v4147 = vpack.c.b16 %v4117, %v4116
        %v4148 = vpack.c.b16 %v4119, %v4118
        %v4149 = vpack.c.b16 %v4121, %v4120
        %v4150 = vpack.c.b16 %v4123, %v4122
        %v4151 = vpack.c.b16 %v4125, %v4124
        %v4152 = vpack.c.b16 %v4127, %v4126
        %v4153 = vpack.c.b16 %v4129, %v4128
        %v4154 = vpack.c.b16 %v4131, %v4130
        %v4155 = vpack.c.b16 %v4133, %v4132
        %v4156 = vpack.c.b16 %v4135, %v4134
        %v4157 = vpack.c.b16 %v4137, %v4136
        %v4158 = vpack.c.b16 %v4139, %v4138
        %v4159 = vpack.c.b16 %v4141, %v4140
        %v4160 = vpack.c.b16 %v4143, %v4142
        %v4161 = vpack.c.b16 %v4145, %v4144
        %v4194 = vunpack.c.l.b16 %v4098
        %v4195 = vunpack.c.l.b16 %v4099
        %v4196 = vunpack.c.l.b16 %v4100
        %v4197 = vunpack.c.l.b16 %v4101
        %v4198 = vunpack.c.l.b16 %v4102
        %v4199 = vunpack.c.l.b16 %v4103
        %v4200 = vunpack.c.l.b16 %v4104
        %v4201 = vunpack.c.l.b16 %v4105
        %v4202 = vunpack.c.l.b16 %v4106
        %v4203 = vunpack.c.l.b16 %v4107
        %v4204 = vunpack.c.l.b16 %v4108
        %v4205 = vunpack.c.l.b16 %v4109
        %v4206 = vunpack.c.l.b16 %v4110
        %v4207 = vunpack.c.l.b16 %v4111
        %v4208 = vunpack.c.l.b16 %v4112
        %v4209 = vunpack.c.l.b16 %v4113
        %v4210 = vpack.c.b16 %v4195, %v4194
        %v4211 = vpack.c.b16 %v4197, %v4196
        %v4212 = vpack.c.b16 %v4199, %v4198
        %v4213 = vpack.c.b16 %v4201, %v4200
        %v4214 = vpack.c.b16 %v4203, %v4202
        %v4215 = vpack.c.b16 %v4205, %v4204
        %v4216 = vpack.c.b16 %v4207, %v4206
        %v4217 = vpack.c.b16 %v4209, %v4208
        %4226 = vmatpush.bf16.msra.mxu0 %v4217
        %4227 = vmatpush.bf16.msra.mxu0 %v4216
        %4228 = vmatpush.bf16.msra.mxu0 %v4215
        %4229 = vmatpush.bf16.msra.mxu0 %v4214
        %4230 = vmatpush.bf16.msra.mxu0 %v4213
        %4231 = vmatpush.bf16.msra.mxu0 %v4212
        %4232 = vmatpush.bf16.msra.mxu0 %v4211
        %4233 = vmatpush.bf16.msra.mxu0 %v4210
        %4234 = vmatmul.bf16.gmra.mxu0 %v4146
        %v4235 = vpop.f32.mrf.mxu0
        %v4236 = vadd.f32 0.0, %v4235
        %v4237 = vpop.f32.mrf.mxu0
        %v4238 = vadd.f32 0.0, %v4237
        %4239 = vmatmul.bf16.gmra.mxu0 %v4147
        %v4240 = vpop.f32.mrf.mxu0
        %v4241 = vadd.f32 0.0, %v4240
        %v4242 = vpop.f32.mrf.mxu0
        %v4243 = vadd.f32 0.0, %v4242
        %4244 = vmatmul.bf16.gmra.mxu0 %v4148
        %v4245 = vpop.f32.mrf.mxu0
        %v4246 = vadd.f32 0.0, %v4245
        %v4247 = vpop.f32.mrf.mxu0
        %v4248 = vadd.f32 0.0, %v4247
        %4249 = vmatmul.bf16.gmra.mxu0 %v4149
        %v4250 = vpop.f32.mrf.mxu0
        %v4251 = vadd.f32 0.0, %v4250
        %v4252 = vpop.f32.mrf.mxu0
        %v4253 = vadd.f32 0.0, %v4252
        %4254 = vmatmul.bf16.gmra.mxu0 %v4150
        %v4255 = vpop.f32.mrf.mxu0
        %v4256 = vadd.f32 0.0, %v4255
        %v4257 = vpop.f32.mrf.mxu0
        %v4258 = vadd.f32 0.0, %v4257
        %4259 = vmatmul.bf16.gmra.mxu0 %v4151
        %v4260 = vpop.f32.mrf.mxu0
        %v4261 = vadd.f32 0.0, %v4260
        %v4262 = vpop.f32.mrf.mxu0
        %v4263 = vadd.f32 0.0, %v4262
        %4264 = vmatmul.bf16.gmra.mxu0 %v4152
        %v4265 = vpop.f32.mrf.mxu0
        %v4266 = vadd.f32 0.0, %v4265
        %v4267 = vpop.f32.mrf.mxu0
        %v4268 = vadd.f32 0.0, %v4267
        %4269 = vmatmul.bf16.gmra.mxu0 %v4153
        %v4270 = vpop.f32.mrf.mxu0
        %v4271 = vadd.f32 0.0, %v4270
        %v4272 = vpop.f32.mrf.mxu0
        %v4273 = vadd.f32 0.0, %v4272
        %4274 = vmatmul.bf16.gmra.mxu0 %v4154
        %v4275 = vpop.f32.mrf.mxu0
        %v4276 = vadd.f32 0.0, %v4275
        %v4277 = vpop.f32.mrf.mxu0
        %v4278 = vadd.f32 0.0, %v4277
        %4279 = vmatmul.bf16.gmra.mxu0 %v4155
        %v4280 = vpop.f32.mrf.mxu0
        %v4281 = vadd.f32 0.0, %v4280
        %v4282 = vpop.f32.mrf.mxu0
        %v4283 = vadd.f32 0.0, %v4282
        %4284 = vmatmul.bf16.gmra.mxu0 %v4156
        %v4285 = vpop.f32.mrf.mxu0
        %v4286 = vadd.f32 0.0, %v4285
        %v4287 = vpop.f32.mrf.mxu0
        %v4288 = vadd.f32 0.0, %v4287
        %4289 = vmatmul.bf16.gmra.mxu0 %v4157
        %v4290 = vpop.f32.mrf.mxu0
        %v4291 = vadd.f32 0.0, %v4290
        %v4292 = vpop.f32.mrf.mxu0
        %v4293 = vadd.f32 0.0, %v4292
        %4294 = vmatmul.bf16.gmra.mxu0 %v4158
        %v4295 = vpop.f32.mrf.mxu0
        %v4296 = vadd.f32 0.0, %v4295
        %v4297 = vpop.f32.mrf.mxu0
        %v4298 = vadd.f32 0.0, %v4297
        %4299 = vmatmul.bf16.gmra.mxu0 %v4159
        %v4300 = vpop.f32.mrf.mxu0
        %v4301 = vadd.f32 0.0, %v4300
        %v4302 = vpop.f32.mrf.mxu0
        %v4303 = vadd.f32 0.0, %v4302
        %4304 = vmatmul.bf16.gmra.mxu0 %v4160
        %v4305 = vpop.f32.mrf.mxu0
        %v4306 = vadd.f32 0.0, %v4305
        %v4307 = vpop.f32.mrf.mxu0
        %v4308 = vadd.f32 0.0, %v4307
        %4309 = vmatmul.bf16.gmra.mxu0 %v4161
        %v4310 = vpop.f32.mrf.mxu0
        %v4311 = vadd.f32 0.0, %v4310
        %v4312 = vpop.f32.mrf.mxu0
        %v4313 = vadd.f32 0.0, %v4312
        %4314 = vdwg.mxu0
        %v4315 = vadd.f32 %v3890, %v4236
        %v4316 = vadd.f32 %v3891, %v4238
        %v4317 = vadd.f32 %v3892, %v4241
        %v4318 = vadd.f32 %v3893, %v4243
        %v4319 = vadd.f32 %v3894, %v4246
        %v4320 = vadd.f32 %v3895, %v4248
        %v4321 = vadd.f32 %v3896, %v4251
        %v4322 = vadd.f32 %v3897, %v4253
        %v4323 = vadd.f32 %v3898, %v4256
        %v4324 = vadd.f32 %v3899, %v4258
        %v4325 = vadd.f32 %v3900, %v4261
        %v4326 = vadd.f32 %v3901, %v4263
        %v4327 = vadd.f32 %v3902, %v4266
        %v4328 = vadd.f32 %v3903, %v4268
        %v4329 = vadd.f32 %v3904, %v4271
        %v4330 = vadd.f32 %v3905, %v4273
        %v4331 = vadd.f32 %v3906, %v4276
        %v4332 = vadd.f32 %v3907, %v4278
        %v4333 = vadd.f32 %v3908, %v4281
        %v4334 = vadd.f32 %v3909, %v4283
        %v4335 = vadd.f32 %v3910, %v4286
        %v4336 = vadd.f32 %v3911, %v4288
        %v4337 = vadd.f32 %v3912, %v4291
        %v4338 = vadd.f32 %v3913, %v4293
        %v4339 = vadd.f32 %v3914, %v4296
        %v4340 = vadd.f32 %v3915, %v4298
        %v4341 = vadd.f32 %v3916, %v4301
        %v4342 = vadd.f32 %v3917, %v4303
        %v4343 = vadd.f32 %v3918, %v4306
        %v4344 = vadd.f32 %v3919, %v4308
        %v4345 = vadd.f32 %v3920, %v4311
        %v4346 = vadd.f32 %v3921, %v4313
        %v4347 = vld [vmem:[%s2] sm:$0x1]
        %v4349 = vperm.slane %v4347, 0
        %v4351 = vadd.f32 %v4315, %v4349
        %v4352 = vadd.f32 %v4316, %v4349
        %v4353 = vadd.f32 %v4317, %v4349
        %v4354 = vadd.f32 %v4318, %v4349
        %v4355 = vadd.f32 %v4319, %v4349
        %v4356 = vadd.f32 %v4320, %v4349
        %v4357 = vadd.f32 %v4321, %v4349
        %v4358 = vadd.f32 %v4322, %v4349
        %v4359 = vadd.f32 %v4323, %v4349
        %v4360 = vadd.f32 %v4324, %v4349
        %v4361 = vadd.f32 %v4325, %v4349
        %v4362 = vadd.f32 %v4326, %v4349
        %v4363 = vadd.f32 %v4327, %v4349
        %v4364 = vadd.f32 %v4328, %v4349
        %v4365 = vadd.f32 %v4329, %v4349
        %v4366 = vadd.f32 %v4330, %v4349
        %v4367 = vadd.f32 %v4331, %v4349
        %v4368 = vadd.f32 %v4332, %v4349
        %v4369 = vadd.f32 %v4333, %v4349
        %v4370 = vadd.f32 %v4334, %v4349
        %v4371 = vadd.f32 %v4335, %v4349
        %v4372 = vadd.f32 %v4336, %v4349
        %v4373 = vadd.f32 %v4337, %v4349
        %v4374 = vadd.f32 %v4338, %v4349
        %v4375 = vadd.f32 %v4339, %v4349
        %v4376 = vadd.f32 %v4340, %v4349
        %v4377 = vadd.f32 %v4341, %v4349
        %v4378 = vadd.f32 %v4342, %v4349
        %v4379 = vadd.f32 %v4343, %v4349
        %v4380 = vadd.f32 %v4344, %v4349
        %v4381 = vadd.f32 %v4345, %v4349
        %v4382 = vadd.f32 %v4346, %v4349
        %v4383 = vmax.f32 %v4351, 0.0
        %v4384 = vmax.f32 %v4352, 0.0
        %v4385 = vmax.f32 %v4353, 0.0
        %v4386 = vmax.f32 %v4354, 0.0
        %v4387 = vmax.f32 %v4355, 0.0
        %v4388 = vmax.f32 %v4356, 0.0
        %v4389 = vmax.f32 %v4357, 0.0
        %v4390 = vmax.f32 %v4358, 0.0
        %v4391 = vmax.f32 %v4359, 0.0
        %v4392 = vmax.f32 %v4360, 0.0
        %v4393 = vmax.f32 %v4361, 0.0
        %v4394 = vmax.f32 %v4362, 0.0
        %v4395 = vmax.f32 %v4363, 0.0
        %v4396 = vmax.f32 %v4364, 0.0
        %v4397 = vmax.f32 %v4365, 0.0
        %v4398 = vmax.f32 %v4366, 0.0
        %v4399 = vmax.f32 %v4367, 0.0
        %v4400 = vmax.f32 %v4368, 0.0
        %v4401 = vmax.f32 %v4369, 0.0
        %v4402 = vmax.f32 %v4370, 0.0
        %v4403 = vmax.f32 %v4371, 0.0
        %v4404 = vmax.f32 %v4372, 0.0
        %v4405 = vmax.f32 %v4373, 0.0
        %v4406 = vmax.f32 %v4374, 0.0
        %v4407 = vmax.f32 %v4375, 0.0
        %v4408 = vmax.f32 %v4376, 0.0
        %v4409 = vmax.f32 %v4377, 0.0
        %v4410 = vmax.f32 %v4378, 0.0
        %v4411 = vmax.f32 %v4379, 0.0
        %v4412 = vmax.f32 %v4380, 0.0
        %v4413 = vmax.f32 %v4381, 0.0
        %v4414 = vmax.f32 %v4382, 0.0
        %4415 = vst [vmem:[%s177] sm:$0xff] %v4383
        %4416 = vst [vmem:[%s177 + $0x8] sm:$0xff] %v4384
        %4417 = vst [vmem:[%s177 + $0x10] sm:$0xff] %v4385
        %4418 = vst [vmem:[%s177 + $0x18] sm:$0xff] %v4386
        %4419 = vst [vmem:[%s177 + $0x20] sm:$0xff] %v4387
        %4420 = vst [vmem:[%s177 + $0x28] sm:$0xff] %v4388
        %4421 = vst [vmem:[%s177 + $0x30] sm:$0xff] %v4389
        %4422 = vst [vmem:[%s177 + $0x38] sm:$0xff] %v4390
        %4423 = vst [vmem:[%s177 + $0x40] sm:$0xff] %v4391
        %4424 = vst [vmem:[%s177 + $0x48] sm:$0xff] %v4392
        %4425 = vst [vmem:[%s177 + $0x50] sm:$0xff] %v4393
        %4426 = vst [vmem:[%s177 + $0x58] sm:$0xff] %v4394
        %4427 = vst [vmem:[%s177 + $0x60] sm:$0xff] %v4395
        %4428 = vst [vmem:[%s177 + $0x68] sm:$0xff] %v4396
        %4429 = vst [vmem:[%s177 + $0x70] sm:$0xff] %v4397
        %4430 = vst [vmem:[%s177 + $0x78] sm:$0xff] %v4398
        %4431 = vst [vmem:[%s177 + $0x80] sm:$0xff] %v4399
        %4432 = vst [vmem:[%s177 + $0x88] sm:$0xff] %v4400
        %4433 = vst [vmem:[%s177 + $0x90] sm:$0xff] %v4401
        %4434 = vst [vmem:[%s177 + $0x98] sm:$0xff] %v4402
        %4435 = vst [vmem:[%s177 + $0xa0] sm:$0xff] %v4403
        %4436 = vst [vmem:[%s177 + $0xa8] sm:$0xff] %v4404
        %4437 = vst [vmem:[%s177 + $0xb0] sm:$0xff] %v4405
        %4438 = vst [vmem:[%s177 + $0xb8] sm:$0xff] %v4406
        %4439 = vst [vmem:[%s177 + $0xc0] sm:$0xff] %v4407
        %4440 = vst [vmem:[%s177 + $0xc8] sm:$0xff] %v4408
        %4441 = vst [vmem:[%s177 + $0xd0] sm:$0xff] %v4409
        %4442 = vst [vmem:[%s177 + $0xd8] sm:$0xff] %v4410
        %4443 = vst [vmem:[%s177 + $0xe0] sm:$0xff] %v4411
        %4444 = vst [vmem:[%s177 + $0xe8] sm:$0xff] %v4412
        %4445 = vst [vmem:[%s177 + $0xf0] sm:$0xff] %v4413
        %4446 = vst [vmem:[%s177 + $0xf8] sm:$0xff] %v4414
        %s4447 = sand.u32 %s107, 1
        %s4448 = scalar_lea.sflag [#allocation3], %s4447
        %s4449 = sand.u32 %s107, 1
        %s4450 = smul.addr %s4449, 256
        %s4451 = scalar_lea.vmem [#allocation2], %s4450
        // Predicated region
        $region33: #{tpu_custom_call.1} parent=31 // pred_check
          %p4452 = pneg %p117
        $region34: #{tpu_custom_call.1} parent=31 // pred_check_branch
          %4454 = sbr.rel (%p4452) target = $region36
        $region35: #{tpu_custom_call.1} parent=31 // pred_region
          %s4455 = smul.u32 16, %s22
          %4457 = vsyncadd %s4448, 0
          %s4458 = smul.addr %s4455, 2
          %s4459 = smul.addr %s21, 32
          %s4460 = sadd.s32 %s4458, %s4459
          %s4461 = smul.addr %s4460, 8
          %s4462 = scalar_lea.hbm %s3, %s4461
          %s4463 = sshll.u32 %s4451, 4
          %s4464 = int_to_ptr.vmem [resolvable:$true] %s4463
          %s4465 = sshll.u32 %s4462, 4
          %s4466 = int_to_ptr.hbm [resolvable:$true] %s4465
          %4471 = dma.vmem_to_hbm [thread:$0]  %s4464, 4096, %s4466, %s4448, 128, 128, 8
        $region36: #{tpu_custom_call.1} parent=31 // pred_fallthru
          _
      $region32: #{tpu_custom_call.1} parent=5 // pred_fallthru
        _
      %p4472 = scmp.le.s32.totalorder 2, %s12
      // Predicated region
      $region37: #{tpu_custom_call.1} parent=5 // pred_check
        %p4473 = pneg %p4472
      $region38: #{tpu_custom_call.1} parent=5 // pred_check_branch
        %4475 = sbr.rel (%p4473) target = $region40
      $region39: #{tpu_custom_call.1} parent=5 // pred_region
        %s4476 = ssub.s32 %s12, 2
        // Predicated region
        $region41: #{tpu_custom_call.1} parent=39 // pred_check
          %p4477 = pneg %p123
        $region42: #{tpu_custom_call.1} parent=39 // pred_check_branch
          %4479 = sbr.rel (%p4477) target = $region44
        $region43: #{tpu_custom_call.1} parent=39 // pred_region
          %s4480 = sand.u32 %s108, 1
          %s4481 = scalar_lea.sflag [#allocation3], %s4480
          %s4482 = sand.u32 %s108, 1
          %s4483 = smul.addr %s4482, 256
          %s4484 = scalar_lea.vmem [#allocation2], %s4483
          %4486 = dma.done %s4481, 4096
        $region44: #{tpu_custom_call.1} parent=39 // pred_fallthru
          _
      $region40: #{tpu_custom_call.1} parent=5 // pred_fallthru
        _
    $region6: #{tpu_custom_call.1} parent=1 // loop_footer
      %s16 = sadd.s32 1, %s12
    $region7: #{tpu_custom_call.1} parent=1 // loop_footer_branch
      %11 = sbr.rel target = $region3
    $region8: #{tpu_custom_call.1} parent=1 // loop_exit
      _
    %4487 = vsyncpa [#allocation3], 1
    %s4488 = scalar_lea.sflag [#allocation3], 1
    %4489 = vsyncpa %s4488, 1

</llo_original>
